<compile_context>
chip_gen: v7x
topology: tpu7x:2x2x1
jax: 0.10.0
libtpu: 0.0.40
codegen_flags: <defaults>
</compile_context>

<pallas_src>
import numpy as np
import jax
import jax.numpy as jnp
from jax.experimental import pallas as pl
from jax.experimental.pallas import tpu as pltpu


# ----------------------------------------------------------------------------
# Host-side weight expansion into the lane-packed (lane = w*C + c) layout
# ----------------------------------------------------------------------------
def _chan_row(v, Wd):
    return np.tile(np.asarray(v, np.float32).reshape(-1), Wd)            # (W*C,)


def _chan_tile(v, H, Wd):
    return np.tile(_chan_row(v, Wd)[None, :], (H, 1))                    # (H, W*C)


def expand_pointwise_mat(Wmat, C, Wd):
    """1x1 conv weight (Cin, Cout) -> block-diagonal (W*C, W*C); out = x_pack @ P."""
    Wmat = np.asarray(Wmat, np.float32)
    P = np.zeros((Wd * C, Wd * C), np.float32)
    for w in range(Wd):
        P[w * C:(w + 1) * C, w * C:(w + 1) * C] = Wmat
    return P


def expand_dw_mat(Wdw, C, Wd):
    """Depthwise 3x3 (3,3,C) -> (3, W*C, W*C) per-ky banded matrices.
    Horizontal taps + w-edge zero padding are folded in; h handled by row masks."""
    Wdw = np.asarray(Wdw, np.float32)
    M = np.zeros((3, Wd * C, Wd * C), np.float32)
    idx = np.arange(C)
    for ky in range(3):
        for kx in range(3):
            dx = kx - 1
            for w in range(Wd):
                wi = w + dx
                if 0 <= wi < Wd:
                    M[ky, wi * C + idx, w * C + idx] += Wdw[ky, kx, :]
    return M


def expand_conv3_mat(Wc, dil, C, Wd):
    """Full 3x3 conv (3,3,Cin,Cout), dilation dil -> (3, W*C, W*C) per-ky matrices."""
    Wc = np.asarray(Wc, np.float32)
    M = np.zeros((3, Wd * C, Wd * C), np.float32)
    for ky in range(3):
        for kx in range(3):
            dx = (kx - 1) * dil
            for w in range(Wd):
                wi = w + dx
                if 0 <= wi < Wd:
                    M[ky, wi * C:(wi + 1) * C, w * C:(w + 1) * C] += Wc[ky, kx]
    return M


def pack_fcadw_rows(a, C, Wd):
    """fcadw weights -> (4R, W*C) rows: [fc1_w1 cols | fc1_w2 rows | fc2_w1 cols | fc2_w2 rows]."""
    R = max(C // 8, 1)
    w11 = np.asarray(a['fc1_w1'], np.float32)
    w12 = np.asarray(a['fc1_w2'], np.float32)
    w21 = np.asarray(a['fc2_w1'], np.float32)
    w22 = np.asarray(a['fc2_w2'], np.float32)
    rows = ([_chan_row(w11[:, r], Wd) for r in range(R)]
            + [_chan_row(w12[r, :], Wd) for r in range(R)]
            + [_chan_row(w21[:, r], Wd) for r in range(R)]
            + [_chan_row(w22[r, :], Wd) for r in range(R)])
    return np.stack(rows).astype(np.float32)


def pack_module(m, C, H, Wd):
    l1, l2 = m['layer1'], m['layer2']
    pwP = np.stack([expand_pointwise_mat(w, C, Wd) for w in (
        l1['conv_w'], l1['conv1_w'], l2['conv_w'], l2['conv1_w'],
        np.asarray(m['alise_w'])[:C, :], np.asarray(m['alise_w'])[C:, :])])      # (6, WC, WC)
    pwB = np.stack([_chan_tile(v, H, Wd) for v in
                    (l1['conv_b'], l1['conv1_b'], l2['conv_b'], l2['conv1_b'])])  # (4, H, WC)
    dwD = np.concatenate([expand_dw_mat(w, C, Wd) for w in
                          (l1['dconv_w'], l1['dconv1_w'],
                           l2['dconv_w'], l2['dconv1_w'])], 0)                    # (12, WC, WC)
    dwB = np.stack([_chan_tile(v, H, Wd) for v in
                    (l1['dconv_b'], l1['dconv1_b'], l2['dconv_b'], l2['dconv1_b'])])
    prelu = np.stack([_chan_tile(l1['prelu_w'], H, Wd),
                      _chan_tile(l2['prelu_w'], H, Wd)])                          # (2, H, WC)
    c3 = np.concatenate([expand_conv3_mat(m['layer5_w'], 3, C, Wd),   # rows 0..2: dil 3
                         expand_conv3_mat(m['layer4_w'], 1, C, Wd)], 0)  # rows 3..5: dil 1
    att = pack_fcadw_rows(m['atten'], C, Wd)                                      # (4R, WC)
    scal = np.array([float(l1['s1']), float(l1['s2']), float(l2['s1']), float(l2['s2']),
                     float(m['w2']), float(m['w3']), float(m['w4']), float(m['w5'])],
                    np.float32)
    return pwP, pwB, dwD, dwB, prelu, c3, att, scal


def pack_params(raw, C, H, Wd):
    mods = [pack_module(raw[n], C, H, Wd)
            for n in ('encoder', 'decoder_low', 'decoder_high', 'alise')]
    a2 = np.asarray(raw['alise2_w'], np.float32)
    p = dict(
        pwP=np.stack([m[0] for m in mods]),
        pwB=np.stack([m[1] for m in mods]),
        dwD=np.stack([m[2] for m in mods]),
        dwB=np.stack([m[3] for m in mods]),
        prelu=np.stack([m[4] for m in mods]),
        c3=np.stack([m[5] for m in mods]),
        attM=np.stack([m[6] for m in mods]),
        scal=np.stack([m[7] for m in mods]),
        a2P=np.stack([expand_pointwise_mat(a2[:C, :], C, Wd),
                      expand_pointwise_mat(a2[C:, :], C, Wd)]),
        attT=pack_fcadw_rows(raw['att'], C, Wd),
    )
    return {k: jnp.asarray(v) for k, v in p.items()}


def build_mask(H, Wd, C, w_h=6, w_w=6):
    """fft() of the reference on even H/W == multiply by this static 0/1 mask."""
    # TODO(synk): fft()'s odd-H/W branch pads the tensor (shape change); only even H/W here.
    m = np.ones((H, Wd), np.float32)
    hc, wc = H // 2, Wd // 2
    a, b = H // w_h, Wd // w_w
    m[hc - a:hc + a, wc - b:wc + b] = 0.0
    m = np.fft.ifftshift(m, axes=(0, 1))
    return np.repeat(m[:, :, None], C, axis=2).reshape(H, Wd * C).astype(np.float32)


def build_rowmask(H, WC):
    """Row-validity masks for vertical taps dy in (-1, +1, -3, +3) (zero padding in h)."""
    rm = np.zeros((4, H, WC), np.float32)
    for i, dy in enumerate((-1, 1, -3, 3)):
        for h in range(H):
            if 0 <= h + dy < H:
                rm[i, h, :] = 1.0
    return rm


# ----------------------------------------------------------------------------
# The fused Pallas kernel
# ----------------------------------------------------------------------------
def make_updown_forward(B, H, Wd, C):
    WC = Wd * C
    assert H % 2 == 0 and Wd % 2 == 0, "fft-as-static-mask needs even H and W"
    assert WC % 128 == 0 and H % 8 == 0, "packed blocks must be (8,128)-tileable"
    R = max(C // 8, 1)
    inv_hw = 1.0 / float(H * Wd)

    # Stage schedule (grid = (B, N_STAGES), batch parallel / stages arbitrary):
    #   0: x1 = encoder(x); high = fft(x1)
    #   1..5: x1 = decoder_low(x1)   (shared weights)
    #   6: high = decoder_high(high)
    #   7: x1 = att(alise2(cat([x1, high])))   (tail)
    #   8: out = alise(x1) + x
    N_STAGES, S_HIGH, S_TAIL, S_LAST = 9, 6, 7, 8
    mod_tbl = jnp.asarray(np.array([0, 1, 1, 1, 1, 1, 2, 3, 3], np.int32))
    mask_c = jnp.asarray(build_mask(H, Wd, C))          # (H, WC)
    rmask_c = jnp.asarray(build_rowmask(H, WC))         # (4, H, WC)

    def kernel(tbl_ref, x_ref, mask_ref, rmask_ref,
               pwP_ref, pwB_ref, dwD_ref, dwB_ref, prelu_ref, c3_ref, attM_ref,
               scal_ref, a2P_ref, attT_ref,
               out_ref, x1_sc, hi_sc):
        s = pl.program_id(1)
        mid = tbl_ref[s]                                 # module id for this stage (SMEM)
        x_in = x_ref[...]
        mask = mask_ref[...]
        rm = (rmask_ref[0], rmask_ref[1], rmask_ref[2], rmask_ref[3])

        def mm(a, w):
            return jnp.dot(a, w, preferred_element_type=jnp.float32)

        def spatial3(t, w_m, w_0, w_p, dil):
            # 3-tap vertical conv in MXU-matmul form; horizontal taps / channel mixing /
            # w-edge zeroing live in the (WC,WC) matrices, h-edge via row masks.
            im, ip = (0, 1) if dil == 1 else (2, 3)
            acc = mm(t, w_0)
            acc = acc + mm(jnp.roll(t, dil, axis=0) * rm[im], w_m)     # dy = -dil
            acc = acc + mm(jnp.roll(t, -dil, axis=0) * rm[ip], w_p)    # dy = +dil
            return acc

        def dwconv(t, k):                                # depthwise 3x3 + bias
            return spatial3(t, dwD_ref[0, 3 * k], dwD_ref[0, 3 * k + 1],
                            dwD_ref[0, 3 * k + 2], 1) + dwB_ref[0, k]

        def one_conv(t, k_pw0, k_pw1, k_dw0, k_dw1, k_pr, sc1, sc2):
            u = mm(t, pwP_ref[0, k_pw0]) + pwB_ref[0, k_pw0]           # 1x1 + bias
            u = dwconv(u, k_dw0)
            pr = prelu_ref[0, k_pr]
            u = jnp.where(u >= 0.0, u, u * pr)                          # PReLU
            u = mm(u, pwP_ref[0, k_pw1]) + pwB_ref[0, k_pw1]
            u = dwconv(u, k_dw1)
            return sc1 * t + sc2 * u

        def fcadw(t, row):
            # y = fft(t) = t*mask; scale = 0.5*(sig(fc1(avg t)) + sig(fc2(avg y))); t*scale
            px = jnp.sum(t, axis=0, keepdims=True)
            py = jnp.sum(t * mask, axis=0, keepdims=True)
            pre1 = jnp.zeros((1, WC), jnp.float32)
            pre2 = jnp.zeros((1, WC), jnp.float32)
            for r in range(R):
                a1 = jnp.maximum(jnp.sum(px * row(r), axis=1, keepdims=True) * inv_hw, 0.0)
                a2 = jnp.maximum(jnp.sum(py * row(2 * R + r), axis=1, keepdims=True) * inv_hw, 0.0)
                pre1 = pre1 + a1 * row(R + r)
                pre2 = pre2 + a2 * row(3 * R + r)
            sg1 = pl.reciprocal(1.0 + jnp.exp(-pre1), approx=True)
            sg2 = pl.reciprocal(1.0 + jnp.exp(-pre2), approx=True)
            return t * (0.5 * (sg1 + sg2))

        @pl.when(s == 0)
        def _():                                          # make carried state well defined
            x1_sc[...] = x_in
            hi_sc[...] = x_in

        @pl.when(s != S_TAIL)
        def _():                                          # one one_module application
            src = jnp.where(s == S_HIGH, hi_sc[...], x1_sc[...])
            sc1_1 = scal_ref[mid, 0]
            sc2_1 = scal_ref[mid, 1]
            sc1_2 = scal_ref[mid, 2]
            sc2_2 = scal_ref[mid, 3]
            w2 = scal_ref[mid, 4]
            w3 = scal_ref[mid, 5]
            w4 = scal_ref[mid, 6]
            w5 = scal_ref[mid, 7]

            x1 = one_conv(src, 0, 1, 0, 1, 0, sc1_1, sc2_1)            # layer1
            x2 = one_conv(x1, 2, 3, 2, 3, 1, sc1_2, sc2_2)             # layer2
            # alise(cat([w2*x2, w3*x1])): 1x1 2C->C, bias=False, ReLU
            t = jnp.maximum(mm(w2 * x2, pwP_ref[0, 4]) + mm(w3 * x1, pwP_ref[0, 5]), 0.0)
            t = fcadw(t, lambda i: attM_ref[0, i:i + 1, :])            # atten
            t = jnp.maximum(spatial3(t, c3_ref[0, 0], c3_ref[0, 1], c3_ref[0, 2], 3), 0.0)  # layer5
            t = jnp.maximum(spatial3(t, c3_ref[0, 3], c3_ref[0, 4], c3_ref[0, 5], 1), 0.0)  # layer4
            y = w4 * src + w5 * t

            @pl.when((s <= 5) | (s == S_LAST))
            def _():
                x1_sc[...] = y

            @pl.when(s == 0)
            def _():
                hi_sc[...] = y * mask                     # high = fft(encoder(x))

            @pl.when(s == S_HIGH)
            def _():
                hi_sc[...] = y

        @pl.when(s == S_TAIL)
        def _():                                          # att(alise2(cat([x3, high])))
            t = jnp.maximum(mm(x1_sc[...], a2P_ref[0]) + mm(hi_sc[...], a2P_ref[1]), 0.0)
            x1_sc[...] = fcadw(t, lambda i: attT_ref[i:i + 1, :])

        @pl.when(s == S_LAST)
        def _():
            out_ref[...] = x1_sc[...] + x_in              # final residual

    widx = lambda b, s, tbl: (tbl[s], 0, 0, 0)
    fused = pl.pallas_call(
        kernel,
        out_shape=jax.ShapeDtypeStruct((B * H, WC), jnp.float32),
        grid_spec=pltpu.PrefetchScalarGridSpec(
            num_scalar_prefetch=1,
            grid=(B, N_STAGES),
            in_specs=[
                pl.BlockSpec((H, WC), lambda b, s, tbl: (b, 0)),              # x
                pl.BlockSpec((H, WC), lambda b, s, tbl: (0, 0)),              # fft mask
                pl.BlockSpec((4, H, WC), lambda b, s, tbl: (0, 0, 0)),        # row masks
                pl.BlockSpec((1, 6, WC, WC), widx),                           # 1x1 conv matrices
                pl.BlockSpec((1, 4, H, WC), widx),                            # 1x1 biases
                pl.BlockSpec((1, 12, WC, WC), widx),                          # dw conv matrices
                pl.BlockSpec((1, 4, H, WC), widx),                            # dw biases
                pl.BlockSpec((1, 2, H, WC), widx),                            # PReLU slopes
                pl.BlockSpec((1, 6, WC, WC), widx),                           # layer5/layer4 matrices
                pl.BlockSpec((1, 4 * R, WC), lambda b, s, tbl: (tbl[s], 0, 0)),  # fcadw rows
                pl.BlockSpec(memory_space=pltpu.MemorySpace.SMEM),            # Scale scalars
                pl.BlockSpec((2, WC, WC), lambda b, s, tbl: (0, 0, 0)),       # alise2 matrices
                pl.BlockSpec((4 * R, WC), lambda b, s, tbl: (0, 0)),          # top-level att rows
            ],
            out_specs=pl.BlockSpec((H, WC), lambda b, s, tbl: (b, 0)),
            scratch_shapes=[pltpu.VMEM((H, WC), jnp.float32),                 # x1 carry
                            pltpu.VMEM((H, WC), jnp.float32)],                # high carry
        ),
        compiler_params=pltpu.CompilerParams(
            dimension_semantics=("parallel", "arbitrary")),
    )

    def forward(p, x):
        return fused(mod_tbl, x, mask_c, rmask_c,
                     p['pwP'], p['pwB'], p['dwD'], p['dwB'], p['prelu'],
                     p['c3'], p['attM'], p['scal'], p['a2P'], p['attT'])

    return forward


# ----------------------------------------------------------------------------
# Deterministic synthetic parameters (shapes match the PyTorch __init__)
# ----------------------------------------------------------------------------
def _n(k, shape, scale):
    return jax.random.normal(k, shape, jnp.float32) * scale


def init_one_conv(key, C):
    ks = jax.random.split(key, 8)
    return dict(
        conv_w=_n(ks[0], (C, C), 0.1), conv_b=_n(ks[1], (C,), 0.01),
        dconv_w=_n(ks[2], (3, 3, C), 0.1), dconv_b=_n(ks[3], (C,), 0.01),
        conv1_w=_n(ks[4], (C, C), 0.1), conv1_b=_n(ks[5], (C,), 0.01),
        dconv1_w=_n(ks[6], (3, 3, C), 0.1), dconv1_b=_n(ks[7], (C,), 0.01),
        prelu_w=jnp.full((C,), 0.25, jnp.float32),   # PyTorch PReLU default
        s1=jnp.float32(1.0), s2=jnp.float32(1.0),    # Scale(1)
    )


def init_fcadw(key, C, r=8):
    Cr = max(C // r, 1)
    ks = jax.random.split(key, 4)
    return dict(
        fc1_w1=_n(ks[0], (C, Cr), 0.1), fc1_w2=_n(ks[1], (Cr, C), 0.1),
        fc2_w1=_n(ks[2], (C, Cr), 0.1), fc2_w2=_n(ks[3], (Cr, C), 0.1),
    )


def init_one_module(key, C):
    ks = jax.random.split(key, 6)
    return dict(
        layer1=init_one_conv(ks[0], C),
        layer2=init_one_conv(ks[1], C),
        layer4_w=_n(ks[2], (3, 3, C, C), 0.05),
        layer5_w=_n(ks[3], (3, 3, C, C), 0.05),
        alise_w=_n(ks[4], (2 * C, C), 0.1),
        atten=init_fcadw(ks[5], C),
        w2=jnp.float32(1.0), w3=jnp.float32(1.0),
        w4=jnp.float32(1.0), w5=jnp.float32(1.0),
    )


def init_updownblock(key, C):
    ks = jax.random.split(key, 6)
    return dict(
        encoder=init_one_module(ks[0], C),
        decoder_low=init_one_module(ks[1], C),
        decoder_high=init_one_module(ks[2], C),
        alise=init_one_module(ks[3], C),
        alise2_w=_n(ks[4], (2 * C, C), 0.1),
        att=init_fcadw(ks[5], C),
    )


if __name__ == "__main__":
    key = jax.random.PRNGKey(0)
    k_param, k_x = jax.random.split(key)

    n_feats, B, H, W = 8, 2, 16, 16          # W * n_feats = 128 -> lane-dense packing
    raw = init_updownblock(k_param, n_feats)
    params = pack_params(raw, n_feats, H, W)

    x_nchw = jax.random.normal(k_x, (B, n_feats, H, W), jnp.float32)   # PyTorch layout
    x_packed = jnp.transpose(x_nchw, (0, 2, 3, 1)).reshape(B * H, W * n_feats)

    fwd = jax.jit(make_updown_forward(B, H, W, n_feats))
    out_packed = jax.block_until_ready(fwd(params, x_packed))

    out = out_packed.reshape(B, H, W, n_feats)                         # NHWC
    assert out.shape == (B, H, W, n_feats)
    assert bool(jnp.all(jnp.isfinite(out)))
    print("KERNEL_OK")
</pallas_src>

<mosaic_0001>
module attributes {stable_mosaic.version = 11 : i64} {
  func.func @kernel(%arg0: i32, %arg1: i32, %arg2: memref<9xi32, #tpu.memory_space<smem>>, %arg3: memref<16x128xf32, #tpu.memory_space<vmem>>, %arg4: memref<16x128xf32, #tpu.memory_space<vmem>>, %arg5: memref<4x16x128xf32, #tpu.memory_space<vmem>>, %arg6: memref<1x6x128x128xf32, #tpu.memory_space<vmem>>, %arg7: memref<1x4x16x128xf32, #tpu.memory_space<vmem>>, %arg8: memref<1x12x128x128xf32, #tpu.memory_space<vmem>>, %arg9: memref<1x4x16x128xf32, #tpu.memory_space<vmem>>, %arg10: memref<1x2x16x128xf32, #tpu.memory_space<vmem>>, %arg11: memref<1x6x128x128xf32, #tpu.memory_space<vmem>>, %arg12: memref<1x4x128xf32, #tpu.memory_space<vmem>>, %arg13: memref<4x8xf32, #tpu.memory_space<smem>>, %arg14: memref<2x128x128xf32, #tpu.memory_space<vmem>>, %arg15: memref<4x128xf32, #tpu.memory_space<vmem>>, %arg16: memref<16x128xf32, #tpu.memory_space<vmem>>, %arg17: memref<16x128xf32, #tpu.memory_space<vmem>>, %arg18: memref<16x128xf32, #tpu.memory_space<vmem>>) attributes {dimension_semantics = [#tpu.dimension_semantics<parallel>, #tpu.dimension_semantics<arbitrary>], iteration_bounds = array<i64: 2, 9>, scalar_prefetch = 1 : i64, scratch_operands = 2 : i64, tpu.core_type = #tpu.core_type<tc>, window_params = [{transform_indices = @transform_0, window_bounds = array<i64: 16, 128>}, {pipeline_mode = #tpu.pipeline_mode<synchronous>, transform_indices = @transform_1, window_bounds = array<i64: 16, 128>}, {pipeline_mode = #tpu.pipeline_mode<synchronous>, transform_indices = @transform_2, window_bounds = array<i64: 4, 16, 128>}, {transform_indices = @transform_3, window_bounds = array<i64: 1, 6, 128, 128>}, {transform_indices = @transform_4, window_bounds = array<i64: 1, 4, 16, 128>}, {transform_indices = @transform_5, window_bounds = array<i64: 1, 12, 128, 128>}, {transform_indices = @transform_6, window_bounds = array<i64: 1, 4, 16, 128>}, {transform_indices = @transform_7, window_bounds = array<i64: 1, 2, 16, 128>}, {transform_indices = @transform_8, window_bounds = array<i64: 1, 6, 128, 128>}, {transform_indices = @transform_9, window_bounds = array<i64: 1, 4, 128>}, {transform_indices = @transform_10, window_bounds = array<i64: 4, 8>}, {pipeline_mode = #tpu.pipeline_mode<synchronous>, transform_indices = @transform_11, window_bounds = array<i64: 2, 128, 128>}, {pipeline_mode = #tpu.pipeline_mode<synchronous>, transform_indices = @transform_12, window_bounds = array<i64: 4, 128>}, {transform_indices = @transform_13, window_bounds = array<i64: 16, 128>}]} {
    %0 = arith.index_cast %arg1 : i32 to index
    %1 = memref.load %arg2[%0] : memref<9xi32, #tpu.memory_space<smem>>
    %c0 = arith.constant 0 : index
    %c0_0 = arith.constant 0 : index
    %2 = vector.load %arg3[%c0, %c0_0] : memref<16x128xf32, #tpu.memory_space<vmem>>, vector<16x128xf32>
    %c0_1 = arith.constant 0 : index
    %c0_2 = arith.constant 0 : index
    %3 = vector.load %arg4[%c0_1, %c0_2] : memref<16x128xf32, #tpu.memory_space<vmem>>, vector<16x128xf32>
    %c0_3 = arith.constant 0 : index
    %c0_4 = arith.constant 0 : index
    %c0_5 = arith.constant 0 : index
    %4 = vector.load %arg5[%c0_3, %c0_4, %c0_5] : memref<4x16x128xf32, #tpu.memory_space<vmem>>, vector<1x16x128xf32>
    %5 = vector.shape_cast %4 : vector<1x16x128xf32> to vector<16x128xf32>
    %c1 = arith.constant 1 : index
    %c0_6 = arith.constant 0 : index
    %c0_7 = arith.constant 0 : index
    %6 = vector.load %arg5[%c1, %c0_6, %c0_7] : memref<4x16x128xf32, #tpu.memory_space<vmem>>, vector<1x16x128xf32>
    %7 = vector.shape_cast %6 : vector<1x16x128xf32> to vector<16x128xf32>
    %c2 = arith.constant 2 : index
    %c0_8 = arith.constant 0 : index
    %c0_9 = arith.constant 0 : index
    %8 = vector.load %arg5[%c2, %c0_8, %c0_9] : memref<4x16x128xf32, #tpu.memory_space<vmem>>, vector<1x16x128xf32>
    %9 = vector.shape_cast %8 : vector<1x16x128xf32> to vector<16x128xf32>
    %c3 = arith.constant 3 : index
    %c0_10 = arith.constant 0 : index
    %c0_11 = arith.constant 0 : index
    %10 = vector.load %arg5[%c3, %c0_10, %c0_11] : memref<4x16x128xf32, #tpu.memory_space<vmem>>, vector<1x16x128xf32>
    %11 = vector.shape_cast %10 : vector<1x16x128xf32> to vector<16x128xf32>
    %c0_i32 = arith.constant 0 : i32
    %12 = arith.cmpi eq, %arg1, %c0_i32 : i32
    %13 = arith.extui %12 : i1 to i32
    %c0_i32_12 = arith.constant 0 : i32
    %14 = arith.cmpi ne, %13, %c0_i32_12 : i32
    scf.if %14 {
      %c0_17 = arith.constant 0 : index
      %c0_18 = arith.constant 0 : index
      %24 = vector.load %arg17[%c0_17, %c0_18] : memref<16x128xf32, #tpu.memory_space<vmem>>, vector<16x128xf32>
      tpu.vector_store %arg17[%c0_17, %c0_18], %2 {strides = array<i32>} : memref<16x128xf32, #tpu.memory_space<vmem>>, vector<16x128xf32>,
      %c0_19 = arith.constant 0 : index
      %c0_20 = arith.constant 0 : index
      %25 = vector.load %arg18[%c0_19, %c0_20] : memref<16x128xf32, #tpu.memory_space<vmem>>, vector<16x128xf32>
      tpu.vector_store %arg18[%c0_19, %c0_20], %2 {strides = array<i32>} : memref<16x128xf32, #tpu.memory_space<vmem>>, vector<16x128xf32>,
    } else {
    }
    %c7_i32 = arith.constant 7 : i32
    %15 = arith.cmpi ne, %arg1, %c7_i32 : i32
    %16 = arith.extui %15 : i1 to i32
    %c0_i32_13 = arith.constant 0 : i32
    %17 = arith.cmpi ne, %16, %c0_i32_13 : i32
    scf.if %17 {
      %c6_i32 = arith.constant 6 : i32
      %24 = arith.cmpi eq, %arg1, %c6_i32 : i32
      %c0_17 = arith.constant 0 : index
      %c0_18 = arith.constant 0 : index
      %25 = vector.load %arg18[%c0_17, %c0_18] : memref<16x128xf32, #tpu.memory_space<vmem>>, vector<16x128xf32>
      %c0_19 = arith.constant 0 : index
      %c0_20 = arith.constant 0 : index
      %26 = vector.load %arg17[%c0_19, %c0_20] : memref<16x128xf32, #tpu.memory_space<vmem>>, vector<16x128xf32>
      %27 = arith.select %24, %25, %26 : vector<16x128xf32>
      %28 = arith.index_cast %1 : i32 to index
      %c0_21 = arith.constant 0 : index
      %29 = memref.load %arg13[%28, %c0_21] : memref<4x8xf32, #tpu.memory_space<smem>>
      %30 = arith.index_cast %1 : i32 to index
      %c1_22 = arith.constant 1 : index
      %31 = memref.load %arg13[%30, %c1_22] : memref<4x8xf32, #tpu.memory_space<smem>>
      %32 = arith.index_cast %1 : i32 to index
      %c2_23 = arith.constant 2 : index
      %33 = memref.load %arg13[%32, %c2_23] : memref<4x8xf32, #tpu.memory_space<smem>>
      %34 = arith.index_cast %1 : i32 to index
      %c3_24 = arith.constant 3 : index
      %35 = memref.load %arg13[%34, %c3_24] : memref<4x8xf32, #tpu.memory_space<smem>>
      %36 = arith.index_cast %1 : i32 to index
      %c4 = arith.constant 4 : index
      %37 = memref.load %arg13[%36, %c4] : memref<4x8xf32, #tpu.memory_space<smem>>
      %38 = arith.index_cast %1 : i32 to index
      %c5 = arith.constant 5 : index
      %39 = memref.load %arg13[%38, %c5] : memref<4x8xf32, #tpu.memory_space<smem>>
      %40 = arith.index_cast %1 : i32 to index
      %c6 = arith.constant 6 : index
      %41 = memref.load %arg13[%40, %c6] : memref<4x8xf32, #tpu.memory_space<smem>>
      %42 = arith.index_cast %1 : i32 to index
      %c7 = arith.constant 7 : index
      %43 = memref.load %arg13[%42, %c7] : memref<4x8xf32, #tpu.memory_space<smem>>
      %c0_25 = arith.constant 0 : index
      %c0_26 = arith.constant 0 : index
      %c0_27 = arith.constant 0 : index
      %c0_28 = arith.constant 0 : index
      %44 = vector.load %arg6[%c0_25, %c0_26, %c0_27, %c0_28] : memref<1x6x128x128xf32, #tpu.memory_space<vmem>>, vector<1x1x128x128xf32>
      %45 = vector.shape_cast %44 : vector<1x1x128x128xf32> to vector<128x128xf32>
      %cst = arith.constant dense<0.000000e+00> : vector<16x128xf32>
      %46 = tpu.matmul %27, %45, %cst {dimension_numbers = #tpu.dot_dimension_numbers<[1], [0], [0], [1], [0, 0, 1, 1], [], []>} : vector<16x128xf32>, vector<128x128xf32>, vector<16x128xf32> -> vector<16x128xf32>
      %c0_29 = arith.constant 0 : index
      %c0_30 = arith.constant 0 : index
      %c0_31 = arith.constant 0 : index
      %c0_32 = arith.constant 0 : index
      %47 = vector.load %arg7[%c0_29, %c0_30, %c0_31, %c0_32] : memref<1x4x16x128xf32, #tpu.memory_space<vmem>>, vector<1x1x16x128xf32>
      %48 = vector.shape_cast %47 : vector<1x1x16x128xf32> to vector<16x128xf32>
      %49 = arith.addf %46, %48 : vector<16x128xf32>
      %c0_33 = arith.constant 0 : index
      %c0_34 = arith.constant 0 : index
      %c0_35 = arith.constant 0 : index
      %c0_36 = arith.constant 0 : index
      %50 = vector.load %arg8[%c0_33, %c0_34, %c0_35, %c0_36] : memref<1x12x128x128xf32, #tpu.memory_space<vmem>>, vector<1x1x128x128xf32>
      %51 = vector.shape_cast %50 : vector<1x1x128x128xf32> to vector<128x128xf32>
      %c0_37 = arith.constant 0 : index
      %c1_38 = arith.constant 1 : index
      %c0_39 = arith.constant 0 : index
      %c0_40 = arith.constant 0 : index
      %52 = vector.load %arg8[%c0_37, %c1_38, %c0_39, %c0_40] : memref<1x12x128x128xf32, #tpu.memory_space<vmem>>, vector<1x1x128x128xf32>
      %53 = vector.shape_cast %52 : vector<1x1x128x128xf32> to vector<128x128xf32>
      %c0_41 = arith.constant 0 : index
      %c2_42 = arith.constant 2 : index
      %c0_43 = arith.constant 0 : index
      %c0_44 = arith.constant 0 : index
      %54 = vector.load %arg8[%c0_41, %c2_42, %c0_43, %c0_44] : memref<1x12x128x128xf32, #tpu.memory_space<vmem>>, vector<1x1x128x128xf32>
      %55 = vector.shape_cast %54 : vector<1x1x128x128xf32> to vector<128x128xf32>
      %cst_45 = arith.constant dense<0.000000e+00> : vector<16x128xf32>
      %56 = tpu.matmul %49, %53, %cst_45 {dimension_numbers = #tpu.dot_dimension_numbers<[1], [0], [0], [1], [0, 0, 1, 1], [], []>} : vector<16x128xf32>, vector<128x128xf32>, vector<16x128xf32> -> vector<16x128xf32>
      %57 = vector.extract_strided_slice %49 {offsets = [15, 0], sizes = [1, 128], strides = [1, 1]} : vector<16x128xf32> to vector<1x128xf32>
      %58 = vector.extract_strided_slice %49 {offsets = [0, 0], sizes = [15, 128], strides = [1, 1]} : vector<16x128xf32> to vector<15x128xf32>
      %59 = tpu.concatenate %57, %58 in 0 : vector<1x128xf32>, vector<15x128xf32> -> vector<16x128xf32>
      %60 = arith.mulf %59, %5 : vector<16x128xf32>
      %cst_46 = arith.constant dense<0.000000e+00> : vector<16x128xf32>
      %61 = tpu.matmul %60, %51, %cst_46 {dimension_numbers = #tpu.dot_dimension_numbers<[1], [0], [0], [1], [0, 0, 1, 1], [], []>} : vector<16x128xf32>, vector<128x128xf32>, vector<16x128xf32> -> vector<16x128xf32>
      %62 = arith.addf %56, %61 : vector<16x128xf32>
      %63 = vector.extract_strided_slice %49 {offsets = [1, 0], sizes = [15, 128], strides = [1, 1]} : vector<16x128xf32> to vector<15x128xf32>
      %64 = vector.extract_strided_slice %49 {offsets = [0, 0], sizes = [1, 128], strides = [1, 1]} : vector<16x128xf32> to vector<1x128xf32>
      %65 = tpu.concatenate %63, %64 in 0 : vector<15x128xf32>, vector<1x128xf32> -> vector<16x128xf32>
      %66 = arith.mulf %65, %7 : vector<16x128xf32>
      %cst_47 = arith.constant dense<0.000000e+00> : vector<16x128xf32>
      %67 = tpu.matmul %66, %55, %cst_47 {dimension_numbers = #tpu.dot_dimension_numbers<[1], [0], [0], [1], [0, 0, 1, 1], [], []>} : vector<16x128xf32>, vector<128x128xf32>, vector<16x128xf32> -> vector<16x128xf32>
      %68 = arith.addf %62, %67 : vector<16x128xf32>
      %c0_48 = arith.constant 0 : index
      %c0_49 = arith.constant 0 : index
      %c0_50 = arith.constant 0 : index
      %c0_51 = arith.constant 0 : index
      %69 = vector.load %arg9[%c0_48, %c0_49, %c0_50, %c0_51] : memref<1x4x16x128xf32, #tpu.memory_space<vmem>>, vector<1x1x16x128xf32>
      %70 = vector.shape_cast %69 : vector<1x1x16x128xf32> to vector<16x128xf32>
      %71 = arith.addf %68, %70 : vector<16x128xf32>
      %c0_52 = arith.constant 0 : index
      %c0_53 = arith.constant 0 : index
      %c0_54 = arith.constant 0 : index
      %c0_55 = arith.constant 0 : index
      %72 = vector.load %arg10[%c0_52, %c0_53, %c0_54, %c0_55] : memref<1x2x16x128xf32, #tpu.memory_space<vmem>>, vector<1x1x16x128xf32>
      %73 = vector.shape_cast %72 : vector<1x1x16x128xf32> to vector<16x128xf32>
      %cst_56 = arith.constant 0.000000e+00 : f32
      %74 = vector.broadcast %cst_56 : f32 to vector<16x128xf32>
      %75 = arith.cmpf oge, %71, %74 : vector<16x128xf32>
      %76 = arith.mulf %71, %73 : vector<16x128xf32>
      %77 = arith.select %75, %71, %76 : vector<16x128xi1>, vector<16x128xf32>
      %c0_57 = arith.constant 0 : index
      %c1_58 = arith.constant 1 : index
      %c0_59 = arith.constant 0 : index
      %c0_60 = arith.constant 0 : index
      %78 = vector.load %arg6[%c0_57, %c1_58, %c0_59, %c0_60] : memref<1x6x128x128xf32, #tpu.memory_space<vmem>>, vector<1x1x128x128xf32>
      %79 = vector.shape_cast %78 : vector<1x1x128x128xf32> to vector<128x128xf32>
      %cst_61 = arith.constant dense<0.000000e+00> : vector<16x128xf32>
      %80 = tpu.matmul %77, %79, %cst_61 {dimension_numbers = #tpu.dot_dimension_numbers<[1], [0], [0], [1], [0, 0, 1, 1], [], []>} : vector<16x128xf32>, vector<128x128xf32>, vector<16x128xf32> -> vector<16x128xf32>
      %c0_62 = arith.constant 0 : index
      %c1_63 = arith.constant 1 : index
      %c0_64 = arith.constant 0 : index
      %c0_65 = arith.constant 0 : index
      %81 = vector.load %arg7[%c0_62, %c1_63, %c0_64, %c0_65] : memref<1x4x16x128xf32, #tpu.memory_space<vmem>>, vector<1x1x16x128xf32>
      %82 = vector.shape_cast %81 : vector<1x1x16x128xf32> to vector<16x128xf32>
      %83 = arith.addf %80, %82 : vector<16x128xf32>
      %c0_66 = arith.constant 0 : index
      %c3_67 = arith.constant 3 : index
      %c0_68 = arith.constant 0 : index
      %c0_69 = arith.constant 0 : index
      %84 = vector.load %arg8[%c0_66, %c3_67, %c0_68, %c0_69] : memref<1x12x128x128xf32, #tpu.memory_space<vmem>>, vector<1x1x128x128xf32>
      %85 = vector.shape_cast %84 : vector<1x1x128x128xf32> to vector<128x128xf32>
      %c0_70 = arith.constant 0 : index
      %c4_71 = arith.constant 4 : index
      %c0_72 = arith.constant 0 : index
      %c0_73 = arith.constant 0 : index
      %86 = vector.load %arg8[%c0_70, %c4_71, %c0_72, %c0_73] : memref<1x12x128x128xf32, #tpu.memory_space<vmem>>, vector<1x1x128x128xf32>
      %87 = vector.shape_cast %86 : vector<1x1x128x128xf32> to vector<128x128xf32>
      %c0_74 = arith.constant 0 : index
      %c5_75 = arith.constant 5 : index
      %c0_76 = arith.constant 0 : index
      %c0_77 = arith.constant 0 : index
      %88 = vector.load %arg8[%c0_74, %c5_75, %c0_76, %c0_77] : memref<1x12x128x128xf32, #tpu.memory_space<vmem>>, vector<1x1x128x128xf32>
      %89 = vector.shape_cast %88 : vector<1x1x128x128xf32> to vector<128x128xf32>
      %cst_78 = arith.constant dense<0.000000e+00> : vector<16x128xf32>
      %90 = tpu.matmul %83, %87, %cst_78 {dimension_numbers = #tpu.dot_dimension_numbers<[1], [0], [0], [1], [0, 0, 1, 1], [], []>} : vector<16x128xf32>, vector<128x128xf32>, vector<16x128xf32> -> vector<16x128xf32>
      %91 = vector.extract_strided_slice %83 {offsets = [15, 0], sizes = [1, 128], strides = [1, 1]} : vector<16x128xf32> to vector<1x128xf32>
      %92 = vector.extract_strided_slice %83 {offsets = [0, 0], sizes = [15, 128], strides = [1, 1]} : vector<16x128xf32> to vector<15x128xf32>
      %93 = tpu.concatenate %91, %92 in 0 : vector<1x128xf32>, vector<15x128xf32> -> vector<16x128xf32>
      %94 = arith.mulf %93, %5 : vector<16x128xf32>
      %cst_79 = arith.constant dense<0.000000e+00> : vector<16x128xf32>
      %95 = tpu.matmul %94, %85, %cst_79 {dimension_numbers = #tpu.dot_dimension_numbers<[1], [0], [0], [1], [0, 0, 1, 1], [], []>} : vector<16x128xf32>, vector<128x128xf32>, vector<16x128xf32> -> vector<16x128xf32>
      %96 = arith.addf %90, %95 : vector<16x128xf32>
      %97 = vector.extract_strided_slice %83 {offsets = [1, 0], sizes = [15, 128], strides = [1, 1]} : vector<16x128xf32> to vector<15x128xf32>
      %98 = vector.extract_strided_slice %83 {offsets = [0, 0], sizes = [1, 128], strides = [1, 1]} : vector<16x128xf32> to vector<1x128xf32>
      %99 = tpu.concatenate %97, %98 in 0 : vector<15x128xf32>, vector<1x128xf32> -> vector<16x128xf32>
      %100 = arith.mulf %99, %7 : vector<16x128xf32>
      %cst_80 = arith.constant dense<0.000000e+00> : vector<16x128xf32>
      %101 = tpu.matmul %100, %89, %cst_80 {dimension_numbers = #tpu.dot_dimension_numbers<[1], [0], [0], [1], [0, 0, 1, 1], [], []>} : vector<16x128xf32>, vector<128x128xf32>, vector<16x128xf32> -> vector<16x128xf32>
      %102 = arith.addf %96, %101 : vector<16x128xf32>
      %c0_81 = arith.constant 0 : index
      %c1_82 = arith.constant 1 : index
      %c0_83 = arith.constant 0 : index
      %c0_84 = arith.constant 0 : index
      %103 = vector.load %arg9[%c0_81, %c1_82, %c0_83, %c0_84] : memref<1x4x16x128xf32, #tpu.memory_space<vmem>>, vector<1x1x16x128xf32>
      %104 = vector.shape_cast %103 : vector<1x1x16x128xf32> to vector<16x128xf32>
      %105 = arith.addf %102, %104 : vector<16x128xf32>
      %106 = vector.broadcast %29 : f32 to vector<16x128xf32>
      %107 = arith.mulf %106, %27 : vector<16x128xf32>
      %108 = vector.broadcast %31 : f32 to vector<16x128xf32>
      %109 = arith.mulf %108, %105 : vector<16x128xf32>
      %110 = arith.addf %107, %109 : vector<16x128xf32>
      %c0_85 = arith.constant 0 : index
      %c2_86 = arith.constant 2 : index
      %c0_87 = arith.constant 0 : index
      %c0_88 = arith.constant 0 : index
      %111 = vector.load %arg6[%c0_85, %c2_86, %c0_87, %c0_88] : memref<1x6x128x128xf32, #tpu.memory_space<vmem>>, vector<1x1x128x128xf32>
      %112 = vector.shape_cast %111 : vector<1x1x128x128xf32> to vector<128x128xf32>
      %cst_89 = arith.constant dense<0.000000e+00> : vector<16x128xf32>
      %113 = tpu.matmul %110, %112, %cst_89 {dimension_numbers = #tpu.dot_dimension_numbers<[1], [0], [0], [1], [0, 0, 1, 1], [], []>} : vector<16x128xf32>, vector<128x128xf32>, vector<16x128xf32> -> vector<16x128xf32>
      %c0_90 = arith.constant 0 : index
      %c2_91 = arith.constant 2 : index
      %c0_92 = arith.constant 0 : index
      %c0_93 = arith.constant 0 : index
      %114 = vector.load %arg7[%c0_90, %c2_91, %c0_92, %c0_93] : memref<1x4x16x128xf32, #tpu.memory_space<vmem>>, vector<1x1x16x128xf32>
      %115 = vector.shape_cast %114 : vector<1x1x16x128xf32> to vector<16x128xf32>
      %116 = arith.addf %113, %115 : vector<16x128xf32>
      %c0_94 = arith.constant 0 : index
      %c6_95 = arith.constant 6 : index
      %c0_96 = arith.constant 0 : index
      %c0_97 = arith.constant 0 : index
      %117 = vector.load %arg8[%c0_94, %c6_95, %c0_96, %c0_97] : memref<1x12x128x128xf32, #tpu.memory_space<vmem>>, vector<1x1x128x128xf32>
      %118 = vector.shape_cast %117 : vector<1x1x128x128xf32> to vector<128x128xf32>
      %c0_98 = arith.constant 0 : index
      %c7_99 = arith.constant 7 : index
      %c0_100 = arith.constant 0 : index
      %c0_101 = arith.constant 0 : index
      %119 = vector.load %arg8[%c0_98, %c7_99, %c0_100, %c0_101] : memref<1x12x128x128xf32, #tpu.memory_space<vmem>>, vector<1x1x128x128xf32>
      %120 = vector.shape_cast %119 : vector<1x1x128x128xf32> to vector<128x128xf32>
      %c0_102 = arith.constant 0 : index
      %c8 = arith.constant 8 : index
      %c0_103 = arith.constant 0 : index
      %c0_104 = arith.constant 0 : index
      %121 = vector.load %arg8[%c0_102, %c8, %c0_103, %c0_104] : memref<1x12x128x128xf32, #tpu.memory_space<vmem>>, vector<1x1x128x128xf32>
      %122 = vector.shape_cast %121 : vector<1x1x128x128xf32> to vector<128x128xf32>
      %cst_105 = arith.constant dense<0.000000e+00> : vector<16x128xf32>
      %123 = tpu.matmul %116, %120, %cst_105 {dimension_numbers = #tpu.dot_dimension_numbers<[1], [0], [0], [1], [0, 0, 1, 1], [], []>} : vector<16x128xf32>, vector<128x128xf32>, vector<16x128xf32> -> vector<16x128xf32>
      %124 = vector.extract_strided_slice %116 {offsets = [15, 0], sizes = [1, 128], strides = [1, 1]} : vector<16x128xf32> to vector<1x128xf32>
      %125 = vector.extract_strided_slice %116 {offsets = [0, 0], sizes = [15, 128], strides = [1, 1]} : vector<16x128xf32> to vector<15x128xf32>
      %126 = tpu.concatenate %124, %125 in 0 : vector<1x128xf32>, vector<15x128xf32> -> vector<16x128xf32>
      %127 = arith.mulf %126, %5 : vector<16x128xf32>
      %cst_106 = arith.constant dense<0.000000e+00> : vector<16x128xf32>
      %128 = tpu.matmul %127, %118, %cst_106 {dimension_numbers = #tpu.dot_dimension_numbers<[1], [0], [0], [1], [0, 0, 1, 1], [], []>} : vector<16x128xf32>, vector<128x128xf32>, vector<16x128xf32> -> vector<16x128xf32>
      %129 = arith.addf %123, %128 : vector<16x128xf32>
      %130 = vector.extract_strided_slice %116 {offsets = [1, 0], sizes = [15, 128], strides = [1, 1]} : vector<16x128xf32> to vector<15x128xf32>
      %131 = vector.extract_strided_slice %116 {offsets = [0, 0], sizes = [1, 128], strides = [1, 1]} : vector<16x128xf32> to vector<1x128xf32>
      %132 = tpu.concatenate %130, %131 in 0 : vector<15x128xf32>, vector<1x128xf32> -> vector<16x128xf32>
      %133 = arith.mulf %132, %7 : vector<16x128xf32>
      %cst_107 = arith.constant dense<0.000000e+00> : vector<16x128xf32>
      %134 = tpu.matmul %133, %122, %cst_107 {dimension_numbers = #tpu.dot_dimension_numbers<[1], [0], [0], [1], [0, 0, 1, 1], [], []>} : vector<16x128xf32>, vector<128x128xf32>, vector<16x128xf32> -> vector<16x128xf32>
      %135 = arith.addf %129, %134 : vector<16x128xf32>
      %c0_108 = arith.constant 0 : index
      %c2_109 = arith.constant 2 : index
      %c0_110 = arith.constant 0 : index
      %c0_111 = arith.constant 0 : index
      %136 = vector.load %arg9[%c0_108, %c2_109, %c0_110, %c0_111] : memref<1x4x16x128xf32, #tpu.memory_space<vmem>>, vector<1x1x16x128xf32>
      %137 = vector.shape_cast %136 : vector<1x1x16x128xf32> to vector<16x128xf32>
      %138 = arith.addf %135, %137 : vector<16x128xf32>
      %c0_112 = arith.constant 0 : index
      %c1_113 = arith.constant 1 : index
      %c0_114 = arith.constant 0 : index
      %c0_115 = arith.constant 0 : index
      %139 = vector.load %arg10[%c0_112, %c1_113, %c0_114, %c0_115] : memref<1x2x16x128xf32, #tpu.memory_space<vmem>>, vector<1x1x16x128xf32>
      %140 = vector.shape_cast %139 : vector<1x1x16x128xf32> to vector<16x128xf32>
      %cst_116 = arith.constant 0.000000e+00 : f32
      %141 = vector.broadcast %cst_116 : f32 to vector<16x128xf32>
      %142 = arith.cmpf oge, %138, %141 : vector<16x128xf32>
      %143 = arith.mulf %138, %140 : vector<16x128xf32>
      %144 = arith.select %142, %138, %143 : vector<16x128xi1>, vector<16x128xf32>
      %c0_117 = arith.constant 0 : index
      %c3_118 = arith.constant 3 : index
      %c0_119 = arith.constant 0 : index
      %c0_120 = arith.constant 0 : index
      %145 = vector.load %arg6[%c0_117, %c3_118, %c0_119, %c0_120] : memref<1x6x128x128xf32, #tpu.memory_space<vmem>>, vector<1x1x128x128xf32>
      %146 = vector.shape_cast %145 : vector<1x1x128x128xf32> to vector<128x128xf32>
      %cst_121 = arith.constant dense<0.000000e+00> : vector<16x128xf32>
      %147 = tpu.matmul %144, %146, %cst_121 {dimension_numbers = #tpu.dot_dimension_numbers<[1], [0], [0], [1], [0, 0, 1, 1], [], []>} : vector<16x128xf32>, vector<128x128xf32>, vector<16x128xf32> -> vector<16x128xf32>
      %c0_122 = arith.constant 0 : index
      %c3_123 = arith.constant 3 : index
      %c0_124 = arith.constant 0 : index
      %c0_125 = arith.constant 0 : index
      %148 = vector.load %arg7[%c0_122, %c3_123, %c0_124, %c0_125] : memref<1x4x16x128xf32, #tpu.memory_space<vmem>>, vector<1x1x16x128xf32>
      %149 = vector.shape_cast %148 : vector<1x1x16x128xf32> to vector<16x128xf32>
      %150 = arith.addf %147, %149 : vector<16x128xf32>
      %c0_126 = arith.constant 0 : index
      %c9 = arith.constant 9 : index
      %c0_127 = arith.constant 0 : index
      %c0_128 = arith.constant 0 : index
      %151 = vector.load %arg8[%c0_126, %c9, %c0_127, %c0_128] : memref<1x12x128x128xf32, #tpu.memory_space<vmem>>, vector<1x1x128x128xf32>
      %152 = vector.shape_cast %151 : vector<1x1x128x128xf32> to vector<128x128xf32>
      %c0_129 = arith.constant 0 : index
      %c10 = arith.constant 10 : index
      %c0_130 = arith.constant 0 : index
      %c0_131 = arith.constant 0 : index
      %153 = vector.load %arg8[%c0_129, %c10, %c0_130, %c0_131] : memref<1x12x128x128xf32, #tpu.memory_space<vmem>>, vector<1x1x128x128xf32>
      %154 = vector.shape_cast %153 : vector<1x1x128x128xf32> to vector<128x128xf32>
      %c0_132 = arith.constant 0 : index
      %c11 = arith.constant 11 : index
      %c0_133 = arith.constant 0 : index
      %c0_134 = arith.constant 0 : index
      %155 = vector.load %arg8[%c0_132, %c11, %c0_133, %c0_134] : memref<1x12x128x128xf32, #tpu.memory_space<vmem>>, vector<1x1x128x128xf32>
      %156 = vector.shape_cast %155 : vector<1x1x128x128xf32> to vector<128x128xf32>
      %cst_135 = arith.constant dense<0.000000e+00> : vector<16x128xf32>
      %157 = tpu.matmul %150, %154, %cst_135 {dimension_numbers = #tpu.dot_dimension_numbers<[1], [0], [0], [1], [0, 0, 1, 1], [], []>} : vector<16x128xf32>, vector<128x128xf32>, vector<16x128xf32> -> vector<16x128xf32>
      %158 = vector.extract_strided_slice %150 {offsets = [15, 0], sizes = [1, 128], strides = [1, 1]} : vector<16x128xf32> to vector<1x128xf32>
      %159 = vector.extract_strided_slice %150 {offsets = [0, 0], sizes = [15, 128], strides = [1, 1]} : vector<16x128xf32> to vector<15x128xf32>
      %160 = tpu.concatenate %158, %159 in 0 : vector<1x128xf32>, vector<15x128xf32> -> vector<16x128xf32>
      %161 = arith.mulf %160, %5 : vector<16x128xf32>
      %cst_136 = arith.constant dense<0.000000e+00> : vector<16x128xf32>
      %162 = tpu.matmul %161, %152, %cst_136 {dimension_numbers = #tpu.dot_dimension_numbers<[1], [0], [0], [1], [0, 0, 1, 1], [], []>} : vector<16x128xf32>, vector<128x128xf32>, vector<16x128xf32> -> vector<16x128xf32>
      %163 = arith.addf %157, %162 : vector<16x128xf32>
      %164 = vector.extract_strided_slice %150 {offsets = [1, 0], sizes = [15, 128], strides = [1, 1]} : vector<16x128xf32> to vector<15x128xf32>
      %165 = vector.extract_strided_slice %150 {offsets = [0, 0], sizes = [1, 128], strides = [1, 1]} : vector<16x128xf32> to vector<1x128xf32>
      %166 = tpu.concatenate %164, %165 in 0 : vector<15x128xf32>, vector<1x128xf32> -> vector<16x128xf32>
      %167 = arith.mulf %166, %7 : vector<16x128xf32>
      %cst_137 = arith.constant dense<0.000000e+00> : vector<16x128xf32>
      %168 = tpu.matmul %167, %156, %cst_137 {dimension_numbers = #tpu.dot_dimension_numbers<[1], [0], [0], [1], [0, 0, 1, 1], [], []>} : vector<16x128xf32>, vector<128x128xf32>, vector<16x128xf32> -> vector<16x128xf32>
      %169 = arith.addf %163, %168 : vector<16x128xf32>
      %c0_138 = arith.constant 0 : index
      %c3_139 = arith.constant 3 : index
      %c0_140 = arith.constant 0 : index
      %c0_141 = arith.constant 0 : index
      %170 = vector.load %arg9[%c0_138, %c3_139, %c0_140, %c0_141] : memref<1x4x16x128xf32, #tpu.memory_space<vmem>>, vector<1x1x16x128xf32>
      %171 = vector.shape_cast %170 : vector<1x1x16x128xf32> to vector<16x128xf32>
      %172 = arith.addf %169, %171 : vector<16x128xf32>
      %173 = vector.broadcast %33 : f32 to vector<16x128xf32>
      %174 = arith.mulf %173, %110 : vector<16x128xf32>
      %175 = vector.broadcast %35 : f32 to vector<16x128xf32>
      %176 = arith.mulf %175, %172 : vector<16x128xf32>
      %177 = arith.addf %174, %176 : vector<16x128xf32>
      %178 = vector.broadcast %37 : f32 to vector<16x128xf32>
      %179 = arith.mulf %178, %177 : vector<16x128xf32>
      %c0_142 = arith.constant 0 : index
      %c4_143 = arith.constant 4 : index
      %c0_144 = arith.constant 0 : index
      %c0_145 = arith.constant 0 : index
      %180 = vector.load %arg6[%c0_142, %c4_143, %c0_144, %c0_145] : memref<1x6x128x128xf32, #tpu.memory_space<vmem>>, vector<1x1x128x128xf32>
      %181 = vector.shape_cast %180 : vector<1x1x128x128xf32> to vector<128x128xf32>
      %cst_146 = arith.constant dense<0.000000e+00> : vector<16x128xf32>
      %182 = tpu.matmul %179, %181, %cst_146 {dimension_numbers = #tpu.dot_dimension_numbers<[1], [0], [0], [1], [0, 0, 1, 1], [], []>} : vector<16x128xf32>, vector<128x128xf32>, vector<16x128xf32> -> vector<16x128xf32>
      %183 = vector.broadcast %39 : f32 to vector<16x128xf32>
      %184 = arith.mulf %183, %110 : vector<16x128xf32>
      %c0_147 = arith.constant 0 : index
      %c5_148 = arith.constant 5 : index
      %c0_149 = arith.constant 0 : index
      %c0_150 = arith.constant 0 : index
      %185 = vector.load %arg6[%c0_147, %c5_148, %c0_149, %c0_150] : memref<1x6x128x128xf32, #tpu.memory_space<vmem>>, vector<1x1x128x128xf32>
      %186 = vector.shape_cast %185 : vector<1x1x128x128xf32> to vector<128x128xf32>
      %cst_151 = arith.constant dense<0.000000e+00> : vector<16x128xf32>
      %187 = tpu.matmul %184, %186, %cst_151 {dimension_numbers = #tpu.dot_dimension_numbers<[1], [0], [0], [1], [0, 0, 1, 1], [], []>} : vector<16x128xf32>, vector<128x128xf32>, vector<16x128xf32> -> vector<16x128xf32>
      %188 = arith.addf %182, %187 : vector<16x128xf32>
      %cst_152 = arith.constant 0.000000e+00 : f32
      %189 = vector.broadcast %cst_152 : f32 to vector<16x128xf32>
      %190 = arith.maximumf %188, %189 : vector<16x128xf32>
      %cst_153 = arith.constant dense<0.000000e+00> : vector<128xf32>
      %191 = vector.multi_reduction <add>, %190, %cst_153 [0] : vector<16x128xf32> to vector<128xf32>
      %192 = vector.shape_cast %191 : vector<128xf32> to vector<1x128xf32>
      %193 = arith.mulf %190, %3 : vector<16x128xf32>
      %cst_154 = arith.constant dense<0.000000e+00> : vector<128xf32>
      %194 = vector.multi_reduction <add>, %193, %cst_154 [0] : vector<16x128xf32> to vector<128xf32>
      %195 = vector.shape_cast %194 : vector<128xf32> to vector<1x128xf32>
      %cst_155 = arith.constant 0.000000e+00 : f32
      %196 = vector.broadcast %cst_155 : f32 to vector<1x128xf32>
      %cst_156 = arith.constant 0.000000e+00 : f32
      %197 = vector.broadcast %cst_156 : f32 to vector<1x128xf32>
      %c0_157 = arith.constant 0 : index
      %c0_158 = arith.constant 0 : index
      %c0_159 = arith.constant 0 : index
      %198 = vector.load %arg12[%c0_157, %c0_158, %c0_159] : memref<1x4x128xf32, #tpu.memory_space<vmem>>, vector<1x1x128xf32>
      %199 = vector.shape_cast %198 : vector<1x1x128xf32> to vector<1x128xf32>
      %200 = arith.mulf %192, %199 : vector<1x128xf32>
      %cst_160 = arith.constant dense<0.000000e+00> : vector<1xf32>
      %201 = vector.multi_reduction <add>, %200, %cst_160 [1] : vector<1x128xf32> to vector<1xf32>
      %202 = vector.shape_cast %201 : vector<1xf32> to vector<1x1xf32>
      %cst_161 = arith.constant 3.906250e-03 : f32
      %203 = vector.broadcast %cst_161 : f32 to vector<1x1xf32>
      %204 = arith.mulf %202, %203 : vector<1x1xf32>
      %cst_162 = arith.constant 0.000000e+00 : f32
      %205 = vector.broadcast %cst_162 : f32 to vector<1x1xf32>
      %206 = arith.maximumf %204, %205 : vector<1x1xf32>
      %c0_163 = arith.constant 0 : index
      %c2_164 = arith.constant 2 : index
      %c0_165 = arith.constant 0 : index
      %207 = vector.load %arg12[%c0_163, %c2_164, %c0_165] : memref<1x4x128xf32, #tpu.memory_space<vmem>>, vector<1x1x128xf32>
      %208 = vector.shape_cast %207 : vector<1x1x128xf32> to vector<1x128xf32>
      %209 = arith.mulf %195, %208 : vector<1x128xf32>
      %cst_166 = arith.constant dense<0.000000e+00> : vector<1xf32>
      %210 = vector.multi_reduction <add>, %209, %cst_166 [1] : vector<1x128xf32> to vector<1xf32>
      %211 = vector.shape_cast %210 : vector<1xf32> to vector<1x1xf32>
      %cst_167 = arith.constant 3.906250e-03 : f32
      %212 = vector.broadcast %cst_167 : f32 to vector<1x1xf32>
      %213 = arith.mulf %211, %212 : vector<1x1xf32>
      %cst_168 = arith.constant 0.000000e+00 : f32
      %214 = vector.broadcast %cst_168 : f32 to vector<1x1xf32>
      %215 = arith.maximumf %213, %214 : vector<1x1xf32>
      %c0_169 = arith.constant 0 : index
      %c1_170 = arith.constant 1 : index
      %c0_171 = arith.constant 0 : index
      %216 = vector.load %arg12[%c0_169, %c1_170, %c0_171] : memref<1x4x128xf32, #tpu.memory_space<vmem>>, vector<1x1x128xf32>
      %217 = vector.shape_cast %216 : vector<1x1x128xf32> to vector<1x128xf32>
      %218 = vector.broadcast %206 : vector<1x1xf32> to vector<1x128xf32>
      %219 = arith.mulf %218, %217 : vector<1x128xf32>
      %220 = arith.addf %196, %219 : vector<1x128xf32>
      %c0_172 = arith.constant 0 : index
      %c3_173 = arith.constant 3 : index
      %c0_174 = arith.constant 0 : index
      %221 = vector.load %arg12[%c0_172, %c3_173, %c0_174] : memref<1x4x128xf32, #tpu.memory_space<vmem>>, vector<1x1x128xf32>
      %222 = vector.shape_cast %221 : vector<1x1x128xf32> to vector<1x128xf32>
      %223 = vector.broadcast %215 : vector<1x1xf32> to vector<1x128xf32>
      %224 = arith.mulf %223, %222 : vector<1x128xf32>
      %225 = arith.addf %197, %224 : vector<1x128xf32>
      %cst_175 = arith.constant 0.000000e+00 : f32
      %226 = vector.broadcast %cst_175 : f32 to vector<1x128xf32>
      %227 = arith.subf %226, %220 : vector<1x128xf32>
      %228 = math.exp %227 : vector<1x128xf32>
      %cst_176 = arith.constant 1.000000e+00 : f32
      %229 = vector.broadcast %cst_176 : f32 to vector<1x128xf32>
      %230 = arith.addf %229, %228 : vector<1x128xf32>
      %231 = tpu.reciprocal %230 {approx = true} : vector<1x128xf32> -> vector<1x128xf32>
      %cst_177 = arith.constant 0.000000e+00 : f32
      %232 = vector.broadcast %cst_177 : f32 to vector<1x128xf32>
      %233 = arith.subf %232, %225 : vector<1x128xf32>
      %234 = math.exp %233 : vector<1x128xf32>
      %cst_178 = arith.constant 1.000000e+00 : f32
      %235 = vector.broadcast %cst_178 : f32 to vector<1x128xf32>
      %236 = arith.addf %235, %234 : vector<1x128xf32>
      %237 = tpu.reciprocal %236 {approx = true} : vector<1x128xf32> -> vector<1x128xf32>
      %238 = arith.addf %231, %237 : vector<1x128xf32>
      %cst_179 = arith.constant 5.000000e-01 : f32
      %239 = vector.broadcast %cst_179 : f32 to vector<1x128xf32>
      %240 = arith.mulf %239, %238 : vector<1x128xf32>
      %241 = vector.broadcast %240 : vector<1x128xf32> to vector<16x128xf32>
      %242 = arith.mulf %190, %241 : vector<16x128xf32>
      %c0_180 = arith.constant 0 : index
      %c0_181 = arith.constant 0 : index
      %c0_182 = arith.constant 0 : index
      %c0_183 = arith.constant 0 : index
      %243 = vector.load %arg11[%c0_180, %c0_181, %c0_182, %c0_183] : memref<1x6x128x128xf32, #tpu.memory_space<vmem>>, vector<1x1x128x128xf32>
      %244 = vector.shape_cast %243 : vector<1x1x128x128xf32> to vector<128x128xf32>
      %c0_184 = arith.constant 0 : index
      %c1_185 = arith.constant 1 : index
      %c0_186 = arith.constant 0 : index
      %c0_187 = arith.constant 0 : index
      %245 = vector.load %arg11[%c0_184, %c1_185, %c0_186, %c0_187] : memref<1x6x128x128xf32, #tpu.memory_space<vmem>>, vector<1x1x128x128xf32>
      %246 = vector.shape_cast %245 : vector<1x1x128x128xf32> to vector<128x128xf32>
      %c0_188 = arith.constant 0 : index
      %c2_189 = arith.constant 2 : index
      %c0_190 = arith.constant 0 : index
      %c0_191 = arith.constant 0 : index
      %247 = vector.load %arg11[%c0_188, %c2_189, %c0_190, %c0_191] : memref<1x6x128x128xf32, #tpu.memory_space<vmem>>, vector<1x1x128x128xf32>
      %248 = vector.shape_cast %247 : vector<1x1x128x128xf32> to vector<128x128xf32>
      %cst_192 = arith.constant dense<0.000000e+00> : vector<16x128xf32>
      %249 = tpu.matmul %242, %246, %cst_192 {dimension_numbers = #tpu.dot_dimension_numbers<[1], [0], [0], [1], [0, 0, 1, 1], [], []>} : vector<16x128xf32>, vector<128x128xf32>, vector<16x128xf32> -> vector<16x128xf32>
      %250 = vector.extract_strided_slice %242 {offsets = [13, 0], sizes = [3, 128], strides = [1, 1]} : vector<16x128xf32> to vector<3x128xf32>
      %251 = vector.extract_strided_slice %242 {offsets = [0, 0], sizes = [13, 128], strides = [1, 1]} : vector<16x128xf32> to vector<13x128xf32>
      %252 = tpu.concatenate %250, %251 in 0 : vector<3x128xf32>, vector<13x128xf32> -> vector<16x128xf32>
      %253 = arith.mulf %252, %9 : vector<16x128xf32>
      %cst_193 = arith.constant dense<0.000000e+00> : vector<16x128xf32>
      %254 = tpu.matmul %253, %244, %cst_193 {dimension_numbers = #tpu.dot_dimension_numbers<[1], [0], [0], [1], [0, 0, 1, 1], [], []>} : vector<16x128xf32>, vector<128x128xf32>, vector<16x128xf32> -> vector<16x128xf32>
      %255 = arith.addf %249, %254 : vector<16x128xf32>
      %256 = vector.extract_strided_slice %242 {offsets = [3, 0], sizes = [13, 128], strides = [1, 1]} : vector<16x128xf32> to vector<13x128xf32>
      %257 = vector.extract_strided_slice %242 {offsets = [0, 0], sizes = [3, 128], strides = [1, 1]} : vector<16x128xf32> to vector<3x128xf32>
      %258 = tpu.concatenate %256, %257 in 0 : vector<13x128xf32>, vector<3x128xf32> -> vector<16x128xf32>
      %259 = arith.mulf %258, %11 : vector<16x128xf32>
      %cst_194 = arith.constant dense<0.000000e+00> : vector<16x128xf32>
      %260 = tpu.matmul %259, %248, %cst_194 {dimension_numbers = #tpu.dot_dimension_numbers<[1], [0], [0], [1], [0, 0, 1, 1], [], []>} : vector<16x128xf32>, vector<128x128xf32>, vector<16x128xf32> -> vector<16x128xf32>
      %261 = arith.addf %255, %260 : vector<16x128xf32>
      %cst_195 = arith.constant 0.000000e+00 : f32
      %262 = vector.broadcast %cst_195 : f32 to vector<16x128xf32>
      %263 = arith.maximumf %261, %262 : vector<16x128xf32>
      %c0_196 = arith.constant 0 : index
      %c3_197 = arith.constant 3 : index
      %c0_198 = arith.constant 0 : index
      %c0_199 = arith.constant 0 : index
      %264 = vector.load %arg11[%c0_196, %c3_197, %c0_198, %c0_199] : memref<1x6x128x128xf32, #tpu.memory_space<vmem>>, vector<1x1x128x128xf32>
      %265 = vector.shape_cast %264 : vector<1x1x128x128xf32> to vector<128x128xf32>
      %c0_200 = arith.constant 0 : index
      %c4_201 = arith.constant 4 : index
      %c0_202 = arith.constant 0 : index
      %c0_203 = arith.constant 0 : index
      %266 = vector.load %arg11[%c0_200, %c4_201, %c0_202, %c0_203] : memref<1x6x128x128xf32, #tpu.memory_space<vmem>>, vector<1x1x128x128xf32>
      %267 = vector.shape_cast %266 : vector<1x1x128x128xf32> to vector<128x128xf32>
      %c0_204 = arith.constant 0 : index
      %c5_205 = arith.constant 5 : index
      %c0_206 = arith.constant 0 : index
      %c0_207 = arith.constant 0 : index
      %268 = vector.load %arg11[%c0_204, %c5_205, %c0_206, %c0_207] : memref<1x6x128x128xf32, #tpu.memory_space<vmem>>, vector<1x1x128x128xf32>
      %269 = vector.shape_cast %268 : vector<1x1x128x128xf32> to vector<128x128xf32>
      %cst_208 = arith.constant dense<0.000000e+00> : vector<16x128xf32>
      %270 = tpu.matmul %263, %267, %cst_208 {dimension_numbers = #tpu.dot_dimension_numbers<[1], [0], [0], [1], [0, 0, 1, 1], [], []>} : vector<16x128xf32>, vector<128x128xf32>, vector<16x128xf32> -> vector<16x128xf32>
      %271 = vector.extract_strided_slice %263 {offsets = [15, 0], sizes = [1, 128], strides = [1, 1]} : vector<16x128xf32> to vector<1x128xf32>
      %272 = vector.extract_strided_slice %263 {offsets = [0, 0], sizes = [15, 128], strides = [1, 1]} : vector<16x128xf32> to vector<15x128xf32>
      %273 = tpu.concatenate %271, %272 in 0 : vector<1x128xf32>, vector<15x128xf32> -> vector<16x128xf32>
      %274 = arith.mulf %273, %5 : vector<16x128xf32>
      %cst_209 = arith.constant dense<0.000000e+00> : vector<16x128xf32>
      %275 = tpu.matmul %274, %265, %cst_209 {dimension_numbers = #tpu.dot_dimension_numbers<[1], [0], [0], [1], [0, 0, 1, 1], [], []>} : vector<16x128xf32>, vector<128x128xf32>, vector<16x128xf32> -> vector<16x128xf32>
      %276 = arith.addf %270, %275 : vector<16x128xf32>
      %277 = vector.extract_strided_slice %263 {offsets = [1, 0], sizes = [15, 128], strides = [1, 1]} : vector<16x128xf32> to vector<15x128xf32>
      %278 = vector.extract_strided_slice %263 {offsets = [0, 0], sizes = [1, 128], strides = [1, 1]} : vector<16x128xf32> to vector<1x128xf32>
      %279 = tpu.concatenate %277, %278 in 0 : vector<15x128xf32>, vector<1x128xf32> -> vector<16x128xf32>
      %280 = arith.mulf %279, %7 : vector<16x128xf32>
      %cst_210 = arith.constant dense<0.000000e+00> : vector<16x128xf32>
      %281 = tpu.matmul %280, %269, %cst_210 {dimension_numbers = #tpu.dot_dimension_numbers<[1], [0], [0], [1], [0, 0, 1, 1], [], []>} : vector<16x128xf32>, vector<128x128xf32>, vector<16x128xf32> -> vector<16x128xf32>
      %282 = arith.addf %276, %281 : vector<16x128xf32>
      %cst_211 = arith.constant 0.000000e+00 : f32
      %283 = vector.broadcast %cst_211 : f32 to vector<16x128xf32>
      %284 = arith.maximumf %282, %283 : vector<16x128xf32>
      %285 = vector.broadcast %41 : f32 to vector<16x128xf32>
      %286 = arith.mulf %285, %27 : vector<16x128xf32>
      %287 = vector.broadcast %43 : f32 to vector<16x128xf32>
      %288 = arith.mulf %287, %284 : vector<16x128xf32>
      %289 = arith.addf %286, %288 : vector<16x128xf32>
      %c5_i32 = arith.constant 5 : i32
      %290 = arith.cmpi sle, %arg1, %c5_i32 : i32
      %c8_i32_212 = arith.constant 8 : i32
      %291 = arith.cmpi eq, %arg1, %c8_i32_212 : i32
      %292 = arith.ori %290, %291 : i1
      %293 = arith.extui %292 : i1 to i32
      %c0_i32_213 = arith.constant 0 : i32
      %294 = arith.cmpi ne, %293, %c0_i32_213 : i32
      scf.if %294 {
        %c0_218 = arith.constant 0 : index
        %c0_219 = arith.constant 0 : index
        %301 = vector.load %arg17[%c0_218, %c0_219] : memref<16x128xf32, #tpu.memory_space<vmem>>, vector<16x128xf32>
        tpu.vector_store %arg17[%c0_218, %c0_219], %289 {strides = array<i32>} : memref<16x128xf32, #tpu.memory_space<vmem>>, vector<16x128xf32>,
      } else {
      }
      %c0_i32_214 = arith.constant 0 : i32
      %295 = arith.cmpi eq, %arg1, %c0_i32_214 : i32
      %296 = arith.extui %295 : i1 to i32
      %c0_i32_215 = arith.constant 0 : i32
      %297 = arith.cmpi ne, %296, %c0_i32_215 : i32
      scf.if %297 {
        %301 = arith.mulf %289, %3 : vector<16x128xf32>
        %c0_218 = arith.constant 0 : index
        %c0_219 = arith.constant 0 : index
        %302 = vector.load %arg18[%c0_218, %c0_219] : memref<16x128xf32, #tpu.memory_space<vmem>>, vector<16x128xf32>
        tpu.vector_store %arg18[%c0_218, %c0_219], %301 {strides = array<i32>} : memref<16x128xf32, #tpu.memory_space<vmem>>, vector<16x128xf32>,
      } else {
      }
      %c6_i32_216 = arith.constant 6 : i32
      %298 = arith.cmpi eq, %arg1, %c6_i32_216 : i32
      %299 = arith.extui %298 : i1 to i32
      %c0_i32_217 = arith.constant 0 : i32
      %300 = arith.cmpi ne, %299, %c0_i32_217 : i32
      scf.if %300 {
        %c0_218 = arith.constant 0 : index
        %c0_219 = arith.constant 0 : index
        %301 = vector.load %arg18[%c0_218, %c0_219] : memref<16x128xf32, #tpu.memory_space<vmem>>, vector<16x128xf32>
        tpu.vector_store %arg18[%c0_218, %c0_219], %289 {strides = array<i32>} : memref<16x128xf32, #tpu.memory_space<vmem>>, vector<16x128xf32>,
      } else {
      }
    } else {
    }
    %c7_i32_14 = arith.constant 7 : i32
    %18 = arith.cmpi eq, %arg1, %c7_i32_14 : i32
    %19 = arith.extui %18 : i1 to i32
    %c0_i32_15 = arith.constant 0 : i32
    %20 = arith.cmpi ne, %19, %c0_i32_15 : i32
    scf.if %20 {
      %c0_17 = arith.constant 0 : index
      %c0_18 = arith.constant 0 : index
      %24 = vector.load %arg17[%c0_17, %c0_18] : memref<16x128xf32, #tpu.memory_space<vmem>>, vector<16x128xf32>
      %c0_19 = arith.constant 0 : index
      %c0_20 = arith.constant 0 : index
      %c0_21 = arith.constant 0 : index
      %25 = vector.load %arg14[%c0_19, %c0_20, %c0_21] : memref<2x128x128xf32, #tpu.memory_space<vmem>>, vector<1x128x128xf32>
      %26 = vector.shape_cast %25 : vector<1x128x128xf32> to vector<128x128xf32>
      %cst = arith.constant dense<0.000000e+00> : vector<16x128xf32>
      %27 = tpu.matmul %24, %26, %cst {dimension_numbers = #tpu.dot_dimension_numbers<[1], [0], [0], [1], [0, 0, 1, 1], [], []>} : vector<16x128xf32>, vector<128x128xf32>, vector<16x128xf32> -> vector<16x128xf32>
      %c0_22 = arith.constant 0 : index
      %c0_23 = arith.constant 0 : index
      %28 = vector.load %arg18[%c0_22, %c0_23] : memref<16x128xf32, #tpu.memory_space<vmem>>, vector<16x128xf32>
      %c1_24 = arith.constant 1 : index
      %c0_25 = arith.constant 0 : index
      %c0_26 = arith.constant 0 : index
      %29 = vector.load %arg14[%c1_24, %c0_25, %c0_26] : memref<2x128x128xf32, #tpu.memory_space<vmem>>, vector<1x128x128xf32>
      %30 = vector.shape_cast %29 : vector<1x128x128xf32> to vector<128x128xf32>
      %cst_27 = arith.constant dense<0.000000e+00> : vector<16x128xf32>
      %31 = tpu.matmul %28, %30, %cst_27 {dimension_numbers = #tpu.dot_dimension_numbers<[1], [0], [0], [1], [0, 0, 1, 1], [], []>} : vector<16x128xf32>, vector<128x128xf32>, vector<16x128xf32> -> vector<16x128xf32>
      %32 = arith.addf %27, %31 : vector<16x128xf32>
      %cst_28 = arith.constant 0.000000e+00 : f32
      %33 = vector.broadcast %cst_28 : f32 to vector<16x128xf32>
      %34 = arith.maximumf %32, %33 : vector<16x128xf32>
      %cst_29 = arith.constant dense<0.000000e+00> : vector<128xf32>
      %35 = vector.multi_reduction <add>, %34, %cst_29 [0] : vector<16x128xf32> to vector<128xf32>
      %36 = vector.shape_cast %35 : vector<128xf32> to vector<1x128xf32>
      %37 = arith.mulf %34, %3 : vector<16x128xf32>
      %cst_30 = arith.constant dense<0.000000e+00> : vector<128xf32>
      %38 = vector.multi_reduction <add>, %37, %cst_30 [0] : vector<16x128xf32> to vector<128xf32>
      %39 = vector.shape_cast %38 : vector<128xf32> to vector<1x128xf32>
      %cst_31 = arith.constant 0.000000e+00 : f32
      %40 = vector.broadcast %cst_31 : f32 to vector<1x128xf32>
      %cst_32 = arith.constant 0.000000e+00 : f32
      %41 = vector.broadcast %cst_32 : f32 to vector<1x128xf32>
      %c0_33 = arith.constant 0 : index
      %c0_34 = arith.constant 0 : index
      %42 = vector.load %arg15[%c0_33, %c0_34] : memref<4x128xf32, #tpu.memory_space<vmem>>, vector<1x128xf32>
      %43 = arith.mulf %36, %42 : vector<1x128xf32>
      %cst_35 = arith.constant dense<0.000000e+00> : vector<1xf32>
      %44 = vector.multi_reduction <add>, %43, %cst_35 [1] : vector<1x128xf32> to vector<1xf32>
      %45 = vector.shape_cast %44 : vector<1xf32> to vector<1x1xf32>
      %cst_36 = arith.constant 3.906250e-03 : f32
      %46 = vector.broadcast %cst_36 : f32 to vector<1x1xf32>
      %47 = arith.mulf %45, %46 : vector<1x1xf32>
      %cst_37 = arith.constant 0.000000e+00 : f32
      %48 = vector.broadcast %cst_37 : f32 to vector<1x1xf32>
      %49 = arith.maximumf %47, %48 : vector<1x1xf32>
      %c2_38 = arith.constant 2 : index
      %c0_39 = arith.constant 0 : index
      %50 = vector.load %arg15[%c2_38, %c0_39] : memref<4x128xf32, #tpu.memory_space<vmem>>, vector<1x128xf32>
      %51 = arith.mulf %39, %50 : vector<1x128xf32>
      %cst_40 = arith.constant dense<0.000000e+00> : vector<1xf32>
      %52 = vector.multi_reduction <add>, %51, %cst_40 [1] : vector<1x128xf32> to vector<1xf32>
      %53 = vector.shape_cast %52 : vector<1xf32> to vector<1x1xf32>
      %cst_41 = arith.constant 3.906250e-03 : f32
      %54 = vector.broadcast %cst_41 : f32 to vector<1x1xf32>
      %55 = arith.mulf %53, %54 : vector<1x1xf32>
      %cst_42 = arith.constant 0.000000e+00 : f32
      %56 = vector.broadcast %cst_42 : f32 to vector<1x1xf32>
      %57 = arith.maximumf %55, %56 : vector<1x1xf32>
      %c1_43 = arith.constant 1 : index
      %c0_44 = arith.constant 0 : index
      %58 = vector.load %arg15[%c1_43, %c0_44] : memref<4x128xf32, #tpu.memory_space<vmem>>, vector<1x128xf32>
      %59 = vector.broadcast %49 : vector<1x1xf32> to vector<1x128xf32>
      %60 = arith.mulf %59, %58 : vector<1x128xf32>
      %61 = arith.addf %40, %60 : vector<1x128xf32>
      %c3_45 = arith.constant 3 : index
      %c0_46 = arith.constant 0 : index
      %62 = vector.load %arg15[%c3_45, %c0_46] : memref<4x128xf32, #tpu.memory_space<vmem>>, vector<1x128xf32>
      %63 = vector.broadcast %57 : vector<1x1xf32> to vector<1x128xf32>
      %64 = arith.mulf %63, %62 : vector<1x128xf32>
      %65 = arith.addf %41, %64 : vector<1x128xf32>
      %cst_47 = arith.constant 0.000000e+00 : f32
      %66 = vector.broadcast %cst_47 : f32 to vector<1x128xf32>
      %67 = arith.subf %66, %61 : vector<1x128xf32>
      %68 = math.exp %67 : vector<1x128xf32>
      %cst_48 = arith.constant 1.000000e+00 : f32
      %69 = vector.broadcast %cst_48 : f32 to vector<1x128xf32>
      %70 = arith.addf %69, %68 : vector<1x128xf32>
      %71 = tpu.reciprocal %70 {approx = true} : vector<1x128xf32> -> vector<1x128xf32>
      %cst_49 = arith.constant 0.000000e+00 : f32
      %72 = vector.broadcast %cst_49 : f32 to vector<1x128xf32>
      %73 = arith.subf %72, %65 : vector<1x128xf32>
      %74 = math.exp %73 : vector<1x128xf32>
      %cst_50 = arith.constant 1.000000e+00 : f32
      %75 = vector.broadcast %cst_50 : f32 to vector<1x128xf32>
      %76 = arith.addf %75, %74 : vector<1x128xf32>
      %77 = tpu.reciprocal %76 {approx = true} : vector<1x128xf32> -> vector<1x128xf32>
      %78 = arith.addf %71, %77 : vector<1x128xf32>
      %cst_51 = arith.constant 5.000000e-01 : f32
      %79 = vector.broadcast %cst_51 : f32 to vector<1x128xf32>
      %80 = arith.mulf %79, %78 : vector<1x128xf32>
      %81 = vector.broadcast %80 : vector<1x128xf32> to vector<16x128xf32>
      %82 = arith.mulf %34, %81 : vector<16x128xf32>
      %c0_52 = arith.constant 0 : index
      %c0_53 = arith.constant 0 : index
      %83 = vector.load %arg17[%c0_52, %c0_53] : memref<16x128xf32, #tpu.memory_space<vmem>>, vector<16x128xf32>
      tpu.vector_store %arg17[%c0_52, %c0_53], %82 {strides = array<i32>} : memref<16x128xf32, #tpu.memory_space<vmem>>, vector<16x128xf32>,
    } else {
    }
    %c8_i32 = arith.constant 8 : i32
    %21 = arith.cmpi eq, %arg1, %c8_i32 : i32
    %22 = arith.extui %21 : i1 to i32
    %c0_i32_16 = arith.constant 0 : i32
    %23 = arith.cmpi ne, %22, %c0_i32_16 : i32
    scf.if %23 {
      %c0_17 = arith.constant 0 : index
      %c0_18 = arith.constant 0 : index
      %24 = vector.load %arg17[%c0_17, %c0_18] : memref<16x128xf32, #tpu.memory_space<vmem>>, vector<16x128xf32>
      %25 = arith.addf %24, %2 : vector<16x128xf32>
      %c0_19 = arith.constant 0 : index
      %c0_20 = arith.constant 0 : index
      %26 = vector.load %arg16[%c0_19, %c0_20] : memref<16x128xf32, #tpu.memory_space<vmem>>, vector<16x128xf32>
      tpu.vector_store %arg16[%c0_19, %c0_20], %25 {strides = array<i32>} : memref<16x128xf32, #tpu.memory_space<vmem>>, vector<16x128xf32>,
    } else {
    }
    return
  }
  func.func @transform_0(%arg0: i32, %arg1: i32, %arg2: memref<9xi32, #tpu.memory_space<smem>>) -> (i32, i32) {
    %c0_i32 = arith.constant 0 : i32
    %c0_i32_0 = arith.constant 0 : i32
    return %arg0, %c0_i32 : i32, i32
  }
  func.func @transform_1(%arg0: i32, %arg1: i32, %arg2: memref<9xi32, #tpu.memory_space<smem>>) -> (i32, i32) {
    %c0_i32 = arith.constant 0 : i32
    %c0_i32_0 = arith.constant 0 : i32
    %c0_i32_1 = arith.constant 0 : i32
    return %c0_i32, %c0_i32_0 : i32, i32
  }
  func.func @transform_2(%arg0: i32, %arg1: i32, %arg2: memref<9xi32, #tpu.memory_space<smem>>) -> (i32, i32, i32) {
    %c0_i32 = arith.constant 0 : i32
    %c0_i32_0 = arith.constant 0 : i32
    %c0_i32_1 = arith.constant 0 : i32
    %c0_i32_2 = arith.constant 0 : i32
    return %c0_i32, %c0_i32_0, %c0_i32_1 : i32, i32, i32
  }
  func.func @transform_3(%arg0: i32, %arg1: i32, %arg2: memref<9xi32, #tpu.memory_space<smem>>) -> (i32, i32, i32, i32) {
    %0 = arith.index_cast %arg1 : i32 to index
    %1 = memref.load %arg2[%0] : memref<9xi32, #tpu.memory_space<smem>>
    %c0_i32 = arith.constant 0 : i32
    %c0_i32_0 = arith.constant 0 : i32
    %c0_i32_1 = arith.constant 0 : i32
    %c0_i32_2 = arith.constant 0 : i32
    return %1, %c0_i32, %c0_i32_0, %c0_i32_1 : i32, i32, i32, i32
  }
  func.func @transform_4(%arg0: i32, %arg1: i32, %arg2: memref<9xi32, #tpu.memory_space<smem>>) -> (i32, i32, i32, i32) {
    %0 = arith.index_cast %arg1 : i32 to index
    %1 = memref.load %arg2[%0] : memref<9xi32, #tpu.memory_space<smem>>
    %c0_i32 = arith.constant 0 : i32
    %c0_i32_0 = arith.constant 0 : i32
    %c0_i32_1 = arith.constant 0 : i32
    %c0_i32_2 = arith.constant 0 : i32
    return %1, %c0_i32, %c0_i32_0, %c0_i32_1 : i32, i32, i32, i32
  }
  func.func @transform_5(%arg0: i32, %arg1: i32, %arg2: memref<9xi32, #tpu.memory_space<smem>>) -> (i32, i32, i32, i32) {
    %0 = arith.index_cast %arg1 : i32 to index
    %1 = memref.load %arg2[%0] : memref<9xi32, #tpu.memory_space<smem>>
    %c0_i32 = arith.constant 0 : i32
    %c0_i32_0 = arith.constant 0 : i32
    %c0_i32_1 = arith.constant 0 : i32
    %c0_i32_2 = arith.constant 0 : i32
    return %1, %c0_i32, %c0_i32_0, %c0_i32_1 : i32, i32, i32, i32
  }
  func.func @transform_6(%arg0: i32, %arg1: i32, %arg2: memref<9xi32, #tpu.memory_space<smem>>) -> (i32, i32, i32, i32) {
    %0 = arith.index_cast %arg1 : i32 to index
    %1 = memref.load %arg2[%0] : memref<9xi32, #tpu.memory_space<smem>>
    %c0_i32 = arith.constant 0 : i32
    %c0_i32_0 = arith.constant 0 : i32
    %c0_i32_1 = arith.constant 0 : i32
    %c0_i32_2 = arith.constant 0 : i32
    return %1, %c0_i32, %c0_i32_0, %c0_i32_1 : i32, i32, i32, i32
  }
  func.func @transform_7(%arg0: i32, %arg1: i32, %arg2: memref<9xi32, #tpu.memory_space<smem>>) -> (i32, i32, i32, i32) {
    %0 = arith.index_cast %arg1 : i32 to index
    %1 = memref.load %arg2[%0] : memref<9xi32, #tpu.memory_space<smem>>
    %c0_i32 = arith.constant 0 : i32
    %c0_i32_0 = arith.constant 0 : i32
    %c0_i32_1 = arith.constant 0 : i32
    %c0_i32_2 = arith.constant 0 : i32
    return %1, %c0_i32, %c0_i32_0, %c0_i32_1 : i32, i32, i32, i32
  }
  func.func @transform_8(%arg0: i32, %arg1: i32, %arg2: memref<9xi32, #tpu.memory_space<smem>>) -> (i32, i32, i32, i32) {
    %0 = arith.index_cast %arg1 : i32 to index
    %1 = memref.load %arg2[%0] : memref<9xi32, #tpu.memory_space<smem>>
    %c0_i32 = arith.constant 0 : i32
    %c0_i32_0 = arith.constant 0 : i32
    %c0_i32_1 = arith.constant 0 : i32
    %c0_i32_2 = arith.constant 0 : i32
    return %1, %c0_i32, %c0_i32_0, %c0_i32_1 : i32, i32, i32, i32
  }
  func.func @transform_9(%arg0: i32, %arg1: i32, %arg2: memref<9xi32, #tpu.memory_space<smem>>) -> (i32, i32, i32) {
    %0 = arith.index_cast %arg1 : i32 to index
    %1 = memref.load %arg2[%0] : memref<9xi32, #tpu.memory_space<smem>>
    %c0_i32 = arith.constant 0 : i32
    %c0_i32_0 = arith.constant 0 : i32
    %c0_i32_1 = arith.constant 0 : i32
    return %1, %c0_i32, %c0_i32_0 : i32, i32, i32
  }
  func.func @transform_10(%arg0: i32, %arg1: i32, %arg2: memref<9xi32, #tpu.memory_space<smem>>) -> (i32, i32) {
    %c0_i32 = arith.constant 0 : i32
    %c0_i32_0 = arith.constant 0 : i32
    %c0_i32_1 = arith.constant 0 : i32
    return %c0_i32, %c0_i32_0 : i32, i32
  }
  func.func @transform_11(%arg0: i32, %arg1: i32, %arg2: memref<9xi32, #tpu.memory_space<smem>>) -> (i32, i32, i32) {
    %c0_i32 = arith.constant 0 : i32
    %c0_i32_0 = arith.constant 0 : i32
    %c0_i32_1 = arith.constant 0 : i32
    %c0_i32_2 = arith.constant 0 : i32
    return %c0_i32, %c0_i32_0, %c0_i32_1 : i32, i32, i32
  }
  func.func @transform_12(%arg0: i32, %arg1: i32, %arg2: memref<9xi32, #tpu.memory_space<smem>>) -> (i32, i32) {
    %c0_i32 = arith.constant 0 : i32
    %c0_i32_0 = arith.constant 0 : i32
    %c0_i32_1 = arith.constant 0 : i32
    return %c0_i32, %c0_i32_0 : i32, i32
  }
  func.func @transform_13(%arg0: i32, %arg1: i32, %arg2: memref<9xi32, #tpu.memory_space<smem>>) -> (i32, i32) {
    %c0_i32 = arith.constant 0 : i32
    %c0_i32_0 = arith.constant 0 : i32
    return %arg0, %c0_i32 : i32, i32
  }
}

</mosaic_0001>

<llo_original>
// kernel: forward.1
$region0: #{forward.1}
  #allocation0 [shape = 'u32[]', space=smem, size = 0x4, offset = 0x4, fixed_abs, tag = 'smem constant byte address 0x4 - core index']
  #allocation1 [shape = 'u32[144,128]{1,0:T(1,128)}', space=vmem, size = 0x12000, scoped, tag = 'internal scratch']
  #allocation2 [shape = 'f32[16,128]{1,0:T(8,128)}', space=vmem, size = 0x2000, scoped, tag = 'scratch operand']
  #allocation3 [shape = 'f32[16,128]{1,0:T(8,128)}', space=vmem, size = 0x2000, scoped, tag = 'scratch operand']
  #allocation4 [shape = 's32[1]{0}', space=sflag, size = 0x4, scoped, tag = 'scoped memory for forward.1']
  #allocation5 [shape = 'u8[512]{0}', space=smem, size = 0x200, scoped, tag = 'prefetched SMEM operand 0']
  %s0 = inlined_call_operand.hbm [shape: s32[9], index: 0, kind: input, shape index: {}]
  %s1 = inlined_call_operand.hbm [shape: f32[32,128], index: 1, kind: input, shape index: {}]
  %s2 = inlined_call_operand.hbm [shape: f32[16,128], index: 2, kind: input, shape index: {}]
  %s3 = inlined_call_operand.hbm [shape: f32[4,16,128], index: 3, kind: input, shape index: {}]
  %s4 = inlined_call_operand.hbm [shape: f32[4,6,128,128], index: 4, kind: input, shape index: {}]
  %s5 = inlined_call_operand.hbm [shape: f32[4,4,16,128], index: 5, kind: input, shape index: {}]
  %s6 = inlined_call_operand.hbm [shape: f32[4,12,128,128], index: 6, kind: input, shape index: {}]
  %s7 = inlined_call_operand.hbm [shape: f32[4,4,16,128], index: 7, kind: input, shape index: {}]
  %s8 = inlined_call_operand.hbm [shape: f32[4,2,16,128], index: 8, kind: input, shape index: {}]
  %s9 = inlined_call_operand.hbm [shape: f32[4,6,128,128], index: 9, kind: input, shape index: {}]
  %s10 = inlined_call_operand.hbm [shape: f32[4,4,128], index: 10, kind: input, shape index: {}]
  %s11 = inlined_call_operand.hbm [shape: f32[4,8], index: 11, kind: input, shape index: {}]
  %s12 = inlined_call_operand.hbm [shape: f32[2,128,128], index: 12, kind: input, shape index: {}]
  %s13 = inlined_call_operand.hbm [shape: f32[4,128], index: 13, kind: input, shape index: {}]
  %s14 = inlined_call_operand.hbm [shape: f32[32,128], index: 14, kind: output, shape index: {}]
  %s15 = sld [smem:[#allocation0]]
  $region165: #{forward.1} parent=0
    _
  %s17 = ssub.s32 1, %s15
  %s18 = scalar_select 0, %s17, %s15
  %20 = dma.hbm_to_smem %s0, 16, [#allocation5], [#allocation4]
  %21 = dma.done [#allocation4], 16
  %22 = sfence
  $region1: #{forward.1} parent=0
    #allocation6 [shape = 'u8[16384]{0}', space=vmem, size = 0x4000, scoped, tag = 'input window, operand 1']
    #allocation7 [shape = 's32[2]{0}', space=sflag, size = 0x8, scoped, tag = 'scoped memory for forward.1']
    #allocation8 [shape = 's32[2]{0}', space=sflag, size = 0x8, scoped, tag = 'scoped memory for forward.1']
    #allocation9 [shape = 's32[2]{0}', space=sflag, size = 0x8, scoped, tag = 'scoped memory for forward.1']
    #allocation10 [shape = 'u8[8192]{0}', space=vmem, size = 0x2000, scoped, tag = 'input window, operand 2, single buffered']
    #allocation11 [shape = 's32[1]{0}', space=sflag, size = 0x4, scoped, tag = 'scoped memory for forward.1']
    #allocation12 [shape = 'u8[32768]{0}', space=vmem, size = 0x8000, scoped, tag = 'input window, operand 3, single buffered']
    #allocation13 [shape = 'u8[786432]{0}', space=vmem, size = 0xc0000, scoped, tag = 'input window, operand 4']
    #allocation14 [shape = 's32[2]{0}', space=sflag, size = 0x8, scoped, tag = 'scoped memory for forward.1']
    #allocation15 [shape = 'u8[65536]{0}', space=vmem, size = 0x10000, scoped, tag = 'input window, operand 5']
    #allocation16 [shape = 'u8[1572864]{0}', space=vmem, size = 0x180000, scoped, tag = 'input window, operand 6']
    #allocation17 [shape = 's32[2]{0}', space=sflag, size = 0x8, scoped, tag = 'scoped memory for forward.1']
    #allocation18 [shape = 'u8[65536]{0}', space=vmem, size = 0x10000, scoped, tag = 'input window, operand 7']
    #allocation19 [shape = 'u8[32768]{0}', space=vmem, size = 0x8000, scoped, tag = 'input window, operand 8']
    #allocation20 [shape = 's32[2]{0}', space=sflag, size = 0x8, scoped, tag = 'scoped memory for forward.1']
    #allocation21 [shape = 'u8[786432]{0}', space=vmem, size = 0xc0000, scoped, tag = 'input window, operand 9']
    #allocation22 [shape = 'u8[4096]{0}', space=vmem, size = 0x1000, scoped, tag = 'input window, operand 10']
    #allocation23 [shape = 's32[2]{0}', space=sflag, size = 0x8, scoped, tag = 'scoped memory for forward.1']
    #allocation24 [shape = 'u8[2048]{0}', space=smem, size = 0x800, scoped, tag = 'input window, operand 11, single buffered']
    #allocation25 [shape = 'u8[131072]{0}', space=vmem, size = 0x20000, scoped, tag = 'input window, operand 12, single buffered']
    #allocation26 [shape = 'u8[2048]{0}', space=vmem, size = 0x800, scoped, tag = 'input window, operand 13, single buffered']
    #allocation27 [shape = 's32[1]{0}', space=sflag, size = 0x4, scoped, tag = 'scoped memory for forward.1']
    #allocation28 [shape = 'u8[16384]{0}', space=vmem, size = 0x4000, scoped, tag = 'output window, operand 0']
    %23 = vsyncpa [#allocation7], 0
    %s24 = scalar_lea.sflag [#allocation7], 1
    %25 = vsyncpa %s24, 0
    %26 = vsyncpa [#allocation11], 0
    %27 = vsyncpa [#allocation14], 0
    %s28 = scalar_lea.sflag [#allocation14], 1
    %29 = vsyncpa %s28, 0
    %30 = vsyncpa [#allocation17], 0
    %s31 = scalar_lea.sflag [#allocation17], 1
    %32 = vsyncpa %s31, 0
    %33 = vsyncpa [#allocation20], 0
    %s34 = scalar_lea.sflag [#allocation20], 1
    %35 = vsyncpa %s34, 0
    %36 = vsyncpa [#allocation23], 0
    %s37 = scalar_lea.sflag [#allocation23], 1
    %38 = vsyncpa %s37, 0
    %39 = vsyncpa [#allocation9], 0
    %40 = vsyncpa [#allocation27], 0
    %41 = vsyncpa [#allocation8], 0
    %s42 = scalar_lea.sflag [#allocation8], 1
    %43 = vsyncpa %s42, 0
    loop: start=0, step=1, limit=20
    $region2: #{forward.1} parent=1 // loop_pre_header
      _
    $region3: #{forward.1} parent=1 // loop_header
      %s45 = sphi 0, %s49
      %p46 = scmp.ge.s32.totalorder %s45, 20
      %s52 = sphi 0, %s64
      %s53 = sphi 0, %s60
      %s54 = sphi 0, %s52
      %s55 = sphi 0, %s53
      %s56 = sphi 0, %s54
      %s57 = sphi 0, %s55
      %s67 = sphi 0, %s69
      %s70 = sphi 0, %s67
      %s71 = sphi 0, %s70
      %s87 = sphi 0, %s71
      %s91 = sphi 0, %s91
      %s93 = sphi 0, %s91
      %s94 = sphi 0, %s93
      %s108 = sphi 0, %s94
      %s112 = sphi 0, %s112
      %s114 = sphi 0, %s112
      %s115 = sphi 0, %s114
      %s129 = sphi 0, %s115
      %s137 = sphi 0, %s139
      %s140 = sphi 0, %s137
      %s141 = sphi 0, %s140
      %s157 = sphi 0, %s141
      %s165 = sphi 0, %s167
      %s168 = sphi 0, %s165
      %s169 = sphi 0, %s168
      %s185 = sphi 0, %s169
      %s193 = sphi 0, %s195
      %s196 = sphi 0, %s193
      %s197 = sphi 0, %s196
      %s213 = sphi 0, %s197
      %s221 = sphi 0, %s223
      %s224 = sphi 0, %s221
      %s225 = sphi 0, %s224
      %s241 = sphi 0, %s225
      %s249 = sphi 0, %s251
      %s252 = sphi 0, %s249
      %s253 = sphi 0, %s252
      %s269 = sphi 0, %s253
      %s277 = sphi 0, %s279
      %s280 = sphi 0, %s277
      %s281 = sphi 0, %s280
      %s297 = sphi 0, %s281
      %s305 = sphi 0, %s307
      %s308 = sphi 0, %s305
      %s309 = sphi 0, %s308
      %s325 = sphi 0, %s309
      %s329 = sphi 0, %s329
      %s331 = sphi 0, %s329
      %s332 = sphi 0, %s331
      %s346 = sphi 0, %s332
      %s350 = sphi 0, %s350
      %s352 = sphi 0, %s350
      %s353 = sphi 0, %s352
      %s367 = sphi 0, %s353
      %s371 = sphi 0, %s371
      %s373 = sphi 0, %s371
      %s374 = sphi 0, %s373
      %s388 = sphi 0, %s374
      %s394 = sphi 0, %s396
      %s397 = sphi 0, %s394
      %s398 = sphi 0, %s397
      %s414 = sphi 0, %s398
    $region4: #{forward.1} parent=1 // loop_header_branch
      %48 = sbr.rel (%p46) target = $region8
    $region5: #{forward.1} parent=1 // loop_body
      %s50 = ssub.s32 %s45, 1
      %s51 = ssub.s32 %s45, 2
      %s58 = sadd.s32 1, %s53
      %p59 = scmp.ge.s32.totalorder %s58, 9
      %s60 = scalar_select %p59, 0, %s58
      %s61 = sadd.s32 1, %s52
      %s62 = scalar_select %p59, %s61, %s52
      %p63 = scmp.ge.s32.totalorder %s62, 2
      %s64 = scalar_select %p63, 0, %s62
      %s65 = ssub.s32 %s52, %s64
      %p66 = scmp.eq.s32.totalorder %s65, 0
      %s68 = sadd.s32 %s67, 1
      %s69 = scalar_select %p66, %s67, %s68
      %p72 = pneg %p66
      %p73 = scmp.eq.s32.totalorder %s45, 17
      %p74 = por %p72, %p73
      %p75 = scmp.ne.s32.totalorder %s67, %s70
      %p76 = scmp.eq.s32.totalorder %s45, 0
      %p77 = por %p75, %p76
      %p78 = scmp.ne.s32.totalorder %s67, %s70
      %p79 = scmp.eq.s32.totalorder %s50, 17
      %p80 = por %p78, %p79
      %p81 = scmp.ne.s32.totalorder %s70, %s71
      %p82 = scmp.eq.s32.totalorder %s50, 0
      %p83 = por %p81, %p82
      %p84 = scmp.ne.s32.totalorder %s70, %s71
      %p85 = scmp.eq.s32.totalorder %s51, 17
      %p86 = por %p84, %p85
      %p88 = scmp.ne.s32.totalorder %s71, %s87
      %p89 = scmp.eq.s32.totalorder %s51, 0
      %p90 = por %p88, %p89
      %s92 = sadd.s32 %s91, 1
      %p95 = scmp.eq.s32.totalorder %s45, 17
      %p96 = scmp.ne.s32.totalorder %s91, %s93
      %p97 = scmp.eq.s32.totalorder %s45, 0
      %p98 = por %p96, %p97
      %p99 = scmp.ne.s32.totalorder %s91, %s93
      %p100 = scmp.eq.s32.totalorder %s50, 17
      %p101 = por %p99, %p100
      %p102 = scmp.ne.s32.totalorder %s93, %s94
      %p103 = scmp.eq.s32.totalorder %s50, 0
      %p104 = por %p102, %p103
      %p105 = scmp.ne.s32.totalorder %s93, %s94
      %p106 = scmp.eq.s32.totalorder %s51, 17
      %p107 = por %p105, %p106
      %p109 = scmp.ne.s32.totalorder %s94, %s108
      %p110 = scmp.eq.s32.totalorder %s51, 0
      %p111 = por %p109, %p110
      %s113 = sadd.s32 %s112, 1
      %p116 = scmp.eq.s32.totalorder %s45, 17
      %p117 = scmp.ne.s32.totalorder %s112, %s114
      %p118 = scmp.eq.s32.totalorder %s45, 0
      %p119 = por %p117, %p118
      %p120 = scmp.ne.s32.totalorder %s112, %s114
      %p121 = scmp.eq.s32.totalorder %s50, 17
      %p122 = por %p120, %p121
      %p123 = scmp.ne.s32.totalorder %s114, %s115
      %p124 = scmp.eq.s32.totalorder %s50, 0
      %p125 = por %p123, %p124
      %p126 = scmp.ne.s32.totalorder %s114, %s115
      %p127 = scmp.eq.s32.totalorder %s51, 17
      %p128 = por %p126, %p127
      %p130 = scmp.ne.s32.totalorder %s115, %s129
      %p131 = scmp.eq.s32.totalorder %s51, 0
      %p132 = por %p130, %p131
      %s133 = sld [smem:[#allocation5 + %s53]]
      %s134 = sld [smem:[#allocation5 + %s60]]
      %s135 = ssub.s32 %s133, %s134
      %p136 = scmp.eq.s32.totalorder %s135, 0
      %s138 = sadd.s32 %s137, 1
      %s139 = scalar_select %p136, %s137, %s138
      %p142 = pneg %p136
      %p143 = scmp.eq.s32.totalorder %s45, 17
      %p144 = por %p142, %p143
      %p145 = scmp.ne.s32.totalorder %s137, %s140
      %p146 = scmp.eq.s32.totalorder %s45, 0
      %p147 = por %p145, %p146
      %p148 = scmp.ne.s32.totalorder %s137, %s140
      %p149 = scmp.eq.s32.totalorder %s50, 17
      %p150 = por %p148, %p149
      %p151 = scmp.ne.s32.totalorder %s140, %s141
      %p152 = scmp.eq.s32.totalorder %s50, 0
      %p153 = por %p151, %p152
      %p154 = scmp.ne.s32.totalorder %s140, %s141
      %p155 = scmp.eq.s32.totalorder %s51, 17
      %p156 = por %p154, %p155
      %p158 = scmp.ne.s32.totalorder %s141, %s157
      %p159 = scmp.eq.s32.totalorder %s51, 0
      %p160 = por %p158, %p159
      %s161 = sld [smem:[#allocation5 + %s53]]
      %s162 = sld [smem:[#allocation5 + %s60]]
      %s163 = ssub.s32 %s161, %s162
      %p164 = scmp.eq.s32.totalorder %s163, 0
      %s166 = sadd.s32 %s165, 1
      %s167 = scalar_select %p164, %s165, %s166
      %p170 = pneg %p164
      %p171 = scmp.eq.s32.totalorder %s45, 17
      %p172 = por %p170, %p171
      %p173 = scmp.ne.s32.totalorder %s165, %s168
      %p174 = scmp.eq.s32.totalorder %s45, 0
      %p175 = por %p173, %p174
      %p176 = scmp.ne.s32.totalorder %s165, %s168
      %p177 = scmp.eq.s32.totalorder %s50, 17
      %p178 = por %p176, %p177
      %p179 = scmp.ne.s32.totalorder %s168, %s169
      %p180 = scmp.eq.s32.totalorder %s50, 0
      %p181 = por %p179, %p180
      %p182 = scmp.ne.s32.totalorder %s168, %s169
      %p183 = scmp.eq.s32.totalorder %s51, 17
      %p184 = por %p182, %p183
      %p186 = scmp.ne.s32.totalorder %s169, %s185
      %p187 = scmp.eq.s32.totalorder %s51, 0
      %p188 = por %p186, %p187
      %s189 = sld [smem:[#allocation5 + %s53]]
      %s190 = sld [smem:[#allocation5 + %s60]]
      %s191 = ssub.s32 %s189, %s190
      %p192 = scmp.eq.s32.totalorder %s191, 0
      %s194 = sadd.s32 %s193, 1
      %s195 = scalar_select %p192, %s193, %s194
      %p198 = pneg %p192
      %p199 = scmp.eq.s32.totalorder %s45, 17
      %p200 = por %p198, %p199
      %p201 = scmp.ne.s32.totalorder %s193, %s196
      %p202 = scmp.eq.s32.totalorder %s45, 0
      %p203 = por %p201, %p202
      %p204 = scmp.ne.s32.totalorder %s193, %s196
      %p205 = scmp.eq.s32.totalorder %s50, 17
      %p206 = por %p204, %p205
      %p207 = scmp.ne.s32.totalorder %s196, %s197
      %p208 = scmp.eq.s32.totalorder %s50, 0
      %p209 = por %p207, %p208
      %p210 = scmp.ne.s32.totalorder %s196, %s197
      %p211 = scmp.eq.s32.totalorder %s51, 17
      %p212 = por %p210, %p211
      %p214 = scmp.ne.s32.totalorder %s197, %s213
      %p215 = scmp.eq.s32.totalorder %s51, 0
      %p216 = por %p214, %p215
      %s217 = sld [smem:[#allocation5 + %s53]]
      %s218 = sld [smem:[#allocation5 + %s60]]
      %s219 = ssub.s32 %s217, %s218
      %p220 = scmp.eq.s32.totalorder %s219, 0
      %s222 = sadd.s32 %s221, 1
      %s223 = scalar_select %p220, %s221, %s222
      %p226 = pneg %p220
      %p227 = scmp.eq.s32.totalorder %s45, 17
      %p228 = por %p226, %p227
      %p229 = scmp.ne.s32.totalorder %s221, %s224
      %p230 = scmp.eq.s32.totalorder %s45, 0
      %p231 = por %p229, %p230
      %p232 = scmp.ne.s32.totalorder %s221, %s224
      %p233 = scmp.eq.s32.totalorder %s50, 17
      %p234 = por %p232, %p233
      %p235 = scmp.ne.s32.totalorder %s224, %s225
      %p236 = scmp.eq.s32.totalorder %s50, 0
      %p237 = por %p235, %p236
      %p238 = scmp.ne.s32.totalorder %s224, %s225
      %p239 = scmp.eq.s32.totalorder %s51, 17
      %p240 = por %p238, %p239
      %p242 = scmp.ne.s32.totalorder %s225, %s241
      %p243 = scmp.eq.s32.totalorder %s51, 0
      %p244 = por %p242, %p243
      %s245 = sld [smem:[#allocation5 + %s53]]
      %s246 = sld [smem:[#allocation5 + %s60]]
      %s247 = ssub.s32 %s245, %s246
      %p248 = scmp.eq.s32.totalorder %s247, 0
      %s250 = sadd.s32 %s249, 1
      %s251 = scalar_select %p248, %s249, %s250
      %p254 = pneg %p248
      %p255 = scmp.eq.s32.totalorder %s45, 17
      %p256 = por %p254, %p255
      %p257 = scmp.ne.s32.totalorder %s249, %s252
      %p258 = scmp.eq.s32.totalorder %s45, 0
      %p259 = por %p257, %p258
      %p260 = scmp.ne.s32.totalorder %s249, %s252
      %p261 = scmp.eq.s32.totalorder %s50, 17
      %p262 = por %p260, %p261
      %p263 = scmp.ne.s32.totalorder %s252, %s253
      %p264 = scmp.eq.s32.totalorder %s50, 0
      %p265 = por %p263, %p264
      %p266 = scmp.ne.s32.totalorder %s252, %s253
      %p267 = scmp.eq.s32.totalorder %s51, 17
      %p268 = por %p266, %p267
      %p270 = scmp.ne.s32.totalorder %s253, %s269
      %p271 = scmp.eq.s32.totalorder %s51, 0
      %p272 = por %p270, %p271
      %s273 = sld [smem:[#allocation5 + %s53]]
      %s274 = sld [smem:[#allocation5 + %s60]]
      %s275 = ssub.s32 %s273, %s274
      %p276 = scmp.eq.s32.totalorder %s275, 0
      %s278 = sadd.s32 %s277, 1
      %s279 = scalar_select %p276, %s277, %s278
      %p282 = pneg %p276
      %p283 = scmp.eq.s32.totalorder %s45, 17
      %p284 = por %p282, %p283
      %p285 = scmp.ne.s32.totalorder %s277, %s280
      %p286 = scmp.eq.s32.totalorder %s45, 0
      %p287 = por %p285, %p286
      %p288 = scmp.ne.s32.totalorder %s277, %s280
      %p289 = scmp.eq.s32.totalorder %s50, 17
      %p290 = por %p288, %p289
      %p291 = scmp.ne.s32.totalorder %s280, %s281
      %p292 = scmp.eq.s32.totalorder %s50, 0
      %p293 = por %p291, %p292
      %p294 = scmp.ne.s32.totalorder %s280, %s281
      %p295 = scmp.eq.s32.totalorder %s51, 17
      %p296 = por %p294, %p295
      %p298 = scmp.ne.s32.totalorder %s281, %s297
      %p299 = scmp.eq.s32.totalorder %s51, 0
      %p300 = por %p298, %p299
      %s301 = sld [smem:[#allocation5 + %s53]]
      %s302 = sld [smem:[#allocation5 + %s60]]
      %s303 = ssub.s32 %s301, %s302
      %p304 = scmp.eq.s32.totalorder %s303, 0
      %s306 = sadd.s32 %s305, 1
      %s307 = scalar_select %p304, %s305, %s306
      %p310 = pneg %p304
      %p311 = scmp.eq.s32.totalorder %s45, 17
      %p312 = por %p310, %p311
      %p313 = scmp.ne.s32.totalorder %s305, %s308
      %p314 = scmp.eq.s32.totalorder %s45, 0
      %p315 = por %p313, %p314
      %p316 = scmp.ne.s32.totalorder %s305, %s308
      %p317 = scmp.eq.s32.totalorder %s50, 17
      %p318 = por %p316, %p317
      %p319 = scmp.ne.s32.totalorder %s308, %s309
      %p320 = scmp.eq.s32.totalorder %s50, 0
      %p321 = por %p319, %p320
      %p322 = scmp.ne.s32.totalorder %s308, %s309
      %p323 = scmp.eq.s32.totalorder %s51, 17
      %p324 = por %p322, %p323
      %p326 = scmp.ne.s32.totalorder %s309, %s325
      %p327 = scmp.eq.s32.totalorder %s51, 0
      %p328 = por %p326, %p327
      %s330 = sadd.s32 %s329, 1
      %p333 = scmp.eq.s32.totalorder %s45, 17
      %p334 = scmp.ne.s32.totalorder %s329, %s331
      %p335 = scmp.eq.s32.totalorder %s45, 0
      %p336 = por %p334, %p335
      %p337 = scmp.ne.s32.totalorder %s329, %s331
      %p338 = scmp.eq.s32.totalorder %s50, 17
      %p339 = por %p337, %p338
      %p340 = scmp.ne.s32.totalorder %s331, %s332
      %p341 = scmp.eq.s32.totalorder %s50, 0
      %p342 = por %p340, %p341
      %p343 = scmp.ne.s32.totalorder %s331, %s332
      %p344 = scmp.eq.s32.totalorder %s51, 17
      %p345 = por %p343, %p344
      %p347 = scmp.ne.s32.totalorder %s332, %s346
      %p348 = scmp.eq.s32.totalorder %s51, 0
      %p349 = por %p347, %p348
      %s351 = sadd.s32 %s350, 1
      %p354 = scmp.eq.s32.totalorder %s45, 17
      %p355 = scmp.ne.s32.totalorder %s350, %s352
      %p356 = scmp.eq.s32.totalorder %s45, 0
      %p357 = por %p355, %p356
      %p358 = scmp.ne.s32.totalorder %s350, %s352
      %p359 = scmp.eq.s32.totalorder %s50, 17
      %p360 = por %p358, %p359
      %p361 = scmp.ne.s32.totalorder %s352, %s353
      %p362 = scmp.eq.s32.totalorder %s50, 0
      %p363 = por %p361, %p362
      %p364 = scmp.ne.s32.totalorder %s352, %s353
      %p365 = scmp.eq.s32.totalorder %s51, 17
      %p366 = por %p364, %p365
      %p368 = scmp.ne.s32.totalorder %s353, %s367
      %p369 = scmp.eq.s32.totalorder %s51, 0
      %p370 = por %p368, %p369
      %s372 = sadd.s32 %s371, 1
      %p375 = scmp.eq.s32.totalorder %s45, 17
      %p376 = scmp.ne.s32.totalorder %s371, %s373
      %p377 = scmp.eq.s32.totalorder %s45, 0
      %p378 = por %p376, %p377
      %p379 = scmp.ne.s32.totalorder %s371, %s373
      %p380 = scmp.eq.s32.totalorder %s50, 17
      %p381 = por %p379, %p380
      %p382 = scmp.ne.s32.totalorder %s373, %s374
      %p383 = scmp.eq.s32.totalorder %s50, 0
      %p384 = por %p382, %p383
      %p385 = scmp.ne.s32.totalorder %s373, %s374
      %p386 = scmp.eq.s32.totalorder %s51, 17
      %p387 = por %p385, %p386
      %p389 = scmp.ne.s32.totalorder %s374, %s388
      %p390 = scmp.eq.s32.totalorder %s51, 0
      %p391 = por %p389, %p390
      %s392 = ssub.s32 %s52, %s64
      %p393 = scmp.eq.s32.totalorder %s392, 0
      %s395 = sadd.s32 %s394, 1
      %s396 = scalar_select %p393, %s394, %s395
      %p399 = pneg %p393
      %p400 = scmp.eq.s32.totalorder %s45, 17
      %p401 = por %p399, %p400
      %p402 = scmp.ne.s32.totalorder %s394, %s397
      %p403 = scmp.eq.s32.totalorder %s45, 0
      %p404 = por %p402, %p403
      %p405 = scmp.ne.s32.totalorder %s394, %s397
      %p406 = scmp.eq.s32.totalorder %s50, 17
      %p407 = por %p405, %p406
      %p408 = scmp.ne.s32.totalorder %s397, %s398
      %p409 = scmp.eq.s32.totalorder %s50, 0
      %p410 = por %p408, %p409
      %p411 = scmp.ne.s32.totalorder %s397, %s398
      %p412 = scmp.eq.s32.totalorder %s51, 17
      %p413 = por %p411, %p412
      %p415 = scmp.ne.s32.totalorder %s398, %s414
      %p416 = scmp.eq.s32.totalorder %s51, 0
      %p417 = por %p415, %p416
      %p418 = scmp.le.s32.totalorder 1, %s45
      %p419 = scmp.lt.s32.totalorder %s45, 19
      %p420 = pnand %p418, %p419
      %p421 = pneg %p420
      // Predicated region
      $region9: #{forward.1} parent=5 // pred_check
        _
      $region10: #{forward.1} parent=5 // pred_check_branch
        %423 = sbr.rel (%p420) target = $region12
      $region11: #{forward.1} parent=5 // pred_region
        %s424 = ssub.s32 %s45, 1
        // Predicated region
        $region13: #{forward.1} parent=11 // pred_check
          %p425 = pneg %p104
        $region14: #{forward.1} parent=11 // pred_check_branch
          %427 = sbr.rel (%p425) target = $region16
        $region15: #{forward.1} parent=11 // pred_region
          %s429 = ssub.s32 256, 256
          %430 = vsyncadd [#allocation11], %s429
          %s431 = sshll.u32 [#allocation10], 4
          %s432 = int_to_ptr.vmem [resolvable:$true] %s431
          %437 = dma.hbm_to_vmem [thread:$0]  %s2, 256, %s432, [#allocation11], 128, 128, 8
        $region16: #{forward.1} parent=11 // pred_fallthru
          _
        // Predicated region
        $region17: #{forward.1} parent=11 // pred_check
          %p438 = pneg %p125
        $region18: #{forward.1} parent=11 // pred_check_branch
          %440 = sbr.rel (%p438) target = $region20
        $region19: #{forward.1} parent=11 // pred_region
          %s442 = ssub.s32 1024, 1024
          %443 = vsyncadd [#allocation11], %s442
          %s444 = sshll.u32 [#allocation12], 4
          %s445 = int_to_ptr.vmem [resolvable:$true] %s444
          %450 = dma.hbm_to_vmem [thread:$0]  %s3, 1024, %s445, [#allocation11], 128, 128, 8
        $region20: #{forward.1} parent=11 // pred_fallthru
          _
        // Predicated region
        $region21: #{forward.1} parent=11 // pred_check
          %p451 = pneg %p342
        $region22: #{forward.1} parent=11 // pred_check_branch
          %453 = sbr.rel (%p451) target = $region24
        $region23: #{forward.1} parent=11 // pred_region
          %s455 = ssub.s32 64, 64
          %456 = vsyncadd [#allocation9], %s455
          %459 = dma.hbm_to_smem %s11, 64, [#allocation24], [#allocation9]
        $region24: #{forward.1} parent=11 // pred_fallthru
          _
        // Predicated region
        $region25: #{forward.1} parent=11 // pred_check
          %p460 = pneg %p363
        $region26: #{forward.1} parent=11 // pred_check_branch
          %462 = sbr.rel (%p460) target = $region28
        $region27: #{forward.1} parent=11 // pred_region
          %s464 = ssub.s32 4096, 4096
          %465 = vsyncadd [#allocation23], %s464
          %s466 = sshll.u32 [#allocation25], 4
          %s467 = int_to_ptr.vmem [resolvable:$true] %s466
          %472 = dma.hbm_to_vmem [thread:$0]  %s12, 4096, %s467, [#allocation23], 128, 128, 8
        $region28: #{forward.1} parent=11 // pred_fallthru
          _
        // Predicated region
        $region29: #{forward.1} parent=11 // pred_check
          %p473 = pneg %p384
        $region30: #{forward.1} parent=11 // pred_check_branch
          %475 = sbr.rel (%p473) target = $region32
        $region31: #{forward.1} parent=11 // pred_region
          %s477 = ssub.s32 64, 64
          %478 = vsyncadd [#allocation27], %s477
          %s480 = sshll.u32 [#allocation26], 4
          %s481 = int_to_ptr.vmem [resolvable:$true] %s480
          %483 = dma.hbm_to_vmem [thread:$0]  %s13, 64, %s481, [#allocation27]
        $region32: #{forward.1} parent=11 // pred_fallthru
          _
      $region12: #{forward.1} parent=5 // pred_fallthru
        _
      %p484 = scmp.lt.s32.totalorder %s45, 18
      // Predicated region
      $region33: #{forward.1} parent=5 // pred_check
        %p485 = pneg %p484
      $region34: #{forward.1} parent=5 // pred_check_branch
        %487 = sbr.rel (%p485) target = $region36
      $region35: #{forward.1} parent=5 // pred_region
        // Predicated region
        $region37: #{forward.1} parent=35 // pred_check
          %p488 = pneg %p77
        $region38: #{forward.1} parent=35 // pred_check_branch
          %490 = sbr.rel (%p488) target = $region40
        $region39: #{forward.1} parent=35 // pred_region
          %s491 = sand.u32 %s67, 1
          %s492 = scalar_lea.sflag [#allocation7], %s491
          %s493 = sand.u32 %s67, 1
          %s494 = smul.addr %s493, 16
          %s495 = scalar_lea.vmem [#allocation6], %s494
          %s496 = smul.u32 2, %s52
          %s498 = ssub.s32 256, 256
          %499 = vsyncadd %s492, %s498
          %s500 = smul.addr %s496, 128
          %s501 = scalar_lea.hbm %s1, %s500
          %s502 = sshll.u32 %s495, 4
          %s503 = int_to_ptr.vmem [resolvable:$true] %s502
          %508 = dma.hbm_to_vmem [thread:$0]  %s501, 256, %s503, %s492, 128, 128, 8
        $region40: #{forward.1} parent=35 // pred_fallthru
          _
        // Predicated region
        $region41: #{forward.1} parent=35 // pred_check
          %p509 = pneg %p147
        $region42: #{forward.1} parent=35 // pred_check_branch
          %511 = sbr.rel (%p509) target = $region44
        $region43: #{forward.1} parent=35 // pred_region
          %s512 = sand.u32 %s45, 1
          %s513 = scalar_lea.sflag [#allocation14], %s512
          %s514 = sand.u32 %s137, 1
          %s515 = smul.addr %s514, 768
          %s516 = scalar_lea.vmem [#allocation13], %s515
          %s517 = sld [smem:[#allocation5 + %s53]]
          %s519 = ssub.s32 12288, 12288
          %520 = vsyncadd %s513, %s519
          %s521 = smul.addr %s517, 96
          %s522 = smul.addr %s521, 128
          %s523 = scalar_lea.hbm %s4, %s522
          %s524 = sshll.u32 %s516, 4
          %s525 = int_to_ptr.vmem [resolvable:$true] %s524
          %530 = dma.hbm_to_vmem [thread:$0]  %s523, 12288, %s525, %s513, 128, 128, 8
        $region44: #{forward.1} parent=35 // pred_fallthru
          _
        // Predicated region
        $region45: #{forward.1} parent=35 // pred_check
          %p531 = pneg %p175
        $region46: #{forward.1} parent=35 // pred_check_branch
          %533 = sbr.rel (%p531) target = $region48
        $region47: #{forward.1} parent=35 // pred_region
          %s534 = sand.u32 %s45, 1
          %s535 = scalar_lea.sflag [#allocation14], %s534
          %s536 = sand.u32 %s165, 1
          %s537 = smul.addr %s536, 64
          %s538 = scalar_lea.vmem [#allocation15], %s537
          %s539 = sld [smem:[#allocation5 + %s53]]
          %s541 = ssub.s32 1024, 1024
          %542 = vsyncadd %s535, %s541
          %s543 = smul.addr %s539, 8
          %s544 = smul.addr %s543, 128
          %s545 = scalar_lea.hbm %s5, %s544
          %s546 = sshll.u32 %s538, 4
          %s547 = int_to_ptr.vmem [resolvable:$true] %s546
          %552 = dma.hbm_to_vmem [thread:$0]  %s545, 1024, %s547, %s535, 128, 128, 8
        $region48: #{forward.1} parent=35 // pred_fallthru
          _
        // Predicated region
        $region49: #{forward.1} parent=35 // pred_check
          %p553 = pneg %p203
        $region50: #{forward.1} parent=35 // pred_check_branch
          %555 = sbr.rel (%p553) target = $region52
        $region51: #{forward.1} parent=35 // pred_region
          %s556 = sand.u32 %s45, 1
          %s557 = scalar_lea.sflag [#allocation17], %s556
          %s558 = sand.u32 %s193, 1
          %s559 = smul.addr %s558, 1536
          %s560 = scalar_lea.vmem [#allocation16], %s559
          %s561 = sld [smem:[#allocation5 + %s53]]
          %s563 = ssub.s32 24576, 24576
          %564 = vsyncadd %s557, %s563
          %s565 = smul.addr %s561, 192
          %s566 = smul.addr %s565, 128
          %s567 = scalar_lea.hbm %s6, %s566
          %s568 = sshll.u32 %s560, 4
          %s569 = int_to_ptr.vmem [resolvable:$true] %s568
          %574 = dma.hbm_to_vmem [thread:$0]  %s567, 24576, %s569, %s557, 128, 128, 8
        $region52: #{forward.1} parent=35 // pred_fallthru
          _
        // Predicated region
        $region53: #{forward.1} parent=35 // pred_check
          %p575 = pneg %p231
        $region54: #{forward.1} parent=35 // pred_check_branch
          %577 = sbr.rel (%p575) target = $region56
        $region55: #{forward.1} parent=35 // pred_region
          %s578 = sand.u32 %s45, 1
          %s579 = scalar_lea.sflag [#allocation17], %s578
          %s580 = sand.u32 %s221, 1
          %s581 = smul.addr %s580, 64
          %s582 = scalar_lea.vmem [#allocation18], %s581
          %s583 = sld [smem:[#allocation5 + %s53]]
          %s585 = ssub.s32 1024, 1024
          %586 = vsyncadd %s579, %s585
          %s587 = smul.addr %s583, 8
          %s588 = smul.addr %s587, 128
          %s589 = scalar_lea.hbm %s7, %s588
          %s590 = sshll.u32 %s582, 4
          %s591 = int_to_ptr.vmem [resolvable:$true] %s590
          %596 = dma.hbm_to_vmem [thread:$0]  %s589, 1024, %s591, %s579, 128, 128, 8
        $region56: #{forward.1} parent=35 // pred_fallthru
          _
        // Predicated region
        $region57: #{forward.1} parent=35 // pred_check
          %p597 = pneg %p259
        $region58: #{forward.1} parent=35 // pred_check_branch
          %599 = sbr.rel (%p597) target = $region60
        $region59: #{forward.1} parent=35 // pred_region
          %s600 = sand.u32 %s45, 1
          %s601 = scalar_lea.sflag [#allocation20], %s600
          %s602 = sand.u32 %s249, 1
          %s603 = smul.addr %s602, 32
          %s604 = scalar_lea.vmem [#allocation19], %s603
          %s605 = sld [smem:[#allocation5 + %s53]]
          %s607 = ssub.s32 512, 512
          %608 = vsyncadd %s601, %s607
          %s609 = smul.addr %s605, 4
          %s610 = smul.addr %s609, 128
          %s611 = scalar_lea.hbm %s8, %s610
          %s612 = sshll.u32 %s604, 4
          %s613 = int_to_ptr.vmem [resolvable:$true] %s612
          %618 = dma.hbm_to_vmem [thread:$0]  %s611, 512, %s613, %s601, 128, 128, 8
        $region60: #{forward.1} parent=35 // pred_fallthru
          _
        // Predicated region
        $region61: #{forward.1} parent=35 // pred_check
          %p619 = pneg %p287
        $region62: #{forward.1} parent=35 // pred_check_branch
          %621 = sbr.rel (%p619) target = $region64
        $region63: #{forward.1} parent=35 // pred_region
          %s622 = sand.u32 %s45, 1
          %s623 = scalar_lea.sflag [#allocation20], %s622
          %s624 = sand.u32 %s277, 1
          %s625 = smul.addr %s624, 768
          %s626 = scalar_lea.vmem [#allocation21], %s625
          %s627 = sld [smem:[#allocation5 + %s53]]
          %s629 = ssub.s32 12288, 12288
          %630 = vsyncadd %s623, %s629
          %s631 = smul.addr %s627, 96
          %s632 = smul.addr %s631, 128
          %s633 = scalar_lea.hbm %s9, %s632
          %s634 = sshll.u32 %s626, 4
          %s635 = int_to_ptr.vmem [resolvable:$true] %s634
          %640 = dma.hbm_to_vmem [thread:$0]  %s633, 12288, %s635, %s623, 128, 128, 8
        $region64: #{forward.1} parent=35 // pred_fallthru
          _
        // Predicated region
        $region65: #{forward.1} parent=35 // pred_check
          %p641 = pneg %p315
        $region66: #{forward.1} parent=35 // pred_check_branch
          %643 = sbr.rel (%p641) target = $region68
        $region67: #{forward.1} parent=35 // pred_region
          %s644 = sand.u32 %s45, 1
          %s645 = scalar_lea.sflag [#allocation23], %s644
          %s646 = sand.u32 %s305, 1
          %s647 = smul.addr %s646, 4
          %s648 = scalar_lea.vmem [#allocation22], %s647
          %s649 = sld [smem:[#allocation5 + %s53]]
          %s651 = ssub.s32 64, 64
          %652 = vsyncadd %s645, %s651
          %s653 = smul.addr %s649, 64
          %s654 = scalar_lea.hbm %s10, %s653
          %s656 = sshll.u32 %s648, 4
          %s657 = int_to_ptr.vmem [resolvable:$true] %s656
          %659 = dma.hbm_to_vmem [thread:$0]  %s654, 64, %s657, %s645
        $region68: #{forward.1} parent=35 // pred_fallthru
          _
      $region36: #{forward.1} parent=5 // pred_fallthru
        _
      %p660 = scmp.le.s32.totalorder 1, %s45
      %p661 = scmp.lt.s32.totalorder %s45, 19
      %p662 = pnand %p660, %p661
      %p663 = pneg %p662
      // Predicated region
      $region69: #{forward.1} parent=5 // pred_check
        _
      $region70: #{forward.1} parent=5 // pred_check_branch
        %665 = sbr.rel (%p662) target = $region72
      $region71: #{forward.1} parent=5 // pred_region
        %s666 = ssub.s32 %s45, 1
        %s667 = sand.u32 %s70, 1
        %s668 = scalar_lea.sflag [#allocation7], %s667
        %s669 = sand.u32 %s70, 1
        %s670 = smul.addr %s669, 16
        %s671 = scalar_lea.vmem [#allocation6], %s670
        // Predicated region
        $region73: #{forward.1} parent=71 // pred_check
          %p672 = pneg %p83
        $region74: #{forward.1} parent=71 // pred_check_branch
          %674 = sbr.rel (%p672) target = $region76
        $region75: #{forward.1} parent=71 // pred_region
          %675 = dma.done %s668, 256
        $region76: #{forward.1} parent=71 // pred_fallthru
          _
        // Predicated region
        $region77: #{forward.1} parent=71 // pred_check
          %p676 = pneg %p104
        $region78: #{forward.1} parent=71 // pred_check_branch
          %678 = sbr.rel (%p676) target = $region80
        $region79: #{forward.1} parent=71 // pred_region
          %679 = dma.done [#allocation11], 256
        $region80: #{forward.1} parent=71 // pred_fallthru
          _
        // Predicated region
        $region81: #{forward.1} parent=71 // pred_check
          %p680 = pneg %p125
        $region82: #{forward.1} parent=71 // pred_check_branch
          %682 = sbr.rel (%p680) target = $region84
        $region83: #{forward.1} parent=71 // pred_region
          %683 = dma.done [#allocation11], 1024
        $region84: #{forward.1} parent=71 // pred_fallthru
          _
        %s684 = sand.u32 %s50, 1
        %s685 = scalar_lea.sflag [#allocation14], %s684
        %s686 = sand.u32 %s140, 1
        %s687 = smul.addr %s686, 768
        %s688 = scalar_lea.vmem [#allocation13], %s687
        // Predicated region
        $region85: #{forward.1} parent=71 // pred_check
          %p689 = pneg %p153
        $region86: #{forward.1} parent=71 // pred_check_branch
          %691 = sbr.rel (%p689) target = $region88
        $region87: #{forward.1} parent=71 // pred_region
          %692 = dma.done %s685, 12288
        $region88: #{forward.1} parent=71 // pred_fallthru
          _
        %s693 = sand.u32 %s50, 1
        %s694 = scalar_lea.sflag [#allocation14], %s693
        %s695 = sand.u32 %s168, 1
        %s696 = smul.addr %s695, 64
        %s697 = scalar_lea.vmem [#allocation15], %s696
        // Predicated region
        $region89: #{forward.1} parent=71 // pred_check
          %p698 = pneg %p181
        $region90: #{forward.1} parent=71 // pred_check_branch
          %700 = sbr.rel (%p698) target = $region92
        $region91: #{forward.1} parent=71 // pred_region
          %701 = dma.done %s694, 1024
        $region92: #{forward.1} parent=71 // pred_fallthru
          _
        %s702 = sand.u32 %s50, 1
        %s703 = scalar_lea.sflag [#allocation17], %s702
        %s704 = sand.u32 %s196, 1
        %s705 = smul.addr %s704, 1536
        %s706 = scalar_lea.vmem [#allocation16], %s705
        // Predicated region
        $region93: #{forward.1} parent=71 // pred_check
          %p707 = pneg %p209
        $region94: #{forward.1} parent=71 // pred_check_branch
          %709 = sbr.rel (%p707) target = $region96
        $region95: #{forward.1} parent=71 // pred_region
          %710 = dma.done %s703, 24576
        $region96: #{forward.1} parent=71 // pred_fallthru
          _
        %s711 = sand.u32 %s50, 1
        %s712 = scalar_lea.sflag [#allocation17], %s711
        %s713 = sand.u32 %s224, 1
        %s714 = smul.addr %s713, 64
        %s715 = scalar_lea.vmem [#allocation18], %s714
        // Predicated region
        $region97: #{forward.1} parent=71 // pred_check
          %p716 = pneg %p237
        $region98: #{forward.1} parent=71 // pred_check_branch
          %718 = sbr.rel (%p716) target = $region100
        $region99: #{forward.1} parent=71 // pred_region
          %719 = dma.done %s712, 1024
        $region100: #{forward.1} parent=71 // pred_fallthru
          _
        %s720 = sand.u32 %s50, 1
        %s721 = scalar_lea.sflag [#allocation20], %s720
        %s722 = sand.u32 %s252, 1
        %s723 = smul.addr %s722, 32
        %s724 = scalar_lea.vmem [#allocation19], %s723
        // Predicated region
        $region101: #{forward.1} parent=71 // pred_check
          %p725 = pneg %p265
        $region102: #{forward.1} parent=71 // pred_check_branch
          %727 = sbr.rel (%p725) target = $region104
        $region103: #{forward.1} parent=71 // pred_region
          %728 = dma.done %s721, 512
        $region104: #{forward.1} parent=71 // pred_fallthru
          _
        %s729 = sand.u32 %s50, 1
        %s730 = scalar_lea.sflag [#allocation20], %s729
        %s731 = sand.u32 %s280, 1
        %s732 = smul.addr %s731, 768
        %s733 = scalar_lea.vmem [#allocation21], %s732
        // Predicated region
        $region105: #{forward.1} parent=71 // pred_check
          %p734 = pneg %p293
        $region106: #{forward.1} parent=71 // pred_check_branch
          %736 = sbr.rel (%p734) target = $region108
        $region107: #{forward.1} parent=71 // pred_region
          %737 = dma.done %s730, 12288
        $region108: #{forward.1} parent=71 // pred_fallthru
          _
        %s738 = sand.u32 %s50, 1
        %s739 = scalar_lea.sflag [#allocation23], %s738
        %s740 = sand.u32 %s308, 1
        %s741 = smul.addr %s740, 4
        %s742 = scalar_lea.vmem [#allocation22], %s741
        // Predicated region
        $region109: #{forward.1} parent=71 // pred_check
          %p743 = pneg %p321
        $region110: #{forward.1} parent=71 // pred_check_branch
          %745 = sbr.rel (%p743) target = $region112
        $region111: #{forward.1} parent=71 // pred_region
          %746 = dma.done %s739, 64
        $region112: #{forward.1} parent=71 // pred_fallthru
          _
        // Predicated region
        $region113: #{forward.1} parent=71 // pred_check
          %p747 = pneg %p342
        $region114: #{forward.1} parent=71 // pred_check_branch
          %749 = sbr.rel (%p747) target = $region116
        $region115: #{forward.1} parent=71 // pred_region
          %750 = dma.done [#allocation9], 64
        $region116: #{forward.1} parent=71 // pred_fallthru
          _
        // Predicated region
        $region117: #{forward.1} parent=71 // pred_check
          %p751 = pneg %p363
        $region118: #{forward.1} parent=71 // pred_check_branch
          %753 = sbr.rel (%p751) target = $region120
        $region119: #{forward.1} parent=71 // pred_region
          %754 = dma.done [#allocation23], 4096
        $region120: #{forward.1} parent=71 // pred_fallthru
          _
        // Predicated region
        $region121: #{forward.1} parent=71 // pred_check
          %p755 = pneg %p384
        $region122: #{forward.1} parent=71 // pred_check_branch
          %757 = sbr.rel (%p755) target = $region124
        $region123: #{forward.1} parent=71 // pred_region
          %758 = dma.done [#allocation27], 64
        $region124: #{forward.1} parent=71 // pred_fallthru
          _
        %759 = sfence
        %s760 = sand.u32 %s70, 1
        %s761 = scalar_lea.sflag [#allocation7], %s760
        %s762 = sand.u32 %s70, 1
        %s763 = smul.addr %s762, 16
        %s764 = scalar_lea.vmem [#allocation6], %s763
        %p765 = pneg %p83
        %p766 = pneg %p80
        %p767 = pneg %p104
        %p768 = pneg %p101
        %p769 = pneg %p125
        %p770 = pneg %p122
        %s771 = sand.u32 %s50, 1
        %s772 = scalar_lea.sflag [#allocation14], %s771
        %s773 = sand.u32 %s140, 1
        %s774 = smul.addr %s773, 768
        %s775 = scalar_lea.vmem [#allocation13], %s774
        %p776 = pneg %p153
        %p777 = pneg %p150
        %s778 = sand.u32 %s50, 1
        %s779 = scalar_lea.sflag [#allocation14], %s778
        %s780 = sand.u32 %s168, 1
        %s781 = smul.addr %s780, 64
        %s782 = scalar_lea.vmem [#allocation15], %s781
        %p783 = pneg %p181
        %p784 = pneg %p178
        %s785 = sand.u32 %s50, 1
        %s786 = scalar_lea.sflag [#allocation17], %s785
        %s787 = sand.u32 %s196, 1
        %s788 = smul.addr %s787, 1536
        %s789 = scalar_lea.vmem [#allocation16], %s788
        %p790 = pneg %p209
        %p791 = pneg %p206
        %s792 = sand.u32 %s50, 1
        %s793 = scalar_lea.sflag [#allocation17], %s792
        %s794 = sand.u32 %s224, 1
        %s795 = smul.addr %s794, 64
        %s796 = scalar_lea.vmem [#allocation18], %s795
        %p797 = pneg %p237
        %p798 = pneg %p234
        %s799 = sand.u32 %s50, 1
        %s800 = scalar_lea.sflag [#allocation20], %s799
        %s801 = sand.u32 %s252, 1
        %s802 = smul.addr %s801, 32
        %s803 = scalar_lea.vmem [#allocation19], %s802
        %p804 = pneg %p265
        %p805 = pneg %p262
        %s806 = sand.u32 %s50, 1
        %s807 = scalar_lea.sflag [#allocation20], %s806
        %s808 = sand.u32 %s280, 1
        %s809 = smul.addr %s808, 768
        %s810 = scalar_lea.vmem [#allocation21], %s809
        %p811 = pneg %p293
        %p812 = pneg %p290
        %s813 = sand.u32 %s50, 1
        %s814 = scalar_lea.sflag [#allocation23], %s813
        %s815 = sand.u32 %s308, 1
        %s816 = smul.addr %s815, 4
        %s817 = scalar_lea.vmem [#allocation22], %s816
        %p818 = pneg %p321
        %p819 = pneg %p318
        %p820 = pneg %p342
        %p821 = pneg %p339
        %p822 = pneg %p363
        %p823 = pneg %p360
        %p824 = pneg %p384
        %p825 = pneg %p381
        %p826 = pneg %p410
        %p827 = pneg %p407
        %s828 = sand.u32 %s397, 1
        %s829 = scalar_lea.sflag [#allocation8], %s828
        %s830 = sand.u32 %s397, 1
        %s831 = smul.addr %s830, 16
        %s832 = scalar_lea.vmem [#allocation28], %s831
        %s833 = smul.u32 2, %s54
        %s834 = sld [smem:[#allocation5 + %s55]]
        %s835 = sld [smem:[#allocation5 + %s55]]
        %s836 = sld [smem:[#allocation5 + %s55]]
        %s837 = sld [smem:[#allocation5 + %s55]]
        %s838 = sld [smem:[#allocation5 + %s55]]
        %s839 = sld [smem:[#allocation5 + %s55]]
        %s840 = sld [smem:[#allocation5 + %s55]]
        %s841 = smul.u32 2, %s54
        %s842 = sld [smem:[#allocation5 + %s55]]
        %v843 = vld [vmem:[%s671] sm:$0xff]
        %v844 = vld [vmem:[%s671 + $0x8] sm:$0xff]
        %v845 = vld [vmem:[#allocation10] sm:$0xff]
        %v846 = vld [vmem:[#allocation10 + $0x8] sm:$0xff]
        %v847 = vld [vmem:[#allocation12] sm:$0xff]
        %v848 = vld [vmem:[#allocation12 + $0x8] sm:$0xff]
        %s849 = scalar_lea.vmem [#allocation12], 16
        %v850 = vld [vmem:[%s849] sm:$0xff]
        %v851 = vld [vmem:[%s849 + $0x8] sm:$0xff]
        %s852 = scalar_lea.vmem [#allocation12], 32
        %v853 = vld [vmem:[%s852] sm:$0xff]
        %v854 = vld [vmem:[%s852 + $0x8] sm:$0xff]
        %s855 = scalar_lea.vmem [#allocation12], 48
        %v856 = vld [vmem:[%s855] sm:$0xff]
        %v857 = vld [vmem:[%s855 + $0x8] sm:$0xff]
        %p858 = scmp.eq.s32.totalorder %s55, 0
        // Predicated region
        $region125: #{forward.1} parent=71 // pred_check
          %p859 = pneg %p858
        $region126: #{forward.1} parent=71 // pred_check_branch
          %861 = sbr.rel (%p859) target = $region128
        $region127: #{forward.1} parent=71 // pred_region
          %862 = vst [vmem:[#allocation2] sm:$0xff] %v843
          %863 = vst [vmem:[#allocation2 + $0x8] sm:$0xff] %v844
          %864 = vst [vmem:[#allocation3] sm:$0xff] %v843
          %865 = vst [vmem:[#allocation3 + $0x8] sm:$0xff] %v844
        $region128: #{forward.1} parent=71 // pred_fallthru
          _
        %p866 = scmp.ne.s32.totalorder %s55, 7
        // Predicated region
        $region129: #{forward.1} parent=71 // pred_check
          %p867 = pneg %p866
        $region130: #{forward.1} parent=71 // pred_check_branch
          %869 = sbr.rel (%p867) target = $region132
        $region131: #{forward.1} parent=71 // pred_region
          %p870 = scmp.eq.s32.totalorder %s55, 6
          %v871 = vld [vmem:[#allocation3] sm:$0xff]
          %v872 = vld [vmem:[#allocation3 + $0x8] sm:$0xff]
          %v873 = vld [vmem:[#allocation2] sm:$0xff]
          %v874 = vld [vmem:[#allocation2 + $0x8] sm:$0xff]
          %s875 = scalar_select %p870, 1, 0
          %v876 = vstv %s875
          %vm877 = vcmp.eq.s32.totalorder %v876, 1
          %v878 = vsel %vm877, %v871, %v873
          %v879 = vsel %vm877, %v872, %v874
          %s880 = smul.u32 %s842, 128
          %s881 = sld [smem:[#allocation24 + %s880]]
          %s882 = sadd.s32 %s880, 1
          %s883 = sld [smem:[#allocation24 + %s882]]
          %s884 = sadd.s32 %s880, 2
          %s885 = sld [smem:[#allocation24 + %s884]]
          %s886 = sadd.s32 %s880, 3
          %s887 = sld [smem:[#allocation24 + %s886]]
          %s888 = sadd.s32 %s880, 4
          %s889 = sld [smem:[#allocation24 + %s888]]
          %s890 = sadd.s32 %s880, 5
          %s891 = sld [smem:[#allocation24 + %s890]]
          %s892 = sadd.s32 %s880, 6
          %s893 = sld [smem:[#allocation24 + %s892]]
          %s894 = sadd.s32 %s880, 7
          %s895 = sld [smem:[#allocation24 + %s894]]
          %v896 = vld [vmem:[%s688] sm:$0xff]
          %v897 = vld [vmem:[%s688 + $0x8] sm:$0xff]
          %v898 = vld [vmem:[%s688 + $0x10] sm:$0xff]
          %v899 = vld [vmem:[%s688 + $0x18] sm:$0xff]
          %v900 = vld [vmem:[%s688 + $0x20] sm:$0xff]
          %v901 = vld [vmem:[%s688 + $0x28] sm:$0xff]
          %v902 = vld [vmem:[%s688 + $0x30] sm:$0xff]
          %v903 = vld [vmem:[%s688 + $0x38] sm:$0xff]
          %v904 = vld [vmem:[%s688 + $0x40] sm:$0xff]
          %v905 = vld [vmem:[%s688 + $0x48] sm:$0xff]
          %v906 = vld [vmem:[%s688 + $0x50] sm:$0xff]
          %v907 = vld [vmem:[%s688 + $0x58] sm:$0xff]
          %v908 = vld [vmem:[%s688 + $0x60] sm:$0xff]
          %v909 = vld [vmem:[%s688 + $0x68] sm:$0xff]
          %v910 = vld [vmem:[%s688 + $0x70] sm:$0xff]
          %v911 = vld [vmem:[%s688 + $0x78] sm:$0xff]
          %v912 = vld [vmem:[%s697] sm:$0xff]
          %v913 = vld [vmem:[%s697 + $0x8] sm:$0xff]
          %914 = vmatprep.subr.mxu0 0.0
          %915 = vmatpush1.msra.mxu0 %v896
          %916 = vmatprep.subr.mxu0 0.0
          %917 = vmatpush1.msra.mxu0 %v897
          %918 = vmatprep.subr.mxu0 0.0
          %919 = vmatpush1.msra.mxu0 %v898
          %920 = vmatprep.subr.mxu0 0.0
          %921 = vmatpush1.msra.mxu0 %v899
          %922 = vmatprep.subr.mxu0 0.0
          %923 = vmatpush1.msra.mxu0 %v900
          %924 = vmatprep.subr.mxu0 0.0
          %925 = vmatpush1.msra.mxu0 %v901
          %926 = vmatprep.subr.mxu0 0.0
          %927 = vmatpush1.msra.mxu0 %v902
          %928 = vmatprep.subr.mxu0 0.0
          %929 = vmatpush1.msra.mxu0 %v903
          %930 = vmatprep.subr.mxu0 0.0
          %931 = vmatpush1.msra.mxu0 %v904
          %932 = vmatprep.subr.mxu0 0.0
          %933 = vmatpush1.msra.mxu0 %v905
          %934 = vmatprep.subr.mxu0 0.0
          %935 = vmatpush1.msra.mxu0 %v906
          %936 = vmatprep.subr.mxu0 0.0
          %937 = vmatpush1.msra.mxu0 %v907
          %938 = vmatprep.subr.mxu0 0.0
          %939 = vmatpush1.msra.mxu0 %v908
          %940 = vmatprep.subr.mxu0 0.0
          %941 = vmatpush1.msra.mxu0 %v909
          %942 = vmatprep.subr.mxu0 0.0
          %943 = vmatpush1.msra.mxu0 %v910
          %944 = vmatprep.subr.mxu0 0.0
          %945 = vmatpush1.msra.mxu0 %v911
          %946 = vmatprep.subr.mxu0 0.0
          %947 = vmatpush1.msra.mxu0 0.0
          %948 = vmatprep.subr.mxu0 0.0
          %949 = vmatpush1.msra.mxu0 0.0
          %950 = vmatprep.subr.mxu0 0.0
          %951 = vmatpush1.msra.mxu0 0.0
          %952 = vmatprep.subr.mxu0 0.0
          %953 = vmatpush1.msra.mxu0 0.0
          %954 = vmatprep.subr.mxu0 0.0
          %955 = vmatpush1.msra.mxu0 0.0
          %956 = vmatprep.subr.mxu0 0.0
          %957 = vmatpush1.msra.mxu0 0.0
          %958 = vmatprep.subr.mxu0 0.0
          %959 = vmatpush1.msra.mxu0 0.0
          %960 = vmatprep.subr.mxu0 0.0
          %961 = vmatpush1.msra.mxu0 0.0
          %962 = vmatprep.subr.mxu0 0.0
          %963 = vmatpush1.msra.mxu0 0.0
          %964 = vmatprep.subr.mxu0 0.0
          %965 = vmatpush1.msra.mxu0 0.0
          %966 = vmatprep.subr.mxu0 0.0
          %967 = vmatpush1.msra.mxu0 0.0
          %968 = vmatprep.subr.mxu0 0.0
          %969 = vmatpush1.msra.mxu0 0.0
          %970 = vmatprep.subr.mxu0 0.0
          %971 = vmatpush1.msra.mxu0 0.0
          %972 = vmatprep.subr.mxu0 0.0
          %973 = vmatpush1.msra.mxu0 0.0
          %974 = vmatprep.subr.mxu0 0.0
          %975 = vmatpush1.msra.mxu0 0.0
          %976 = vmatprep.subr.mxu0 0.0
          %977 = vmatpush1.msra.mxu0 0.0
          %978 = vmatprep.mubr.f32.mxu0 0.0
          %979 = vmatmul.mubr.f32.gmra.mrb[0].mxu0 %v878
          %v980 = vpop.f32.mrb[0].mxu0
          %v981 = vadd.f32 %v912, %v980
          %v982 = vpop.f32.mrb[0].mxu0
          %983 = vmatprep.mubr.f32.mxu0 0.0
          %984 = vmatmul.mubr.f32.gmra.mrb[0].mxu0 %v879
          %v985 = vpop.f32.mrb[0].mxu0
          %v986 = vadd.f32 %v913, %v985
          %v987 = vpop.f32.mrb[0].mxu0
          %988 = vdwg.mxu0
          %v989 = vld [vmem:[%s706] sm:$0xff]
          %v990 = vld [vmem:[%s706 + $0x8] sm:$0xff]
          %v991 = vld [vmem:[%s706 + $0x10] sm:$0xff]
          %v992 = vld [vmem:[%s706 + $0x18] sm:$0xff]
          %v993 = vld [vmem:[%s706 + $0x20] sm:$0xff]
          %v994 = vld [vmem:[%s706 + $0x28] sm:$0xff]
          %v995 = vld [vmem:[%s706 + $0x30] sm:$0xff]
          %v996 = vld [vmem:[%s706 + $0x38] sm:$0xff]
          %v997 = vld [vmem:[%s706 + $0x40] sm:$0xff]
          %v998 = vld [vmem:[%s706 + $0x48] sm:$0xff]
          %v999 = vld [vmem:[%s706 + $0x50] sm:$0xff]
          %v1000 = vld [vmem:[%s706 + $0x58] sm:$0xff]
          %v1001 = vld [vmem:[%s706 + $0x60] sm:$0xff]
          %v1002 = vld [vmem:[%s706 + $0x68] sm:$0xff]
          %v1003 = vld [vmem:[%s706 + $0x70] sm:$0xff]
          %v1004 = vld [vmem:[%s706 + $0x78] sm:$0xff]
          %s1005 = scalar_lea.vmem %s706, 128 [#allocation16]
          %v1006 = vld [vmem:[%s1005] sm:$0xff]
          %v1007 = vld [vmem:[%s1005 + $0x8] sm:$0xff]
          %v1008 = vld [vmem:[%s1005 + $0x10] sm:$0xff]
          %v1009 = vld [vmem:[%s1005 + $0x18] sm:$0xff]
          %v1010 = vld [vmem:[%s1005 + $0x20] sm:$0xff]
          %v1011 = vld [vmem:[%s1005 + $0x28] sm:$0xff]
          %v1012 = vld [vmem:[%s1005 + $0x30] sm:$0xff]
          %v1013 = vld [vmem:[%s1005 + $0x38] sm:$0xff]
          %v1014 = vld [vmem:[%s1005 + $0x40] sm:$0xff]
          %v1015 = vld [vmem:[%s1005 + $0x48] sm:$0xff]
          %v1016 = vld [vmem:[%s1005 + $0x50] sm:$0xff]
          %v1017 = vld [vmem:[%s1005 + $0x58] sm:$0xff]
          %v1018 = vld [vmem:[%s1005 + $0x60] sm:$0xff]
          %v1019 = vld [vmem:[%s1005 + $0x68] sm:$0xff]
          %v1020 = vld [vmem:[%s1005 + $0x70] sm:$0xff]
          %v1021 = vld [vmem:[%s1005 + $0x78] sm:$0xff]
          %s1022 = scalar_lea.vmem %s706, 256 [#allocation16]
          %v1023 = vld [vmem:[%s1022] sm:$0xff]
          %v1024 = vld [vmem:[%s1022 + $0x8] sm:$0xff]
          %v1025 = vld [vmem:[%s1022 + $0x10] sm:$0xff]
          %v1026 = vld [vmem:[%s1022 + $0x18] sm:$0xff]
          %v1027 = vld [vmem:[%s1022 + $0x20] sm:$0xff]
          %v1028 = vld [vmem:[%s1022 + $0x28] sm:$0xff]
          %v1029 = vld [vmem:[%s1022 + $0x30] sm:$0xff]
          %v1030 = vld [vmem:[%s1022 + $0x38] sm:$0xff]
          %v1031 = vld [vmem:[%s1022 + $0x40] sm:$0xff]
          %v1032 = vld [vmem:[%s1022 + $0x48] sm:$0xff]
          %v1033 = vld [vmem:[%s1022 + $0x50] sm:$0xff]
          %v1034 = vld [vmem:[%s1022 + $0x58] sm:$0xff]
          %v1035 = vld [vmem:[%s1022 + $0x60] sm:$0xff]
          %v1036 = vld [vmem:[%s1022 + $0x68] sm:$0xff]
          %v1037 = vld [vmem:[%s1022 + $0x70] sm:$0xff]
          %v1038 = vld [vmem:[%s1022 + $0x78] sm:$0xff]
          %v1040 = vrot.slane %v986, 7
          %vm1043 = vcmask 1040384
          %v1044 = vrot.slane %v981, 7
          %v1045 = vsel %vm1043, %v1044, %v1040
          %v1048 = vsel %vm1043, %v1040, %v1044
          %v1049 = vmul.f32 %v1048, %v847
          %v1050 = vmul.f32 %v1045, %v848
          %1051 = vmatprep.subr.mxu0 0.0
          %1052 = vmatpush1.msra.mxu0 %v989
          %1053 = vmatprep.subr.mxu0 0.0
          %1054 = vmatpush1.msra.mxu0 %v990
          %1055 = vmatprep.subr.mxu0 0.0
          %1056 = vmatpush1.msra.mxu0 %v991
          %1057 = vmatprep.subr.mxu0 0.0
          %1058 = vmatpush1.msra.mxu0 %v992
          %1059 = vmatprep.subr.mxu0 0.0
          %1060 = vmatpush1.msra.mxu0 %v993
          %1061 = vmatprep.subr.mxu0 0.0
          %1062 = vmatpush1.msra.mxu0 %v994
          %1063 = vmatprep.subr.mxu0 0.0
          %1064 = vmatpush1.msra.mxu0 %v995
          %1065 = vmatprep.subr.mxu0 0.0
          %1066 = vmatpush1.msra.mxu0 %v996
          %1067 = vmatprep.subr.mxu0 0.0
          %1068 = vmatpush1.msra.mxu0 %v997
          %1069 = vmatprep.subr.mxu0 0.0
          %1070 = vmatpush1.msra.mxu0 %v998
          %1071 = vmatprep.subr.mxu0 0.0
          %1072 = vmatpush1.msra.mxu0 %v999
          %1073 = vmatprep.subr.mxu0 0.0
          %1074 = vmatpush1.msra.mxu0 %v1000
          %1075 = vmatprep.subr.mxu0 0.0
          %1076 = vmatpush1.msra.mxu0 %v1001
          %1077 = vmatprep.subr.mxu0 0.0
          %1078 = vmatpush1.msra.mxu0 %v1002
          %1079 = vmatprep.subr.mxu0 0.0
          %1080 = vmatpush1.msra.mxu0 %v1003
          %1081 = vmatprep.subr.mxu0 0.0
          %1082 = vmatpush1.msra.mxu0 %v1004
          %1083 = vmatprep.subr.mxu0 0.0
          %1084 = vmatpush1.msra.mxu0 0.0
          %1085 = vmatprep.subr.mxu0 0.0
          %1086 = vmatpush1.msra.mxu0 0.0
          %1087 = vmatprep.subr.mxu0 0.0
          %1088 = vmatpush1.msra.mxu0 0.0
          %1089 = vmatprep.subr.mxu0 0.0
          %1090 = vmatpush1.msra.mxu0 0.0
          %1091 = vmatprep.subr.mxu0 0.0
          %1092 = vmatpush1.msra.mxu0 0.0
          %1093 = vmatprep.subr.mxu0 0.0
          %1094 = vmatpush1.msra.mxu0 0.0
          %1095 = vmatprep.subr.mxu0 0.0
          %1096 = vmatpush1.msra.mxu0 0.0
          %1097 = vmatprep.subr.mxu0 0.0
          %1098 = vmatpush1.msra.mxu0 0.0
          %1099 = vmatprep.subr.mxu0 0.0
          %1100 = vmatpush1.msra.mxu0 0.0
          %1101 = vmatprep.subr.mxu0 0.0
          %1102 = vmatpush1.msra.mxu0 0.0
          %1103 = vmatprep.subr.mxu0 0.0
          %1104 = vmatpush1.msra.mxu0 0.0
          %1105 = vmatprep.subr.mxu0 0.0
          %1106 = vmatpush1.msra.mxu0 0.0
          %1107 = vmatprep.subr.mxu0 0.0
          %1108 = vmatpush1.msra.mxu0 0.0
          %1109 = vmatprep.subr.mxu0 0.0
          %1110 = vmatpush1.msra.mxu0 0.0
          %1111 = vmatprep.subr.mxu0 0.0
          %1112 = vmatpush1.msra.mxu0 0.0
          %1113 = vmatprep.subr.mxu0 0.0
          %1114 = vmatpush1.msra.mxu0 0.0
          %1115 = vmatprep.mubr.f32.mxu0 0.0
          %1116 = vmatmul.mubr.f32.gmra.mrb[0].mxu0 %v1049
          %v1117 = vpop.f32.mrb[0].mxu0
          %v1118 = vadd.f32 0.0, %v1117
          %v1119 = vpop.f32.mrb[0].mxu0
          %1120 = vmatprep.mubr.f32.mxu0 0.0
          %1121 = vmatmul.mubr.f32.gmra.mrb[0].mxu0 %v1050
          %v1122 = vpop.f32.mrb[0].mxu0
          %v1123 = vadd.f32 0.0, %v1122
          %v1124 = vpop.f32.mrb[0].mxu0
          %1125 = vdwg.mxu0
          %1126 = vmatprep.subr.mxu0 0.0
          %1127 = vmatpush1.msra.mxu0 %v1006
          %1128 = vmatprep.subr.mxu0 0.0
          %1129 = vmatpush1.msra.mxu0 %v1007
          %1130 = vmatprep.subr.mxu0 0.0
          %1131 = vmatpush1.msra.mxu0 %v1008
          %1132 = vmatprep.subr.mxu0 0.0
          %1133 = vmatpush1.msra.mxu0 %v1009
          %1134 = vmatprep.subr.mxu0 0.0
          %1135 = vmatpush1.msra.mxu0 %v1010
          %1136 = vmatprep.subr.mxu0 0.0
          %1137 = vmatpush1.msra.mxu0 %v1011
          %1138 = vmatprep.subr.mxu0 0.0
          %1139 = vmatpush1.msra.mxu0 %v1012
          %1140 = vmatprep.subr.mxu0 0.0
          %1141 = vmatpush1.msra.mxu0 %v1013
          %1142 = vmatprep.subr.mxu0 0.0
          %1143 = vmatpush1.msra.mxu0 %v1014
          %1144 = vmatprep.subr.mxu0 0.0
          %1145 = vmatpush1.msra.mxu0 %v1015
          %1146 = vmatprep.subr.mxu0 0.0
          %1147 = vmatpush1.msra.mxu0 %v1016
          %1148 = vmatprep.subr.mxu0 0.0
          %1149 = vmatpush1.msra.mxu0 %v1017
          %1150 = vmatprep.subr.mxu0 0.0
          %1151 = vmatpush1.msra.mxu0 %v1018
          %1152 = vmatprep.subr.mxu0 0.0
          %1153 = vmatpush1.msra.mxu0 %v1019
          %1154 = vmatprep.subr.mxu0 0.0
          %1155 = vmatpush1.msra.mxu0 %v1020
          %1156 = vmatprep.subr.mxu0 0.0
          %1157 = vmatpush1.msra.mxu0 %v1021
          %1158 = vmatprep.subr.mxu0 0.0
          %1159 = vmatpush1.msra.mxu0 0.0
          %1160 = vmatprep.subr.mxu0 0.0
          %1161 = vmatpush1.msra.mxu0 0.0
          %1162 = vmatprep.subr.mxu0 0.0
          %1163 = vmatpush1.msra.mxu0 0.0
          %1164 = vmatprep.subr.mxu0 0.0
          %1165 = vmatpush1.msra.mxu0 0.0
          %1166 = vmatprep.subr.mxu0 0.0
          %1167 = vmatpush1.msra.mxu0 0.0
          %1168 = vmatprep.subr.mxu0 0.0
          %1169 = vmatpush1.msra.mxu0 0.0
          %1170 = vmatprep.subr.mxu0 0.0
          %1171 = vmatpush1.msra.mxu0 0.0
          %1172 = vmatprep.subr.mxu0 0.0
          %1173 = vmatpush1.msra.mxu0 0.0
          %1174 = vmatprep.subr.mxu0 0.0
          %1175 = vmatpush1.msra.mxu0 0.0
          %1176 = vmatprep.subr.mxu0 0.0
          %1177 = vmatpush1.msra.mxu0 0.0
          %1178 = vmatprep.subr.mxu0 0.0
          %1179 = vmatpush1.msra.mxu0 0.0
          %1180 = vmatprep.subr.mxu0 0.0
          %1181 = vmatpush1.msra.mxu0 0.0
          %1182 = vmatprep.subr.mxu0 0.0
          %1183 = vmatpush1.msra.mxu0 0.0
          %1184 = vmatprep.subr.mxu0 0.0
          %1185 = vmatpush1.msra.mxu0 0.0
          %1186 = vmatprep.subr.mxu0 0.0
          %1187 = vmatpush1.msra.mxu0 0.0
          %1188 = vmatprep.subr.mxu0 0.0
          %1189 = vmatpush1.msra.mxu0 0.0
          %1190 = vmatprep.mubr.f32.mxu0 0.0
          %1191 = vmatmul.mubr.f32.gmra.mrb[0].mxu0 %v981
          %v1192 = vpop.f32.mrb[0].mxu0
          %v1193 = vadd.f32 %v1118, %v1192
          %v1194 = vpop.f32.mrb[0].mxu0
          %1195 = vmatprep.mubr.f32.mxu0 0.0
          %1196 = vmatmul.mubr.f32.gmra.mrb[0].mxu0 %v986
          %v1197 = vpop.f32.mrb[0].mxu0
          %v1198 = vadd.f32 %v1123, %v1197
          %v1199 = vpop.f32.mrb[0].mxu0
          %1200 = vdwg.mxu0
          %vm1201 = vcmask 1046528
          %v1202 = vrot.slane %v981, 1
          %v1203 = vrot.slane %v986, 1
          %v1204 = vsel %vm1201, %v1202, %v1203
          %v1208 = vsel %vm1201, %v1203, %v1202
          %v1209 = vmul.f32 %v1204, %v850
          %v1210 = vmul.f32 %v1208, %v851
          %1211 = vmatprep.subr.mxu0 0.0
          %1212 = vmatpush1.msra.mxu0 %v1023
          %1213 = vmatprep.subr.mxu0 0.0
          %1214 = vmatpush1.msra.mxu0 %v1024
          %1215 = vmatprep.subr.mxu0 0.0
          %1216 = vmatpush1.msra.mxu0 %v1025
          %1217 = vmatprep.subr.mxu0 0.0
          %1218 = vmatpush1.msra.mxu0 %v1026
          %1219 = vmatprep.subr.mxu0 0.0
          %1220 = vmatpush1.msra.mxu0 %v1027
          %1221 = vmatprep.subr.mxu0 0.0
          %1222 = vmatpush1.msra.mxu0 %v1028
          %1223 = vmatprep.subr.mxu0 0.0
          %1224 = vmatpush1.msra.mxu0 %v1029
          %1225 = vmatprep.subr.mxu0 0.0
          %1226 = vmatpush1.msra.mxu0 %v1030
          %1227 = vmatprep.subr.mxu0 0.0
          %1228 = vmatpush1.msra.mxu0 %v1031
          %1229 = vmatprep.subr.mxu0 0.0
          %1230 = vmatpush1.msra.mxu0 %v1032
          %1231 = vmatprep.subr.mxu0 0.0
          %1232 = vmatpush1.msra.mxu0 %v1033
          %1233 = vmatprep.subr.mxu0 0.0
          %1234 = vmatpush1.msra.mxu0 %v1034
          %1235 = vmatprep.subr.mxu0 0.0
          %1236 = vmatpush1.msra.mxu0 %v1035
          %1237 = vmatprep.subr.mxu0 0.0
          %1238 = vmatpush1.msra.mxu0 %v1036
          %1239 = vmatprep.subr.mxu0 0.0
          %1240 = vmatpush1.msra.mxu0 %v1037
          %1241 = vmatprep.subr.mxu0 0.0
          %1242 = vmatpush1.msra.mxu0 %v1038
          %1243 = vmatprep.subr.mxu0 0.0
          %1244 = vmatpush1.msra.mxu0 0.0
          %1245 = vmatprep.subr.mxu0 0.0
          %1246 = vmatpush1.msra.mxu0 0.0
          %1247 = vmatprep.subr.mxu0 0.0
          %1248 = vmatpush1.msra.mxu0 0.0
          %1249 = vmatprep.subr.mxu0 0.0
          %1250 = vmatpush1.msra.mxu0 0.0
          %1251 = vmatprep.subr.mxu0 0.0
          %1252 = vmatpush1.msra.mxu0 0.0
          %1253 = vmatprep.subr.mxu0 0.0
          %1254 = vmatpush1.msra.mxu0 0.0
          %1255 = vmatprep.subr.mxu0 0.0
          %1256 = vmatpush1.msra.mxu0 0.0
          %1257 = vmatprep.subr.mxu0 0.0
          %1258 = vmatpush1.msra.mxu0 0.0
          %1259 = vmatprep.subr.mxu0 0.0
          %1260 = vmatpush1.msra.mxu0 0.0
          %1261 = vmatprep.subr.mxu0 0.0
          %1262 = vmatpush1.msra.mxu0 0.0
          %1263 = vmatprep.subr.mxu0 0.0
          %1264 = vmatpush1.msra.mxu0 0.0
          %1265 = vmatprep.subr.mxu0 0.0
          %1266 = vmatpush1.msra.mxu0 0.0
          %1267 = vmatprep.subr.mxu0 0.0
          %1268 = vmatpush1.msra.mxu0 0.0
          %1269 = vmatprep.subr.mxu0 0.0
          %1270 = vmatpush1.msra.mxu0 0.0
          %1271 = vmatprep.subr.mxu0 0.0
          %1272 = vmatpush1.msra.mxu0 0.0
          %1273 = vmatprep.subr.mxu0 0.0
          %1274 = vmatpush1.msra.mxu0 0.0
          %1275 = vmatprep.mubr.f32.mxu0 0.0
          %1276 = vmatmul.mubr.f32.gmra.mrb[0].mxu0 %v1209
          %v1277 = vpop.f32.mrb[0].mxu0
          %v1278 = vadd.f32 0.0, %v1277
          %v1279 = vpop.f32.mrb[0].mxu0
          %1280 = vmatprep.mubr.f32.mxu0 0.0
          %1281 = vmatmul.mubr.f32.gmra.mrb[0].mxu0 %v1210
          %v1282 = vpop.f32.mrb[0].mxu0
          %v1283 = vadd.f32 0.0, %v1282
          %v1284 = vpop.f32.mrb[0].mxu0
          %1285 = vdwg.mxu0
          %v1286 = vadd.f32 %v1193, %v1278
          %v1287 = vadd.f32 %v1198, %v1283
          %v1288 = vld [vmem:[%s715] sm:$0xff]
          %v1289 = vld [vmem:[%s715 + $0x8] sm:$0xff]
          %v1290 = vadd.f32 %v1286, %v1288
          %v1291 = vadd.f32 %v1287, %v1289
          %v1292 = vld [vmem:[%s724] sm:$0xff]
          %v1293 = vld [vmem:[%s724 + $0x8] sm:$0xff]
          %vm1294 = vcmp.ge.f32.partialorder %v1290, 0.0
          %vm1295 = vcmp.ge.f32.partialorder %v1291, 0.0
          %v1296 = vmul.f32 %v1290, %v1292
          %v1297 = vmul.f32 %v1291, %v1293
          %v1298 = vsel %vm1294, %v1290, %v1296
          %v1299 = vsel %vm1295, %v1291, %v1297
          %s1300 = scalar_lea.vmem %s688, 128 [#allocation13]
          %v1301 = vld [vmem:[%s1300] sm:$0xff]
          %v1302 = vld [vmem:[%s1300 + $0x8] sm:$0xff]
          %v1303 = vld [vmem:[%s1300 + $0x10] sm:$0xff]
          %v1304 = vld [vmem:[%s1300 + $0x18] sm:$0xff]
          %v1305 = vld [vmem:[%s1300 + $0x20] sm:$0xff]
          %v1306 = vld [vmem:[%s1300 + $0x28] sm:$0xff]
          %v1307 = vld [vmem:[%s1300 + $0x30] sm:$0xff]
          %v1308 = vld [vmem:[%s1300 + $0x38] sm:$0xff]
          %v1309 = vld [vmem:[%s1300 + $0x40] sm:$0xff]
          %v1310 = vld [vmem:[%s1300 + $0x48] sm:$0xff]
          %v1311 = vld [vmem:[%s1300 + $0x50] sm:$0xff]
          %v1312 = vld [vmem:[%s1300 + $0x58] sm:$0xff]
          %v1313 = vld [vmem:[%s1300 + $0x60] sm:$0xff]
          %v1314 = vld [vmem:[%s1300 + $0x68] sm:$0xff]
          %v1315 = vld [vmem:[%s1300 + $0x70] sm:$0xff]
          %v1316 = vld [vmem:[%s1300 + $0x78] sm:$0xff]
          %s1317 = scalar_lea.vmem %s697, 16 [#allocation15]
          %v1318 = vld [vmem:[%s1317] sm:$0xff]
          %v1319 = vld [vmem:[%s1317 + $0x8] sm:$0xff]
          %1320 = vmatprep.subr.mxu0 0.0
          %1321 = vmatpush1.msra.mxu0 %v1301
          %1322 = vmatprep.subr.mxu0 0.0
          %1323 = vmatpush1.msra.mxu0 %v1302
          %1324 = vmatprep.subr.mxu0 0.0
          %1325 = vmatpush1.msra.mxu0 %v1303
          %1326 = vmatprep.subr.mxu0 0.0
          %1327 = vmatpush1.msra.mxu0 %v1304
          %1328 = vmatprep.subr.mxu0 0.0
          %1329 = vmatpush1.msra.mxu0 %v1305
          %1330 = vmatprep.subr.mxu0 0.0
          %1331 = vmatpush1.msra.mxu0 %v1306
          %1332 = vmatprep.subr.mxu0 0.0
          %1333 = vmatpush1.msra.mxu0 %v1307
          %1334 = vmatprep.subr.mxu0 0.0
          %1335 = vmatpush1.msra.mxu0 %v1308
          %1336 = vmatprep.subr.mxu0 0.0
          %1337 = vmatpush1.msra.mxu0 %v1309
          %1338 = vmatprep.subr.mxu0 0.0
          %1339 = vmatpush1.msra.mxu0 %v1310
          %1340 = vmatprep.subr.mxu0 0.0
          %1341 = vmatpush1.msra.mxu0 %v1311
          %1342 = vmatprep.subr.mxu0 0.0
          %1343 = vmatpush1.msra.mxu0 %v1312
          %1344 = vmatprep.subr.mxu0 0.0
          %1345 = vmatpush1.msra.mxu0 %v1313
          %1346 = vmatprep.subr.mxu0 0.0
          %1347 = vmatpush1.msra.mxu0 %v1314
          %1348 = vmatprep.subr.mxu0 0.0
          %1349 = vmatpush1.msra.mxu0 %v1315
          %1350 = vmatprep.subr.mxu0 0.0
          %1351 = vmatpush1.msra.mxu0 %v1316
          %1352 = vmatprep.subr.mxu0 0.0
          %1353 = vmatpush1.msra.mxu0 0.0
          %1354 = vmatprep.subr.mxu0 0.0
          %1355 = vmatpush1.msra.mxu0 0.0
          %1356 = vmatprep.subr.mxu0 0.0
          %1357 = vmatpush1.msra.mxu0 0.0
          %1358 = vmatprep.subr.mxu0 0.0
          %1359 = vmatpush1.msra.mxu0 0.0
          %1360 = vmatprep.subr.mxu0 0.0
          %1361 = vmatpush1.msra.mxu0 0.0
          %1362 = vmatprep.subr.mxu0 0.0
          %1363 = vmatpush1.msra.mxu0 0.0
          %1364 = vmatprep.subr.mxu0 0.0
          %1365 = vmatpush1.msra.mxu0 0.0
          %1366 = vmatprep.subr.mxu0 0.0
          %1367 = vmatpush1.msra.mxu0 0.0
          %1368 = vmatprep.subr.mxu0 0.0
          %1369 = vmatpush1.msra.mxu0 0.0
          %1370 = vmatprep.subr.mxu0 0.0
          %1371 = vmatpush1.msra.mxu0 0.0
          %1372 = vmatprep.subr.mxu0 0.0
          %1373 = vmatpush1.msra.mxu0 0.0
          %1374 = vmatprep.subr.mxu0 0.0
          %1375 = vmatpush1.msra.mxu0 0.0
          %1376 = vmatprep.subr.mxu0 0.0
          %1377 = vmatpush1.msra.mxu0 0.0
          %1378 = vmatprep.subr.mxu0 0.0
          %1379 = vmatpush1.msra.mxu0 0.0
          %1380 = vmatprep.subr.mxu0 0.0
          %1381 = vmatpush1.msra.mxu0 0.0
          %1382 = vmatprep.subr.mxu0 0.0
          %1383 = vmatpush1.msra.mxu0 0.0
          %1384 = vmatprep.mubr.f32.mxu0 0.0
          %1385 = vmatmul.mubr.f32.gmra.mrb[0].mxu0 %v1298
          %v1386 = vpop.f32.mrb[0].mxu0
          %v1387 = vadd.f32 %v1318, %v1386
          %v1388 = vpop.f32.mrb[0].mxu0
          %1389 = vmatprep.mubr.f32.mxu0 0.0
          %1390 = vmatmul.mubr.f32.gmra.mrb[0].mxu0 %v1299
          %v1391 = vpop.f32.mrb[0].mxu0
          %v1392 = vadd.f32 %v1319, %v1391
          %v1393 = vpop.f32.mrb[0].mxu0
          %1394 = vdwg.mxu0
          %s1395 = scalar_lea.vmem %s706, 384 [#allocation16]
          %v1396 = vld [vmem:[%s1395] sm:$0xff]
          %v1397 = vld [vmem:[%s1395 + $0x8] sm:$0xff]
          %v1398 = vld [vmem:[%s1395 + $0x10] sm:$0xff]
          %v1399 = vld [vmem:[%s1395 + $0x18] sm:$0xff]
          %v1400 = vld [vmem:[%s1395 + $0x20] sm:$0xff]
          %v1401 = vld [vmem:[%s1395 + $0x28] sm:$0xff]
          %v1402 = vld [vmem:[%s1395 + $0x30] sm:$0xff]
          %v1403 = vld [vmem:[%s1395 + $0x38] sm:$0xff]
          %v1404 = vld [vmem:[%s1395 + $0x40] sm:$0xff]
          %v1405 = vld [vmem:[%s1395 + $0x48] sm:$0xff]
          %v1406 = vld [vmem:[%s1395 + $0x50] sm:$0xff]
          %v1407 = vld [vmem:[%s1395 + $0x58] sm:$0xff]
          %v1408 = vld [vmem:[%s1395 + $0x60] sm:$0xff]
          %v1409 = vld [vmem:[%s1395 + $0x68] sm:$0xff]
          %v1410 = vld [vmem:[%s1395 + $0x70] sm:$0xff]
          %v1411 = vld [vmem:[%s1395 + $0x78] sm:$0xff]
          %s1412 = scalar_lea.vmem %s706, 512 [#allocation16]
          %v1413 = vld [vmem:[%s1412] sm:$0xff]
          %v1414 = vld [vmem:[%s1412 + $0x8] sm:$0xff]
          %v1415 = vld [vmem:[%s1412 + $0x10] sm:$0xff]
          %v1416 = vld [vmem:[%s1412 + $0x18] sm:$0xff]
          %v1417 = vld [vmem:[%s1412 + $0x20] sm:$0xff]
          %v1418 = vld [vmem:[%s1412 + $0x28] sm:$0xff]
          %v1419 = vld [vmem:[%s1412 + $0x30] sm:$0xff]
          %v1420 = vld [vmem:[%s1412 + $0x38] sm:$0xff]
          %v1421 = vld [vmem:[%s1412 + $0x40] sm:$0xff]
          %v1422 = vld [vmem:[%s1412 + $0x48] sm:$0xff]
          %v1423 = vld [vmem:[%s1412 + $0x50] sm:$0xff]
          %v1424 = vld [vmem:[%s1412 + $0x58] sm:$0xff]
          %v1425 = vld [vmem:[%s1412 + $0x60] sm:$0xff]
          %v1426 = vld [vmem:[%s1412 + $0x68] sm:$0xff]
          %v1427 = vld [vmem:[%s1412 + $0x70] sm:$0xff]
          %v1428 = vld [vmem:[%s1412 + $0x78] sm:$0xff]
          %s1429 = scalar_lea.vmem %s706, 640 [#allocation16]
          %v1430 = vld [vmem:[%s1429] sm:$0xff]
          %v1431 = vld [vmem:[%s1429 + $0x8] sm:$0xff]
          %v1432 = vld [vmem:[%s1429 + $0x10] sm:$0xff]
          %v1433 = vld [vmem:[%s1429 + $0x18] sm:$0xff]
          %v1434 = vld [vmem:[%s1429 + $0x20] sm:$0xff]
          %v1435 = vld [vmem:[%s1429 + $0x28] sm:$0xff]
          %v1436 = vld [vmem:[%s1429 + $0x30] sm:$0xff]
          %v1437 = vld [vmem:[%s1429 + $0x38] sm:$0xff]
          %v1438 = vld [vmem:[%s1429 + $0x40] sm:$0xff]
          %v1439 = vld [vmem:[%s1429 + $0x48] sm:$0xff]
          %v1440 = vld [vmem:[%s1429 + $0x50] sm:$0xff]
          %v1441 = vld [vmem:[%s1429 + $0x58] sm:$0xff]
          %v1442 = vld [vmem:[%s1429 + $0x60] sm:$0xff]
          %v1443 = vld [vmem:[%s1429 + $0x68] sm:$0xff]
          %v1444 = vld [vmem:[%s1429 + $0x70] sm:$0xff]
          %v1445 = vld [vmem:[%s1429 + $0x78] sm:$0xff]
          %v1447 = vrot.slane %v1392, 7
          %v1450 = vrot.slane %v1387, 7
          %v1451 = vsel %vm1043, %v1450, %v1447
          %v1454 = vsel %vm1043, %v1447, %v1450
          %v1455 = vmul.f32 %v1454, %v847
          %v1456 = vmul.f32 %v1451, %v848
          %1457 = vmatprep.subr.mxu0 0.0
          %1458 = vmatpush1.msra.mxu0 %v1396
          %1459 = vmatprep.subr.mxu0 0.0
          %1460 = vmatpush1.msra.mxu0 %v1397
          %1461 = vmatprep.subr.mxu0 0.0
          %1462 = vmatpush1.msra.mxu0 %v1398
          %1463 = vmatprep.subr.mxu0 0.0
          %1464 = vmatpush1.msra.mxu0 %v1399
          %1465 = vmatprep.subr.mxu0 0.0
          %1466 = vmatpush1.msra.mxu0 %v1400
          %1467 = vmatprep.subr.mxu0 0.0
          %1468 = vmatpush1.msra.mxu0 %v1401
          %1469 = vmatprep.subr.mxu0 0.0
          %1470 = vmatpush1.msra.mxu0 %v1402
          %1471 = vmatprep.subr.mxu0 0.0
          %1472 = vmatpush1.msra.mxu0 %v1403
          %1473 = vmatprep.subr.mxu0 0.0
          %1474 = vmatpush1.msra.mxu0 %v1404
          %1475 = vmatprep.subr.mxu0 0.0
          %1476 = vmatpush1.msra.mxu0 %v1405
          %1477 = vmatprep.subr.mxu0 0.0
          %1478 = vmatpush1.msra.mxu0 %v1406
          %1479 = vmatprep.subr.mxu0 0.0
          %1480 = vmatpush1.msra.mxu0 %v1407
          %1481 = vmatprep.subr.mxu0 0.0
          %1482 = vmatpush1.msra.mxu0 %v1408
          %1483 = vmatprep.subr.mxu0 0.0
          %1484 = vmatpush1.msra.mxu0 %v1409
          %1485 = vmatprep.subr.mxu0 0.0
          %1486 = vmatpush1.msra.mxu0 %v1410
          %1487 = vmatprep.subr.mxu0 0.0
          %1488 = vmatpush1.msra.mxu0 %v1411
          %1489 = vmatprep.subr.mxu0 0.0
          %1490 = vmatpush1.msra.mxu0 0.0
          %1491 = vmatprep.subr.mxu0 0.0
          %1492 = vmatpush1.msra.mxu0 0.0
          %1493 = vmatprep.subr.mxu0 0.0
          %1494 = vmatpush1.msra.mxu0 0.0
          %1495 = vmatprep.subr.mxu0 0.0
          %1496 = vmatpush1.msra.mxu0 0.0
          %1497 = vmatprep.subr.mxu0 0.0
          %1498 = vmatpush1.msra.mxu0 0.0
          %1499 = vmatprep.subr.mxu0 0.0
          %1500 = vmatpush1.msra.mxu0 0.0
          %1501 = vmatprep.subr.mxu0 0.0
          %1502 = vmatpush1.msra.mxu0 0.0
          %1503 = vmatprep.subr.mxu0 0.0
          %1504 = vmatpush1.msra.mxu0 0.0
          %1505 = vmatprep.subr.mxu0 0.0
          %1506 = vmatpush1.msra.mxu0 0.0
          %1507 = vmatprep.subr.mxu0 0.0
          %1508 = vmatpush1.msra.mxu0 0.0
          %1509 = vmatprep.subr.mxu0 0.0
          %1510 = vmatpush1.msra.mxu0 0.0
          %1511 = vmatprep.subr.mxu0 0.0
          %1512 = vmatpush1.msra.mxu0 0.0
          %1513 = vmatprep.subr.mxu0 0.0
          %1514 = vmatpush1.msra.mxu0 0.0
          %1515 = vmatprep.subr.mxu0 0.0
          %1516 = vmatpush1.msra.mxu0 0.0
          %1517 = vmatprep.subr.mxu0 0.0
          %1518 = vmatpush1.msra.mxu0 0.0
          %1519 = vmatprep.subr.mxu0 0.0
          %1520 = vmatpush1.msra.mxu0 0.0
          %1521 = vmatprep.mubr.f32.mxu0 0.0
          %1522 = vmatmul.mubr.f32.gmra.mrb[0].mxu0 %v1455
          %v1523 = vpop.f32.mrb[0].mxu0
          %v1524 = vadd.f32 0.0, %v1523
          %v1525 = vpop.f32.mrb[0].mxu0
          %1526 = vmatprep.mubr.f32.mxu0 0.0
          %1527 = vmatmul.mubr.f32.gmra.mrb[0].mxu0 %v1456
          %v1528 = vpop.f32.mrb[0].mxu0
          %v1529 = vadd.f32 0.0, %v1528
          %v1530 = vpop.f32.mrb[0].mxu0
          %1531 = vdwg.mxu0
          %1532 = vmatprep.subr.mxu0 0.0
          %1533 = vmatpush1.msra.mxu0 %v1413
          %1534 = vmatprep.subr.mxu0 0.0
          %1535 = vmatpush1.msra.mxu0 %v1414
          %1536 = vmatprep.subr.mxu0 0.0
          %1537 = vmatpush1.msra.mxu0 %v1415
          %1538 = vmatprep.subr.mxu0 0.0
          %1539 = vmatpush1.msra.mxu0 %v1416
          %1540 = vmatprep.subr.mxu0 0.0
          %1541 = vmatpush1.msra.mxu0 %v1417
          %1542 = vmatprep.subr.mxu0 0.0
          %1543 = vmatpush1.msra.mxu0 %v1418
          %1544 = vmatprep.subr.mxu0 0.0
          %1545 = vmatpush1.msra.mxu0 %v1419
          %1546 = vmatprep.subr.mxu0 0.0
          %1547 = vmatpush1.msra.mxu0 %v1420
          %1548 = vmatprep.subr.mxu0 0.0
          %1549 = vmatpush1.msra.mxu0 %v1421
          %1550 = vmatprep.subr.mxu0 0.0
          %1551 = vmatpush1.msra.mxu0 %v1422
          %1552 = vmatprep.subr.mxu0 0.0
          %1553 = vmatpush1.msra.mxu0 %v1423
          %1554 = vmatprep.subr.mxu0 0.0
          %1555 = vmatpush1.msra.mxu0 %v1424
          %1556 = vmatprep.subr.mxu0 0.0
          %1557 = vmatpush1.msra.mxu0 %v1425
          %1558 = vmatprep.subr.mxu0 0.0
          %1559 = vmatpush1.msra.mxu0 %v1426
          %1560 = vmatprep.subr.mxu0 0.0
          %1561 = vmatpush1.msra.mxu0 %v1427
          %1562 = vmatprep.subr.mxu0 0.0
          %1563 = vmatpush1.msra.mxu0 %v1428
          %1564 = vmatprep.subr.mxu0 0.0
          %1565 = vmatpush1.msra.mxu0 0.0
          %1566 = vmatprep.subr.mxu0 0.0
          %1567 = vmatpush1.msra.mxu0 0.0
          %1568 = vmatprep.subr.mxu0 0.0
          %1569 = vmatpush1.msra.mxu0 0.0
          %1570 = vmatprep.subr.mxu0 0.0
          %1571 = vmatpush1.msra.mxu0 0.0
          %1572 = vmatprep.subr.mxu0 0.0
          %1573 = vmatpush1.msra.mxu0 0.0
          %1574 = vmatprep.subr.mxu0 0.0
          %1575 = vmatpush1.msra.mxu0 0.0
          %1576 = vmatprep.subr.mxu0 0.0
          %1577 = vmatpush1.msra.mxu0 0.0
          %1578 = vmatprep.subr.mxu0 0.0
          %1579 = vmatpush1.msra.mxu0 0.0
          %1580 = vmatprep.subr.mxu0 0.0
          %1581 = vmatpush1.msra.mxu0 0.0
          %1582 = vmatprep.subr.mxu0 0.0
          %1583 = vmatpush1.msra.mxu0 0.0
          %1584 = vmatprep.subr.mxu0 0.0
          %1585 = vmatpush1.msra.mxu0 0.0
          %1586 = vmatprep.subr.mxu0 0.0
          %1587 = vmatpush1.msra.mxu0 0.0
          %1588 = vmatprep.subr.mxu0 0.0
          %1589 = vmatpush1.msra.mxu0 0.0
          %1590 = vmatprep.subr.mxu0 0.0
          %1591 = vmatpush1.msra.mxu0 0.0
          %1592 = vmatprep.subr.mxu0 0.0
          %1593 = vmatpush1.msra.mxu0 0.0
          %1594 = vmatprep.subr.mxu0 0.0
          %1595 = vmatpush1.msra.mxu0 0.0
          %1596 = vmatprep.mubr.f32.mxu0 0.0
          %1597 = vmatmul.mubr.f32.gmra.mrb[0].mxu0 %v1387
          %v1598 = vpop.f32.mrb[0].mxu0
          %v1599 = vadd.f32 %v1524, %v1598
          %v1600 = vpop.f32.mrb[0].mxu0
          %1601 = vmatprep.mubr.f32.mxu0 0.0
          %1602 = vmatmul.mubr.f32.gmra.mrb[0].mxu0 %v1392
          %v1603 = vpop.f32.mrb[0].mxu0
          %v1604 = vadd.f32 %v1529, %v1603
          %v1605 = vpop.f32.mrb[0].mxu0
          %1606 = vdwg.mxu0
          %v1607 = vrot.slane %v1387, 1
          %v1608 = vrot.slane %v1392, 1
          %v1609 = vsel %vm1201, %v1607, %v1608
          %v1613 = vsel %vm1201, %v1608, %v1607
          %v1614 = vmul.f32 %v1609, %v850
          %v1615 = vmul.f32 %v1613, %v851
          %1616 = vmatprep.subr.mxu0 0.0
          %1617 = vmatpush1.msra.mxu0 %v1430
          %1618 = vmatprep.subr.mxu0 0.0
          %1619 = vmatpush1.msra.mxu0 %v1431
          %1620 = vmatprep.subr.mxu0 0.0
          %1621 = vmatpush1.msra.mxu0 %v1432
          %1622 = vmatprep.subr.mxu0 0.0
          %1623 = vmatpush1.msra.mxu0 %v1433
          %1624 = vmatprep.subr.mxu0 0.0
          %1625 = vmatpush1.msra.mxu0 %v1434
          %1626 = vmatprep.subr.mxu0 0.0
          %1627 = vmatpush1.msra.mxu0 %v1435
          %1628 = vmatprep.subr.mxu0 0.0
          %1629 = vmatpush1.msra.mxu0 %v1436
          %1630 = vmatprep.subr.mxu0 0.0
          %1631 = vmatpush1.msra.mxu0 %v1437
          %1632 = vmatprep.subr.mxu0 0.0
          %1633 = vmatpush1.msra.mxu0 %v1438
          %1634 = vmatprep.subr.mxu0 0.0
          %1635 = vmatpush1.msra.mxu0 %v1439
          %1636 = vmatprep.subr.mxu0 0.0
          %1637 = vmatpush1.msra.mxu0 %v1440
          %1638 = vmatprep.subr.mxu0 0.0
          %1639 = vmatpush1.msra.mxu0 %v1441
          %1640 = vmatprep.subr.mxu0 0.0
          %1641 = vmatpush1.msra.mxu0 %v1442
          %1642 = vmatprep.subr.mxu0 0.0
          %1643 = vmatpush1.msra.mxu0 %v1443
          %1644 = vmatprep.subr.mxu0 0.0
          %1645 = vmatpush1.msra.mxu0 %v1444
          %1646 = vmatprep.subr.mxu0 0.0
          %1647 = vmatpush1.msra.mxu0 %v1445
          %1648 = vmatprep.subr.mxu0 0.0
          %1649 = vmatpush1.msra.mxu0 0.0
          %1650 = vmatprep.subr.mxu0 0.0
          %1651 = vmatpush1.msra.mxu0 0.0
          %1652 = vmatprep.subr.mxu0 0.0
          %1653 = vmatpush1.msra.mxu0 0.0
          %1654 = vmatprep.subr.mxu0 0.0
          %1655 = vmatpush1.msra.mxu0 0.0
          %1656 = vmatprep.subr.mxu0 0.0
          %1657 = vmatpush1.msra.mxu0 0.0
          %1658 = vmatprep.subr.mxu0 0.0
          %1659 = vmatpush1.msra.mxu0 0.0
          %1660 = vmatprep.subr.mxu0 0.0
          %1661 = vmatpush1.msra.mxu0 0.0
          %1662 = vmatprep.subr.mxu0 0.0
          %1663 = vmatpush1.msra.mxu0 0.0
          %1664 = vmatprep.subr.mxu0 0.0
          %1665 = vmatpush1.msra.mxu0 0.0
          %1666 = vmatprep.subr.mxu0 0.0
          %1667 = vmatpush1.msra.mxu0 0.0
          %1668 = vmatprep.subr.mxu0 0.0
          %1669 = vmatpush1.msra.mxu0 0.0
          %1670 = vmatprep.subr.mxu0 0.0
          %1671 = vmatpush1.msra.mxu0 0.0
          %1672 = vmatprep.subr.mxu0 0.0
          %1673 = vmatpush1.msra.mxu0 0.0
          %1674 = vmatprep.subr.mxu0 0.0
          %1675 = vmatpush1.msra.mxu0 0.0
          %1676 = vmatprep.subr.mxu0 0.0
          %1677 = vmatpush1.msra.mxu0 0.0
          %1678 = vmatprep.subr.mxu0 0.0
          %1679 = vmatpush1.msra.mxu0 0.0
          %1680 = vmatprep.mubr.f32.mxu0 0.0
          %1681 = vmatmul.mubr.f32.gmra.mrb[0].mxu0 %v1614
          %v1682 = vpop.f32.mrb[0].mxu0
          %v1683 = vadd.f32 0.0, %v1682
          %v1684 = vpop.f32.mrb[0].mxu0
          %1685 = vmatprep.mubr.f32.mxu0 0.0
          %1686 = vmatmul.mubr.f32.gmra.mrb[0].mxu0 %v1615
          %v1687 = vpop.f32.mrb[0].mxu0
          %v1688 = vadd.f32 0.0, %v1687
          %v1689 = vpop.f32.mrb[0].mxu0
          %1690 = vdwg.mxu0
          %v1691 = vadd.f32 %v1599, %v1683
          %v1692 = vadd.f32 %v1604, %v1688
          %s1693 = scalar_lea.vmem %s715, 16 [#allocation18]
          %v1694 = vld [vmem:[%s1693] sm:$0xff]
          %v1695 = vld [vmem:[%s1693 + $0x8] sm:$0xff]
          %v1696 = vadd.f32 %v1691, %v1694
          %v1697 = vadd.f32 %v1692, %v1695
          %v1698 = vstv %s881
          %v1699 = vmul.f32 %v1698, %v878
          %v1700 = vmul.f32 %v1698, %v879
          %v1701 = vstv %s883
          %v1702 = vmul.f32 %v1701, %v1696
          %v1703 = vmul.f32 %v1701, %v1697
          %v1704 = vadd.f32 %v1699, %v1702
          %v1705 = vadd.f32 %v1700, %v1703
          %s1706 = scalar_lea.vmem %s688, 256 [#allocation13]
          %v1707 = vld [vmem:[%s1706] sm:$0xff]
          %v1708 = vld [vmem:[%s1706 + $0x8] sm:$0xff]
          %v1709 = vld [vmem:[%s1706 + $0x10] sm:$0xff]
          %v1710 = vld [vmem:[%s1706 + $0x18] sm:$0xff]
          %v1711 = vld [vmem:[%s1706 + $0x20] sm:$0xff]
          %v1712 = vld [vmem:[%s1706 + $0x28] sm:$0xff]
          %v1713 = vld [vmem:[%s1706 + $0x30] sm:$0xff]
          %v1714 = vld [vmem:[%s1706 + $0x38] sm:$0xff]
          %v1715 = vld [vmem:[%s1706 + $0x40] sm:$0xff]
          %v1716 = vld [vmem:[%s1706 + $0x48] sm:$0xff]
          %v1717 = vld [vmem:[%s1706 + $0x50] sm:$0xff]
          %v1718 = vld [vmem:[%s1706 + $0x58] sm:$0xff]
          %v1719 = vld [vmem:[%s1706 + $0x60] sm:$0xff]
          %v1720 = vld [vmem:[%s1706 + $0x68] sm:$0xff]
          %v1721 = vld [vmem:[%s1706 + $0x70] sm:$0xff]
          %v1722 = vld [vmem:[%s1706 + $0x78] sm:$0xff]
          %s1723 = scalar_lea.vmem %s697, 32 [#allocation15]
          %v1724 = vld [vmem:[%s1723] sm:$0xff]
          %v1725 = vld [vmem:[%s1723 + $0x8] sm:$0xff]
          %1726 = vmatprep.subr.mxu0 0.0
          %1727 = vmatpush1.msra.mxu0 %v1707
          %1728 = vmatprep.subr.mxu0 0.0
          %1729 = vmatpush1.msra.mxu0 %v1708
          %1730 = vmatprep.subr.mxu0 0.0
          %1731 = vmatpush1.msra.mxu0 %v1709
          %1732 = vmatprep.subr.mxu0 0.0
          %1733 = vmatpush1.msra.mxu0 %v1710
          %1734 = vmatprep.subr.mxu0 0.0
          %1735 = vmatpush1.msra.mxu0 %v1711
          %1736 = vmatprep.subr.mxu0 0.0
          %1737 = vmatpush1.msra.mxu0 %v1712
          %1738 = vmatprep.subr.mxu0 0.0
          %1739 = vmatpush1.msra.mxu0 %v1713
          %1740 = vmatprep.subr.mxu0 0.0
          %1741 = vmatpush1.msra.mxu0 %v1714
          %1742 = vmatprep.subr.mxu0 0.0
          %1743 = vmatpush1.msra.mxu0 %v1715
          %1744 = vmatprep.subr.mxu0 0.0
          %1745 = vmatpush1.msra.mxu0 %v1716
          %1746 = vmatprep.subr.mxu0 0.0
          %1747 = vmatpush1.msra.mxu0 %v1717
          %1748 = vmatprep.subr.mxu0 0.0
          %1749 = vmatpush1.msra.mxu0 %v1718
          %1750 = vmatprep.subr.mxu0 0.0
          %1751 = vmatpush1.msra.mxu0 %v1719
          %1752 = vmatprep.subr.mxu0 0.0
          %1753 = vmatpush1.msra.mxu0 %v1720
          %1754 = vmatprep.subr.mxu0 0.0
          %1755 = vmatpush1.msra.mxu0 %v1721
          %1756 = vmatprep.subr.mxu0 0.0
          %1757 = vmatpush1.msra.mxu0 %v1722
          %1758 = vmatprep.subr.mxu0 0.0
          %1759 = vmatpush1.msra.mxu0 0.0
          %1760 = vmatprep.subr.mxu0 0.0
          %1761 = vmatpush1.msra.mxu0 0.0
          %1762 = vmatprep.subr.mxu0 0.0
          %1763 = vmatpush1.msra.mxu0 0.0
          %1764 = vmatprep.subr.mxu0 0.0
          %1765 = vmatpush1.msra.mxu0 0.0
          %1766 = vmatprep.subr.mxu0 0.0
          %1767 = vmatpush1.msra.mxu0 0.0
          %1768 = vmatprep.subr.mxu0 0.0
          %1769 = vmatpush1.msra.mxu0 0.0
          %1770 = vmatprep.subr.mxu0 0.0
          %1771 = vmatpush1.msra.mxu0 0.0
          %1772 = vmatprep.subr.mxu0 0.0
          %1773 = vmatpush1.msra.mxu0 0.0
          %1774 = vmatprep.subr.mxu0 0.0
          %1775 = vmatpush1.msra.mxu0 0.0
          %1776 = vmatprep.subr.mxu0 0.0
          %1777 = vmatpush1.msra.mxu0 0.0
          %1778 = vmatprep.subr.mxu0 0.0
          %1779 = vmatpush1.msra.mxu0 0.0
          %1780 = vmatprep.subr.mxu0 0.0
          %1781 = vmatpush1.msra.mxu0 0.0
          %1782 = vmatprep.subr.mxu0 0.0
          %1783 = vmatpush1.msra.mxu0 0.0
          %1784 = vmatprep.subr.mxu0 0.0
          %1785 = vmatpush1.msra.mxu0 0.0
          %1786 = vmatprep.subr.mxu0 0.0
          %1787 = vmatpush1.msra.mxu0 0.0
          %1788 = vmatprep.subr.mxu0 0.0
          %1789 = vmatpush1.msra.mxu0 0.0
          %1790 = vmatprep.mubr.f32.mxu0 0.0
          %1791 = vmatmul.mubr.f32.gmra.mrb[0].mxu0 %v1704
          %v1792 = vpop.f32.mrb[0].mxu0
          %v1793 = vadd.f32 %v1724, %v1792
          %v1794 = vpop.f32.mrb[0].mxu0
          %1795 = vmatprep.mubr.f32.mxu0 0.0
          %1796 = vmatmul.mubr.f32.gmra.mrb[0].mxu0 %v1705
          %v1797 = vpop.f32.mrb[0].mxu0
          %v1798 = vadd.f32 %v1725, %v1797
          %v1799 = vpop.f32.mrb[0].mxu0
          %1800 = vdwg.mxu0
          %s1801 = scalar_lea.vmem %s706, 768 [#allocation16]
          %v1802 = vld [vmem:[%s1801] sm:$0xff]
          %v1803 = vld [vmem:[%s1801 + $0x8] sm:$0xff]
          %v1804 = vld [vmem:[%s1801 + $0x10] sm:$0xff]
          %v1805 = vld [vmem:[%s1801 + $0x18] sm:$0xff]
          %v1806 = vld [vmem:[%s1801 + $0x20] sm:$0xff]
          %v1807 = vld [vmem:[%s1801 + $0x28] sm:$0xff]
          %v1808 = vld [vmem:[%s1801 + $0x30] sm:$0xff]
          %v1809 = vld [vmem:[%s1801 + $0x38] sm:$0xff]
          %v1810 = vld [vmem:[%s1801 + $0x40] sm:$0xff]
          %v1811 = vld [vmem:[%s1801 + $0x48] sm:$0xff]
          %v1812 = vld [vmem:[%s1801 + $0x50] sm:$0xff]
          %v1813 = vld [vmem:[%s1801 + $0x58] sm:$0xff]
          %v1814 = vld [vmem:[%s1801 + $0x60] sm:$0xff]
          %v1815 = vld [vmem:[%s1801 + $0x68] sm:$0xff]
          %v1816 = vld [vmem:[%s1801 + $0x70] sm:$0xff]
          %v1817 = vld [vmem:[%s1801 + $0x78] sm:$0xff]
          %s1818 = scalar_lea.vmem %s706, 896 [#allocation16]
          %v1819 = vld [vmem:[%s1818] sm:$0xff]
          %v1820 = vld [vmem:[%s1818 + $0x8] sm:$0xff]
          %v1821 = vld [vmem:[%s1818 + $0x10] sm:$0xff]
          %v1822 = vld [vmem:[%s1818 + $0x18] sm:$0xff]
          %v1823 = vld [vmem:[%s1818 + $0x20] sm:$0xff]
          %v1824 = vld [vmem:[%s1818 + $0x28] sm:$0xff]
          %v1825 = vld [vmem:[%s1818 + $0x30] sm:$0xff]
          %v1826 = vld [vmem:[%s1818 + $0x38] sm:$0xff]
          %v1827 = vld [vmem:[%s1818 + $0x40] sm:$0xff]
          %v1828 = vld [vmem:[%s1818 + $0x48] sm:$0xff]
          %v1829 = vld [vmem:[%s1818 + $0x50] sm:$0xff]
          %v1830 = vld [vmem:[%s1818 + $0x58] sm:$0xff]
          %v1831 = vld [vmem:[%s1818 + $0x60] sm:$0xff]
          %v1832 = vld [vmem:[%s1818 + $0x68] sm:$0xff]
          %v1833 = vld [vmem:[%s1818 + $0x70] sm:$0xff]
          %v1834 = vld [vmem:[%s1818 + $0x78] sm:$0xff]
          %s1835 = scalar_lea.vmem %s706, 1024 [#allocation16]
          %v1836 = vld [vmem:[%s1835] sm:$0xff]
          %v1837 = vld [vmem:[%s1835 + $0x8] sm:$0xff]
          %v1838 = vld [vmem:[%s1835 + $0x10] sm:$0xff]
          %v1839 = vld [vmem:[%s1835 + $0x18] sm:$0xff]
          %v1840 = vld [vmem:[%s1835 + $0x20] sm:$0xff]
          %v1841 = vld [vmem:[%s1835 + $0x28] sm:$0xff]
          %v1842 = vld [vmem:[%s1835 + $0x30] sm:$0xff]
          %v1843 = vld [vmem:[%s1835 + $0x38] sm:$0xff]
          %v1844 = vld [vmem:[%s1835 + $0x40] sm:$0xff]
          %v1845 = vld [vmem:[%s1835 + $0x48] sm:$0xff]
          %v1846 = vld [vmem:[%s1835 + $0x50] sm:$0xff]
          %v1847 = vld [vmem:[%s1835 + $0x58] sm:$0xff]
          %v1848 = vld [vmem:[%s1835 + $0x60] sm:$0xff]
          %v1849 = vld [vmem:[%s1835 + $0x68] sm:$0xff]
          %v1850 = vld [vmem:[%s1835 + $0x70] sm:$0xff]
          %v1851 = vld [vmem:[%s1835 + $0x78] sm:$0xff]
          %v1853 = vrot.slane %v1798, 7
          %v1856 = vrot.slane %v1793, 7
          %v1857 = vsel %vm1043, %v1856, %v1853
          %v1860 = vsel %vm1043, %v1853, %v1856
          %v1861 = vmul.f32 %v1860, %v847
          %v1862 = vmul.f32 %v1857, %v848
          %1863 = vmatprep.subr.mxu0 0.0
          %1864 = vmatpush1.msra.mxu0 %v1802
          %1865 = vmatprep.subr.mxu0 0.0
          %1866 = vmatpush1.msra.mxu0 %v1803
          %1867 = vmatprep.subr.mxu0 0.0
          %1868 = vmatpush1.msra.mxu0 %v1804
          %1869 = vmatprep.subr.mxu0 0.0
          %1870 = vmatpush1.msra.mxu0 %v1805
          %1871 = vmatprep.subr.mxu0 0.0
          %1872 = vmatpush1.msra.mxu0 %v1806
          %1873 = vmatprep.subr.mxu0 0.0
          %1874 = vmatpush1.msra.mxu0 %v1807
          %1875 = vmatprep.subr.mxu0 0.0
          %1876 = vmatpush1.msra.mxu0 %v1808
          %1877 = vmatprep.subr.mxu0 0.0
          %1878 = vmatpush1.msra.mxu0 %v1809
          %1879 = vmatprep.subr.mxu0 0.0
          %1880 = vmatpush1.msra.mxu0 %v1810
          %1881 = vmatprep.subr.mxu0 0.0
          %1882 = vmatpush1.msra.mxu0 %v1811
          %1883 = vmatprep.subr.mxu0 0.0
          %1884 = vmatpush1.msra.mxu0 %v1812
          %1885 = vmatprep.subr.mxu0 0.0
          %1886 = vmatpush1.msra.mxu0 %v1813
          %1887 = vmatprep.subr.mxu0 0.0
          %1888 = vmatpush1.msra.mxu0 %v1814
          %1889 = vmatprep.subr.mxu0 0.0
          %1890 = vmatpush1.msra.mxu0 %v1815
          %1891 = vmatprep.subr.mxu0 0.0
          %1892 = vmatpush1.msra.mxu0 %v1816
          %1893 = vmatprep.subr.mxu0 0.0
          %1894 = vmatpush1.msra.mxu0 %v1817
          %1895 = vmatprep.subr.mxu0 0.0
          %1896 = vmatpush1.msra.mxu0 0.0
          %1897 = vmatprep.subr.mxu0 0.0
          %1898 = vmatpush1.msra.mxu0 0.0
          %1899 = vmatprep.subr.mxu0 0.0
          %1900 = vmatpush1.msra.mxu0 0.0
          %1901 = vmatprep.subr.mxu0 0.0
          %1902 = vmatpush1.msra.mxu0 0.0
          %1903 = vmatprep.subr.mxu0 0.0
          %1904 = vmatpush1.msra.mxu0 0.0
          %1905 = vmatprep.subr.mxu0 0.0
          %1906 = vmatpush1.msra.mxu0 0.0
          %1907 = vmatprep.subr.mxu0 0.0
          %1908 = vmatpush1.msra.mxu0 0.0
          %1909 = vmatprep.subr.mxu0 0.0
          %1910 = vmatpush1.msra.mxu0 0.0
          %1911 = vmatprep.subr.mxu0 0.0
          %1912 = vmatpush1.msra.mxu0 0.0
          %1913 = vmatprep.subr.mxu0 0.0
          %1914 = vmatpush1.msra.mxu0 0.0
          %1915 = vmatprep.subr.mxu0 0.0
          %1916 = vmatpush1.msra.mxu0 0.0
          %1917 = vmatprep.subr.mxu0 0.0
          %1918 = vmatpush1.msra.mxu0 0.0
          %1919 = vmatprep.subr.mxu0 0.0
          %1920 = vmatpush1.msra.mxu0 0.0
          %1921 = vmatprep.subr.mxu0 0.0
          %1922 = vmatpush1.msra.mxu0 0.0
          %1923 = vmatprep.subr.mxu0 0.0
          %1924 = vmatpush1.msra.mxu0 0.0
          %1925 = vmatprep.subr.mxu0 0.0
          %1926 = vmatpush1.msra.mxu0 0.0
          %1927 = vmatprep.mubr.f32.mxu0 0.0
          %1928 = vmatmul.mubr.f32.gmra.mrb[0].mxu0 %v1861
          %v1929 = vpop.f32.mrb[0].mxu0
          %v1930 = vadd.f32 0.0, %v1929
          %v1931 = vpop.f32.mrb[0].mxu0
          %1932 = vmatprep.mubr.f32.mxu0 0.0
          %1933 = vmatmul.mubr.f32.gmra.mrb[0].mxu0 %v1862
          %v1934 = vpop.f32.mrb[0].mxu0
          %v1935 = vadd.f32 0.0, %v1934
          %v1936 = vpop.f32.mrb[0].mxu0
          %1937 = vdwg.mxu0
          %1938 = vmatprep.subr.mxu0 0.0
          %1939 = vmatpush1.msra.mxu0 %v1819
          %1940 = vmatprep.subr.mxu0 0.0
          %1941 = vmatpush1.msra.mxu0 %v1820
          %1942 = vmatprep.subr.mxu0 0.0
          %1943 = vmatpush1.msra.mxu0 %v1821
          %1944 = vmatprep.subr.mxu0 0.0
          %1945 = vmatpush1.msra.mxu0 %v1822
          %1946 = vmatprep.subr.mxu0 0.0
          %1947 = vmatpush1.msra.mxu0 %v1823
          %1948 = vmatprep.subr.mxu0 0.0
          %1949 = vmatpush1.msra.mxu0 %v1824
          %1950 = vmatprep.subr.mxu0 0.0
          %1951 = vmatpush1.msra.mxu0 %v1825
          %1952 = vmatprep.subr.mxu0 0.0
          %1953 = vmatpush1.msra.mxu0 %v1826
          %1954 = vmatprep.subr.mxu0 0.0
          %1955 = vmatpush1.msra.mxu0 %v1827
          %1956 = vmatprep.subr.mxu0 0.0
          %1957 = vmatpush1.msra.mxu0 %v1828
          %1958 = vmatprep.subr.mxu0 0.0
          %1959 = vmatpush1.msra.mxu0 %v1829
          %1960 = vmatprep.subr.mxu0 0.0
          %1961 = vmatpush1.msra.mxu0 %v1830
          %1962 = vmatprep.subr.mxu0 0.0
          %1963 = vmatpush1.msra.mxu0 %v1831
          %1964 = vmatprep.subr.mxu0 0.0
          %1965 = vmatpush1.msra.mxu0 %v1832
          %1966 = vmatprep.subr.mxu0 0.0
          %1967 = vmatpush1.msra.mxu0 %v1833
          %1968 = vmatprep.subr.mxu0 0.0
          %1969 = vmatpush1.msra.mxu0 %v1834
          %1970 = vmatprep.subr.mxu0 0.0
          %1971 = vmatpush1.msra.mxu0 0.0
          %1972 = vmatprep.subr.mxu0 0.0
          %1973 = vmatpush1.msra.mxu0 0.0
          %1974 = vmatprep.subr.mxu0 0.0
          %1975 = vmatpush1.msra.mxu0 0.0
          %1976 = vmatprep.subr.mxu0 0.0
          %1977 = vmatpush1.msra.mxu0 0.0
          %1978 = vmatprep.subr.mxu0 0.0
          %1979 = vmatpush1.msra.mxu0 0.0
          %1980 = vmatprep.subr.mxu0 0.0
          %1981 = vmatpush1.msra.mxu0 0.0
          %1982 = vmatprep.subr.mxu0 0.0
          %1983 = vmatpush1.msra.mxu0 0.0
          %1984 = vmatprep.subr.mxu0 0.0
          %1985 = vmatpush1.msra.mxu0 0.0
          %1986 = vmatprep.subr.mxu0 0.0
          %1987 = vmatpush1.msra.mxu0 0.0
          %1988 = vmatprep.subr.mxu0 0.0
          %1989 = vmatpush1.msra.mxu0 0.0
          %1990 = vmatprep.subr.mxu0 0.0
          %1991 = vmatpush1.msra.mxu0 0.0
          %1992 = vmatprep.subr.mxu0 0.0
          %1993 = vmatpush1.msra.mxu0 0.0
          %1994 = vmatprep.subr.mxu0 0.0
          %1995 = vmatpush1.msra.mxu0 0.0
          %1996 = vmatprep.subr.mxu0 0.0
          %1997 = vmatpush1.msra.mxu0 0.0
          %1998 = vmatprep.subr.mxu0 0.0
          %1999 = vmatpush1.msra.mxu0 0.0
          %2000 = vmatprep.subr.mxu0 0.0
          %2001 = vmatpush1.msra.mxu0 0.0
          %2002 = vmatprep.mubr.f32.mxu0 0.0
          %2003 = vmatmul.mubr.f32.gmra.mrb[0].mxu0 %v1793
          %v2004 = vpop.f32.mrb[0].mxu0
          %v2005 = vadd.f32 %v1930, %v2004
          %v2006 = vpop.f32.mrb[0].mxu0
          %2007 = vmatprep.mubr.f32.mxu0 0.0
          %2008 = vmatmul.mubr.f32.gmra.mrb[0].mxu0 %v1798
          %v2009 = vpop.f32.mrb[0].mxu0
          %v2010 = vadd.f32 %v1935, %v2009
          %v2011 = vpop.f32.mrb[0].mxu0
          %2012 = vdwg.mxu0
          %v2013 = vrot.slane %v1793, 1
          %v2014 = vrot.slane %v1798, 1
          %v2015 = vsel %vm1201, %v2013, %v2014
          %v2019 = vsel %vm1201, %v2014, %v2013
          %v2020 = vmul.f32 %v2015, %v850
          %v2021 = vmul.f32 %v2019, %v851
          %2022 = vmatprep.subr.mxu0 0.0
          %2023 = vmatpush1.msra.mxu0 %v1836
          %2024 = vmatprep.subr.mxu0 0.0
          %2025 = vmatpush1.msra.mxu0 %v1837
          %2026 = vmatprep.subr.mxu0 0.0
          %2027 = vmatpush1.msra.mxu0 %v1838
          %2028 = vmatprep.subr.mxu0 0.0
          %2029 = vmatpush1.msra.mxu0 %v1839
          %2030 = vmatprep.subr.mxu0 0.0
          %2031 = vmatpush1.msra.mxu0 %v1840
          %2032 = vmatprep.subr.mxu0 0.0
          %2033 = vmatpush1.msra.mxu0 %v1841
          %2034 = vmatprep.subr.mxu0 0.0
          %2035 = vmatpush1.msra.mxu0 %v1842
          %2036 = vmatprep.subr.mxu0 0.0
          %2037 = vmatpush1.msra.mxu0 %v1843
          %2038 = vmatprep.subr.mxu0 0.0
          %2039 = vmatpush1.msra.mxu0 %v1844
          %2040 = vmatprep.subr.mxu0 0.0
          %2041 = vmatpush1.msra.mxu0 %v1845
          %2042 = vmatprep.subr.mxu0 0.0
          %2043 = vmatpush1.msra.mxu0 %v1846
          %2044 = vmatprep.subr.mxu0 0.0
          %2045 = vmatpush1.msra.mxu0 %v1847
          %2046 = vmatprep.subr.mxu0 0.0
          %2047 = vmatpush1.msra.mxu0 %v1848
          %2048 = vmatprep.subr.mxu0 0.0
          %2049 = vmatpush1.msra.mxu0 %v1849
          %2050 = vmatprep.subr.mxu0 0.0
          %2051 = vmatpush1.msra.mxu0 %v1850
          %2052 = vmatprep.subr.mxu0 0.0
          %2053 = vmatpush1.msra.mxu0 %v1851
          %2054 = vmatprep.subr.mxu0 0.0
          %2055 = vmatpush1.msra.mxu0 0.0
          %2056 = vmatprep.subr.mxu0 0.0
          %2057 = vmatpush1.msra.mxu0 0.0
          %2058 = vmatprep.subr.mxu0 0.0
          %2059 = vmatpush1.msra.mxu0 0.0
          %2060 = vmatprep.subr.mxu0 0.0
          %2061 = vmatpush1.msra.mxu0 0.0
          %2062 = vmatprep.subr.mxu0 0.0
          %2063 = vmatpush1.msra.mxu0 0.0
          %2064 = vmatprep.subr.mxu0 0.0
          %2065 = vmatpush1.msra.mxu0 0.0
          %2066 = vmatprep.subr.mxu0 0.0
          %2067 = vmatpush1.msra.mxu0 0.0
          %2068 = vmatprep.subr.mxu0 0.0
          %2069 = vmatpush1.msra.mxu0 0.0
          %2070 = vmatprep.subr.mxu0 0.0
          %2071 = vmatpush1.msra.mxu0 0.0
          %2072 = vmatprep.subr.mxu0 0.0
          %2073 = vmatpush1.msra.mxu0 0.0
          %2074 = vmatprep.subr.mxu0 0.0
          %2075 = vmatpush1.msra.mxu0 0.0
          %2076 = vmatprep.subr.mxu0 0.0
          %2077 = vmatpush1.msra.mxu0 0.0
          %2078 = vmatprep.subr.mxu0 0.0
          %2079 = vmatpush1.msra.mxu0 0.0
          %2080 = vmatprep.subr.mxu0 0.0
          %2081 = vmatpush1.msra.mxu0 0.0
          %2082 = vmatprep.subr.mxu0 0.0
          %2083 = vmatpush1.msra.mxu0 0.0
          %2084 = vmatprep.subr.mxu0 0.0
          %2085 = vmatpush1.msra.mxu0 0.0
          %2086 = vmatprep.mubr.f32.mxu0 0.0
          %2087 = vmatmul.mubr.f32.gmra.mrb[0].mxu0 %v2020
          %v2088 = vpop.f32.mrb[0].mxu0
          %v2089 = vadd.f32 0.0, %v2088
          %v2090 = vpop.f32.mrb[0].mxu0
          %2091 = vmatprep.mubr.f32.mxu0 0.0
          %2092 = vmatmul.mubr.f32.gmra.mrb[0].mxu0 %v2021
          %v2093 = vpop.f32.mrb[0].mxu0
          %v2094 = vadd.f32 0.0, %v2093
          %v2095 = vpop.f32.mrb[0].mxu0
          %2096 = vdwg.mxu0
          %v2097 = vadd.f32 %v2005, %v2089
          %v2098 = vadd.f32 %v2010, %v2094
          %s2099 = scalar_lea.vmem %s715, 32 [#allocation18]
          %v2100 = vld [vmem:[%s2099] sm:$0xff]
          %v2101 = vld [vmem:[%s2099 + $0x8] sm:$0xff]
          %v2102 = vadd.f32 %v2097, %v2100
          %v2103 = vadd.f32 %v2098, %v2101
          %s2104 = scalar_lea.vmem %s724, 16 [#allocation19]
          %v2105 = vld [vmem:[%s2104] sm:$0xff]
          %v2106 = vld [vmem:[%s2104 + $0x8] sm:$0xff]
          %vm2107 = vcmp.ge.f32.partialorder %v2102, 0.0
          %vm2108 = vcmp.ge.f32.partialorder %v2103, 0.0
          %v2109 = vmul.f32 %v2102, %v2105
          %v2110 = vmul.f32 %v2103, %v2106
          %v2111 = vsel %vm2107, %v2102, %v2109
          %v2112 = vsel %vm2108, %v2103, %v2110
          %s2113 = scalar_lea.vmem %s688, 384 [#allocation13]
          %v2114 = vld [vmem:[%s2113] sm:$0xff]
          %v2115 = vld [vmem:[%s2113 + $0x8] sm:$0xff]
          %v2116 = vld [vmem:[%s2113 + $0x10] sm:$0xff]
          %v2117 = vld [vmem:[%s2113 + $0x18] sm:$0xff]
          %v2118 = vld [vmem:[%s2113 + $0x20] sm:$0xff]
          %v2119 = vld [vmem:[%s2113 + $0x28] sm:$0xff]
          %v2120 = vld [vmem:[%s2113 + $0x30] sm:$0xff]
          %v2121 = vld [vmem:[%s2113 + $0x38] sm:$0xff]
          %v2122 = vld [vmem:[%s2113 + $0x40] sm:$0xff]
          %v2123 = vld [vmem:[%s2113 + $0x48] sm:$0xff]
          %v2124 = vld [vmem:[%s2113 + $0x50] sm:$0xff]
          %v2125 = vld [vmem:[%s2113 + $0x58] sm:$0xff]
          %v2126 = vld [vmem:[%s2113 + $0x60] sm:$0xff]
          %v2127 = vld [vmem:[%s2113 + $0x68] sm:$0xff]
          %v2128 = vld [vmem:[%s2113 + $0x70] sm:$0xff]
          %v2129 = vld [vmem:[%s2113 + $0x78] sm:$0xff]
          %s2130 = scalar_lea.vmem %s697, 48 [#allocation15]
          %v2131 = vld [vmem:[%s2130] sm:$0xff]
          %v2132 = vld [vmem:[%s2130 + $0x8] sm:$0xff]
          %2133 = vmatprep.subr.mxu0 0.0
          %2134 = vmatpush1.msra.mxu0 %v2114
          %2135 = vmatprep.subr.mxu0 0.0
          %2136 = vmatpush1.msra.mxu0 %v2115
          %2137 = vmatprep.subr.mxu0 0.0
          %2138 = vmatpush1.msra.mxu0 %v2116
          %2139 = vmatprep.subr.mxu0 0.0
          %2140 = vmatpush1.msra.mxu0 %v2117
          %2141 = vmatprep.subr.mxu0 0.0
          %2142 = vmatpush1.msra.mxu0 %v2118
          %2143 = vmatprep.subr.mxu0 0.0
          %2144 = vmatpush1.msra.mxu0 %v2119
          %2145 = vmatprep.subr.mxu0 0.0
          %2146 = vmatpush1.msra.mxu0 %v2120
          %2147 = vmatprep.subr.mxu0 0.0
          %2148 = vmatpush1.msra.mxu0 %v2121
          %2149 = vmatprep.subr.mxu0 0.0
          %2150 = vmatpush1.msra.mxu0 %v2122
          %2151 = vmatprep.subr.mxu0 0.0
          %2152 = vmatpush1.msra.mxu0 %v2123
          %2153 = vmatprep.subr.mxu0 0.0
          %2154 = vmatpush1.msra.mxu0 %v2124
          %2155 = vmatprep.subr.mxu0 0.0
          %2156 = vmatpush1.msra.mxu0 %v2125
          %2157 = vmatprep.subr.mxu0 0.0
          %2158 = vmatpush1.msra.mxu0 %v2126
          %2159 = vmatprep.subr.mxu0 0.0
          %2160 = vmatpush1.msra.mxu0 %v2127
          %2161 = vmatprep.subr.mxu0 0.0
          %2162 = vmatpush1.msra.mxu0 %v2128
          %2163 = vmatprep.subr.mxu0 0.0
          %2164 = vmatpush1.msra.mxu0 %v2129
          %2165 = vmatprep.subr.mxu0 0.0
          %2166 = vmatpush1.msra.mxu0 0.0
          %2167 = vmatprep.subr.mxu0 0.0
          %2168 = vmatpush1.msra.mxu0 0.0
          %2169 = vmatprep.subr.mxu0 0.0
          %2170 = vmatpush1.msra.mxu0 0.0
          %2171 = vmatprep.subr.mxu0 0.0
          %2172 = vmatpush1.msra.mxu0 0.0
          %2173 = vmatprep.subr.mxu0 0.0
          %2174 = vmatpush1.msra.mxu0 0.0
          %2175 = vmatprep.subr.mxu0 0.0
          %2176 = vmatpush1.msra.mxu0 0.0
          %2177 = vmatprep.subr.mxu0 0.0
          %2178 = vmatpush1.msra.mxu0 0.0
          %2179 = vmatprep.subr.mxu0 0.0
          %2180 = vmatpush1.msra.mxu0 0.0
          %2181 = vmatprep.subr.mxu0 0.0
          %2182 = vmatpush1.msra.mxu0 0.0
          %2183 = vmatprep.subr.mxu0 0.0
          %2184 = vmatpush1.msra.mxu0 0.0
          %2185 = vmatprep.subr.mxu0 0.0
          %2186 = vmatpush1.msra.mxu0 0.0
          %2187 = vmatprep.subr.mxu0 0.0
          %2188 = vmatpush1.msra.mxu0 0.0
          %2189 = vmatprep.subr.mxu0 0.0
          %2190 = vmatpush1.msra.mxu0 0.0
          %2191 = vmatprep.subr.mxu0 0.0
          %2192 = vmatpush1.msra.mxu0 0.0
          %2193 = vmatprep.subr.mxu0 0.0
          %2194 = vmatpush1.msra.mxu0 0.0
          %2195 = vmatprep.subr.mxu0 0.0
          %2196 = vmatpush1.msra.mxu0 0.0
          %2197 = vmatprep.mubr.f32.mxu0 0.0
          %2198 = vmatmul.mubr.f32.gmra.mrb[0].mxu0 %v2111
          %v2199 = vpop.f32.mrb[0].mxu0
          %v2200 = vadd.f32 %v2131, %v2199
          %v2201 = vpop.f32.mrb[0].mxu0
          %2202 = vmatprep.mubr.f32.mxu0 0.0
          %2203 = vmatmul.mubr.f32.gmra.mrb[0].mxu0 %v2112
          %v2204 = vpop.f32.mrb[0].mxu0
          %v2205 = vadd.f32 %v2132, %v2204
          %v2206 = vpop.f32.mrb[0].mxu0
          %2207 = vdwg.mxu0
          %s2208 = scalar_lea.vmem %s706, 1152 [#allocation16]
          %v2209 = vld [vmem:[%s2208] sm:$0xff]
          %v2210 = vld [vmem:[%s2208 + $0x8] sm:$0xff]
          %v2211 = vld [vmem:[%s2208 + $0x10] sm:$0xff]
          %v2212 = vld [vmem:[%s2208 + $0x18] sm:$0xff]
          %v2213 = vld [vmem:[%s2208 + $0x20] sm:$0xff]
          %v2214 = vld [vmem:[%s2208 + $0x28] sm:$0xff]
          %v2215 = vld [vmem:[%s2208 + $0x30] sm:$0xff]
          %v2216 = vld [vmem:[%s2208 + $0x38] sm:$0xff]
          %v2217 = vld [vmem:[%s2208 + $0x40] sm:$0xff]
          %v2218 = vld [vmem:[%s2208 + $0x48] sm:$0xff]
          %v2219 = vld [vmem:[%s2208 + $0x50] sm:$0xff]
          %v2220 = vld [vmem:[%s2208 + $0x58] sm:$0xff]
          %v2221 = vld [vmem:[%s2208 + $0x60] sm:$0xff]
          %v2222 = vld [vmem:[%s2208 + $0x68] sm:$0xff]
          %v2223 = vld [vmem:[%s2208 + $0x70] sm:$0xff]
          %v2224 = vld [vmem:[%s2208 + $0x78] sm:$0xff]
          %s2225 = scalar_lea.vmem %s706, 1280 [#allocation16]
          %v2226 = vld [vmem:[%s2225] sm:$0xff]
          %v2227 = vld [vmem:[%s2225 + $0x8] sm:$0xff]
          %v2228 = vld [vmem:[%s2225 + $0x10] sm:$0xff]
          %v2229 = vld [vmem:[%s2225 + $0x18] sm:$0xff]
          %v2230 = vld [vmem:[%s2225 + $0x20] sm:$0xff]
          %v2231 = vld [vmem:[%s2225 + $0x28] sm:$0xff]
          %v2232 = vld [vmem:[%s2225 + $0x30] sm:$0xff]
          %v2233 = vld [vmem:[%s2225 + $0x38] sm:$0xff]
          %v2234 = vld [vmem:[%s2225 + $0x40] sm:$0xff]
          %v2235 = vld [vmem:[%s2225 + $0x48] sm:$0xff]
          %v2236 = vld [vmem:[%s2225 + $0x50] sm:$0xff]
          %v2237 = vld [vmem:[%s2225 + $0x58] sm:$0xff]
          %v2238 = vld [vmem:[%s2225 + $0x60] sm:$0xff]
          %v2239 = vld [vmem:[%s2225 + $0x68] sm:$0xff]
          %v2240 = vld [vmem:[%s2225 + $0x70] sm:$0xff]
          %v2241 = vld [vmem:[%s2225 + $0x78] sm:$0xff]
          %s2242 = scalar_lea.vmem %s706, 1408 [#allocation16]
          %v2243 = vld [vmem:[%s2242] sm:$0xff]
          %v2244 = vld [vmem:[%s2242 + $0x8] sm:$0xff]
          %v2245 = vld [vmem:[%s2242 + $0x10] sm:$0xff]
          %v2246 = vld [vmem:[%s2242 + $0x18] sm:$0xff]
          %v2247 = vld [vmem:[%s2242 + $0x20] sm:$0xff]
          %v2248 = vld [vmem:[%s2242 + $0x28] sm:$0xff]
          %v2249 = vld [vmem:[%s2242 + $0x30] sm:$0xff]
          %v2250 = vld [vmem:[%s2242 + $0x38] sm:$0xff]
          %v2251 = vld [vmem:[%s2242 + $0x40] sm:$0xff]
          %v2252 = vld [vmem:[%s2242 + $0x48] sm:$0xff]
          %v2253 = vld [vmem:[%s2242 + $0x50] sm:$0xff]
          %v2254 = vld [vmem:[%s2242 + $0x58] sm:$0xff]
          %v2255 = vld [vmem:[%s2242 + $0x60] sm:$0xff]
          %v2256 = vld [vmem:[%s2242 + $0x68] sm:$0xff]
          %v2257 = vld [vmem:[%s2242 + $0x70] sm:$0xff]
          %v2258 = vld [vmem:[%s2242 + $0x78] sm:$0xff]
          %v2260 = vrot.slane %v2205, 7
          %v2263 = vrot.slane %v2200, 7
          %v2264 = vsel %vm1043, %v2263, %v2260
          %v2267 = vsel %vm1043, %v2260, %v2263
          %v2268 = vmul.f32 %v2267, %v847
          %v2269 = vmul.f32 %v2264, %v848
          %2270 = vmatprep.subr.mxu0 0.0
          %2271 = vmatpush1.msra.mxu0 %v2209
          %2272 = vmatprep.subr.mxu0 0.0
          %2273 = vmatpush1.msra.mxu0 %v2210
          %2274 = vmatprep.subr.mxu0 0.0
          %2275 = vmatpush1.msra.mxu0 %v2211
          %2276 = vmatprep.subr.mxu0 0.0
          %2277 = vmatpush1.msra.mxu0 %v2212
          %2278 = vmatprep.subr.mxu0 0.0
          %2279 = vmatpush1.msra.mxu0 %v2213
          %2280 = vmatprep.subr.mxu0 0.0
          %2281 = vmatpush1.msra.mxu0 %v2214
          %2282 = vmatprep.subr.mxu0 0.0
          %2283 = vmatpush1.msra.mxu0 %v2215
          %2284 = vmatprep.subr.mxu0 0.0
          %2285 = vmatpush1.msra.mxu0 %v2216
          %2286 = vmatprep.subr.mxu0 0.0
          %2287 = vmatpush1.msra.mxu0 %v2217
          %2288 = vmatprep.subr.mxu0 0.0
          %2289 = vmatpush1.msra.mxu0 %v2218
          %2290 = vmatprep.subr.mxu0 0.0
          %2291 = vmatpush1.msra.mxu0 %v2219
          %2292 = vmatprep.subr.mxu0 0.0
          %2293 = vmatpush1.msra.mxu0 %v2220
          %2294 = vmatprep.subr.mxu0 0.0
          %2295 = vmatpush1.msra.mxu0 %v2221
          %2296 = vmatprep.subr.mxu0 0.0
          %2297 = vmatpush1.msra.mxu0 %v2222
          %2298 = vmatprep.subr.mxu0 0.0
          %2299 = vmatpush1.msra.mxu0 %v2223
          %2300 = vmatprep.subr.mxu0 0.0
          %2301 = vmatpush1.msra.mxu0 %v2224
          %2302 = vmatprep.subr.mxu0 0.0
          %2303 = vmatpush1.msra.mxu0 0.0
          %2304 = vmatprep.subr.mxu0 0.0
          %2305 = vmatpush1.msra.mxu0 0.0
          %2306 = vmatprep.subr.mxu0 0.0
          %2307 = vmatpush1.msra.mxu0 0.0
          %2308 = vmatprep.subr.mxu0 0.0
          %2309 = vmatpush1.msra.mxu0 0.0
          %2310 = vmatprep.subr.mxu0 0.0
          %2311 = vmatpush1.msra.mxu0 0.0
          %2312 = vmatprep.subr.mxu0 0.0
          %2313 = vmatpush1.msra.mxu0 0.0
          %2314 = vmatprep.subr.mxu0 0.0
          %2315 = vmatpush1.msra.mxu0 0.0
          %2316 = vmatprep.subr.mxu0 0.0
          %2317 = vmatpush1.msra.mxu0 0.0
          %2318 = vmatprep.subr.mxu0 0.0
          %2319 = vmatpush1.msra.mxu0 0.0
          %2320 = vmatprep.subr.mxu0 0.0
          %2321 = vmatpush1.msra.mxu0 0.0
          %2322 = vmatprep.subr.mxu0 0.0
          %2323 = vmatpush1.msra.mxu0 0.0
          %2324 = vmatprep.subr.mxu0 0.0
          %2325 = vmatpush1.msra.mxu0 0.0
          %2326 = vmatprep.subr.mxu0 0.0
          %2327 = vmatpush1.msra.mxu0 0.0
          %2328 = vmatprep.subr.mxu0 0.0
          %2329 = vmatpush1.msra.mxu0 0.0
          %2330 = vmatprep.subr.mxu0 0.0
          %2331 = vmatpush1.msra.mxu0 0.0
          %2332 = vmatprep.subr.mxu0 0.0
          %2333 = vmatpush1.msra.mxu0 0.0
          %2334 = vmatprep.mubr.f32.mxu0 0.0
          %2335 = vmatmul.mubr.f32.gmra.mrb[0].mxu0 %v2268
          %v2336 = vpop.f32.mrb[0].mxu0
          %v2337 = vadd.f32 0.0, %v2336
          %v2338 = vpop.f32.mrb[0].mxu0
          %2339 = vmatprep.mubr.f32.mxu0 0.0
          %2340 = vmatmul.mubr.f32.gmra.mrb[0].mxu0 %v2269
          %v2341 = vpop.f32.mrb[0].mxu0
          %v2342 = vadd.f32 0.0, %v2341
          %v2343 = vpop.f32.mrb[0].mxu0
          %2344 = vdwg.mxu0
          %2345 = vmatprep.subr.mxu0 0.0
          %2346 = vmatpush1.msra.mxu0 %v2226
          %2347 = vmatprep.subr.mxu0 0.0
          %2348 = vmatpush1.msra.mxu0 %v2227
          %2349 = vmatprep.subr.mxu0 0.0
          %2350 = vmatpush1.msra.mxu0 %v2228
          %2351 = vmatprep.subr.mxu0 0.0
          %2352 = vmatpush1.msra.mxu0 %v2229
          %2353 = vmatprep.subr.mxu0 0.0
          %2354 = vmatpush1.msra.mxu0 %v2230
          %2355 = vmatprep.subr.mxu0 0.0
          %2356 = vmatpush1.msra.mxu0 %v2231
          %2357 = vmatprep.subr.mxu0 0.0
          %2358 = vmatpush1.msra.mxu0 %v2232
          %2359 = vmatprep.subr.mxu0 0.0
          %2360 = vmatpush1.msra.mxu0 %v2233
          %2361 = vmatprep.subr.mxu0 0.0
          %2362 = vmatpush1.msra.mxu0 %v2234
          %2363 = vmatprep.subr.mxu0 0.0
          %2364 = vmatpush1.msra.mxu0 %v2235
          %2365 = vmatprep.subr.mxu0 0.0
          %2366 = vmatpush1.msra.mxu0 %v2236
          %2367 = vmatprep.subr.mxu0 0.0
          %2368 = vmatpush1.msra.mxu0 %v2237
          %2369 = vmatprep.subr.mxu0 0.0
          %2370 = vmatpush1.msra.mxu0 %v2238
          %2371 = vmatprep.subr.mxu0 0.0
          %2372 = vmatpush1.msra.mxu0 %v2239
          %2373 = vmatprep.subr.mxu0 0.0
          %2374 = vmatpush1.msra.mxu0 %v2240
          %2375 = vmatprep.subr.mxu0 0.0
          %2376 = vmatpush1.msra.mxu0 %v2241
          %2377 = vmatprep.subr.mxu0 0.0
          %2378 = vmatpush1.msra.mxu0 0.0
          %2379 = vmatprep.subr.mxu0 0.0
          %2380 = vmatpush1.msra.mxu0 0.0
          %2381 = vmatprep.subr.mxu0 0.0
          %2382 = vmatpush1.msra.mxu0 0.0
          %2383 = vmatprep.subr.mxu0 0.0
          %2384 = vmatpush1.msra.mxu0 0.0
          %2385 = vmatprep.subr.mxu0 0.0
          %2386 = vmatpush1.msra.mxu0 0.0
          %2387 = vmatprep.subr.mxu0 0.0
          %2388 = vmatpush1.msra.mxu0 0.0
          %2389 = vmatprep.subr.mxu0 0.0
          %2390 = vmatpush1.msra.mxu0 0.0
          %2391 = vmatprep.subr.mxu0 0.0
          %2392 = vmatpush1.msra.mxu0 0.0
          %2393 = vmatprep.subr.mxu0 0.0
          %2394 = vmatpush1.msra.mxu0 0.0
          %2395 = vmatprep.subr.mxu0 0.0
          %2396 = vmatpush1.msra.mxu0 0.0
          %2397 = vmatprep.subr.mxu0 0.0
          %2398 = vmatpush1.msra.mxu0 0.0
          %2399 = vmatprep.subr.mxu0 0.0
          %2400 = vmatpush1.msra.mxu0 0.0
          %2401 = vmatprep.subr.mxu0 0.0
          %2402 = vmatpush1.msra.mxu0 0.0
          %2403 = vmatprep.subr.mxu0 0.0
          %2404 = vmatpush1.msra.mxu0 0.0
          %2405 = vmatprep.subr.mxu0 0.0
          %2406 = vmatpush1.msra.mxu0 0.0
          %2407 = vmatprep.subr.mxu0 0.0
          %2408 = vmatpush1.msra.mxu0 0.0
          %2409 = vmatprep.mubr.f32.mxu0 0.0
          %2410 = vmatmul.mubr.f32.gmra.mrb[0].mxu0 %v2200
          %v2411 = vpop.f32.mrb[0].mxu0
          %v2412 = vadd.f32 %v2337, %v2411
          %v2413 = vpop.f32.mrb[0].mxu0
          %2414 = vmatprep.mubr.f32.mxu0 0.0
          %2415 = vmatmul.mubr.f32.gmra.mrb[0].mxu0 %v2205
          %v2416 = vpop.f32.mrb[0].mxu0
          %v2417 = vadd.f32 %v2342, %v2416
          %v2418 = vpop.f32.mrb[0].mxu0
          %2419 = vdwg.mxu0
          %v2420 = vrot.slane %v2200, 1
          %v2421 = vrot.slane %v2205, 1
          %v2422 = vsel %vm1201, %v2420, %v2421
          %v2426 = vsel %vm1201, %v2421, %v2420
          %v2427 = vmul.f32 %v2422, %v850
          %v2428 = vmul.f32 %v2426, %v851
          %2429 = vmatprep.subr.mxu0 0.0
          %2430 = vmatpush1.msra.mxu0 %v2243
          %2431 = vmatprep.subr.mxu0 0.0
          %2432 = vmatpush1.msra.mxu0 %v2244
          %2433 = vmatprep.subr.mxu0 0.0
          %2434 = vmatpush1.msra.mxu0 %v2245
          %2435 = vmatprep.subr.mxu0 0.0
          %2436 = vmatpush1.msra.mxu0 %v2246
          %2437 = vmatprep.subr.mxu0 0.0
          %2438 = vmatpush1.msra.mxu0 %v2247
          %2439 = vmatprep.subr.mxu0 0.0
          %2440 = vmatpush1.msra.mxu0 %v2248
          %2441 = vmatprep.subr.mxu0 0.0
          %2442 = vmatpush1.msra.mxu0 %v2249
          %2443 = vmatprep.subr.mxu0 0.0
          %2444 = vmatpush1.msra.mxu0 %v2250
          %2445 = vmatprep.subr.mxu0 0.0
          %2446 = vmatpush1.msra.mxu0 %v2251
          %2447 = vmatprep.subr.mxu0 0.0
          %2448 = vmatpush1.msra.mxu0 %v2252
          %2449 = vmatprep.subr.mxu0 0.0
          %2450 = vmatpush1.msra.mxu0 %v2253
          %2451 = vmatprep.subr.mxu0 0.0
          %2452 = vmatpush1.msra.mxu0 %v2254
          %2453 = vmatprep.subr.mxu0 0.0
          %2454 = vmatpush1.msra.mxu0 %v2255
          %2455 = vmatprep.subr.mxu0 0.0
          %2456 = vmatpush1.msra.mxu0 %v2256
          %2457 = vmatprep.subr.mxu0 0.0
          %2458 = vmatpush1.msra.mxu0 %v2257
          %2459 = vmatprep.subr.mxu0 0.0
          %2460 = vmatpush1.msra.mxu0 %v2258
          %2461 = vmatprep.subr.mxu0 0.0
          %2462 = vmatpush1.msra.mxu0 0.0
          %2463 = vmatprep.subr.mxu0 0.0
          %2464 = vmatpush1.msra.mxu0 0.0
          %2465 = vmatprep.subr.mxu0 0.0
          %2466 = vmatpush1.msra.mxu0 0.0
          %2467 = vmatprep.subr.mxu0 0.0
          %2468 = vmatpush1.msra.mxu0 0.0
          %2469 = vmatprep.subr.mxu0 0.0
          %2470 = vmatpush1.msra.mxu0 0.0
          %2471 = vmatprep.subr.mxu0 0.0
          %2472 = vmatpush1.msra.mxu0 0.0
          %2473 = vmatprep.subr.mxu0 0.0
          %2474 = vmatpush1.msra.mxu0 0.0
          %2475 = vmatprep.subr.mxu0 0.0
          %2476 = vmatpush1.msra.mxu0 0.0
          %2477 = vmatprep.subr.mxu0 0.0
          %2478 = vmatpush1.msra.mxu0 0.0
          %2479 = vmatprep.subr.mxu0 0.0
          %2480 = vmatpush1.msra.mxu0 0.0
          %2481 = vmatprep.subr.mxu0 0.0
          %2482 = vmatpush1.msra.mxu0 0.0
          %2483 = vmatprep.subr.mxu0 0.0
          %2484 = vmatpush1.msra.mxu0 0.0
          %2485 = vmatprep.subr.mxu0 0.0
          %2486 = vmatpush1.msra.mxu0 0.0
          %2487 = vmatprep.subr.mxu0 0.0
          %2488 = vmatpush1.msra.mxu0 0.0
          %2489 = vmatprep.subr.mxu0 0.0
          %2490 = vmatpush1.msra.mxu0 0.0
          %2491 = vmatprep.subr.mxu0 0.0
          %2492 = vmatpush1.msra.mxu0 0.0
          %2493 = vmatprep.mubr.f32.mxu0 0.0
          %2494 = vmatmul.mubr.f32.gmra.mrb[0].mxu0 %v2427
          %v2495 = vpop.f32.mrb[0].mxu0
          %v2496 = vadd.f32 0.0, %v2495
          %v2497 = vpop.f32.mrb[0].mxu0
          %2498 = vmatprep.mubr.f32.mxu0 0.0
          %2499 = vmatmul.mubr.f32.gmra.mrb[0].mxu0 %v2428
          %v2500 = vpop.f32.mrb[0].mxu0
          %v2501 = vadd.f32 0.0, %v2500
          %v2502 = vpop.f32.mrb[0].mxu0
          %2503 = vdwg.mxu0
          %v2504 = vadd.f32 %v2412, %v2496
          %v2505 = vadd.f32 %v2417, %v2501
          %s2506 = scalar_lea.vmem %s715, 48 [#allocation18]
          %v2507 = vld [vmem:[%s2506] sm:$0xff]
          %v2508 = vld [vmem:[%s2506 + $0x8] sm:$0xff]
          %v2509 = vadd.f32 %v2504, %v2507
          %v2510 = vadd.f32 %v2505, %v2508
          %v2511 = vstv %s885
          %v2512 = vmul.f32 %v2511, %v1704
          %v2513 = vmul.f32 %v2511, %v1705
          %v2514 = vstv %s887
          %v2515 = vmul.f32 %v2514, %v2509
          %v2516 = vmul.f32 %v2514, %v2510
          %v2517 = vadd.f32 %v2512, %v2515
          %v2518 = vadd.f32 %v2513, %v2516
          %v2519 = vstv %s889
          %v2520 = vmul.f32 %v2519, %v2517
          %v2521 = vmul.f32 %v2519, %v2518
          %s2522 = scalar_lea.vmem %s688, 512 [#allocation13]
          %v2523 = vld [vmem:[%s2522] sm:$0xff]
          %v2524 = vld [vmem:[%s2522 + $0x8] sm:$0xff]
          %v2525 = vld [vmem:[%s2522 + $0x10] sm:$0xff]
          %v2526 = vld [vmem:[%s2522 + $0x18] sm:$0xff]
          %v2527 = vld [vmem:[%s2522 + $0x20] sm:$0xff]
          %v2528 = vld [vmem:[%s2522 + $0x28] sm:$0xff]
          %v2529 = vld [vmem:[%s2522 + $0x30] sm:$0xff]
          %v2530 = vld [vmem:[%s2522 + $0x38] sm:$0xff]
          %v2531 = vld [vmem:[%s2522 + $0x40] sm:$0xff]
          %v2532 = vld [vmem:[%s2522 + $0x48] sm:$0xff]
          %v2533 = vld [vmem:[%s2522 + $0x50] sm:$0xff]
          %v2534 = vld [vmem:[%s2522 + $0x58] sm:$0xff]
          %v2535 = vld [vmem:[%s2522 + $0x60] sm:$0xff]
          %v2536 = vld [vmem:[%s2522 + $0x68] sm:$0xff]
          %v2537 = vld [vmem:[%s2522 + $0x70] sm:$0xff]
          %v2538 = vld [vmem:[%s2522 + $0x78] sm:$0xff]
          %v2539 = vstv %s891
          %v2540 = vmul.f32 %v2539, %v1704
          %v2541 = vmul.f32 %v2539, %v1705
          %s2542 = scalar_lea.vmem %s688, 640 [#allocation13]
          %v2543 = vld [vmem:[%s2542] sm:$0xff]
          %v2544 = vld [vmem:[%s2542 + $0x8] sm:$0xff]
          %v2545 = vld [vmem:[%s2542 + $0x10] sm:$0xff]
          %v2546 = vld [vmem:[%s2542 + $0x18] sm:$0xff]
          %v2547 = vld [vmem:[%s2542 + $0x20] sm:$0xff]
          %v2548 = vld [vmem:[%s2542 + $0x28] sm:$0xff]
          %v2549 = vld [vmem:[%s2542 + $0x30] sm:$0xff]
          %v2550 = vld [vmem:[%s2542 + $0x38] sm:$0xff]
          %v2551 = vld [vmem:[%s2542 + $0x40] sm:$0xff]
          %v2552 = vld [vmem:[%s2542 + $0x48] sm:$0xff]
          %v2553 = vld [vmem:[%s2542 + $0x50] sm:$0xff]
          %v2554 = vld [vmem:[%s2542 + $0x58] sm:$0xff]
          %v2555 = vld [vmem:[%s2542 + $0x60] sm:$0xff]
          %v2556 = vld [vmem:[%s2542 + $0x68] sm:$0xff]
          %v2557 = vld [vmem:[%s2542 + $0x70] sm:$0xff]
          %v2558 = vld [vmem:[%s2542 + $0x78] sm:$0xff]
          %2559 = vmatprep.subr.mxu0 0.0
          %2560 = vmatpush1.msra.mxu0 %v2543
          %2561 = vmatprep.subr.mxu0 0.0
          %2562 = vmatpush1.msra.mxu0 %v2544
          %2563 = vmatprep.subr.mxu0 0.0
          %2564 = vmatpush1.msra.mxu0 %v2545
          %2565 = vmatprep.subr.mxu0 0.0
          %2566 = vmatpush1.msra.mxu0 %v2546
          %2567 = vmatprep.subr.mxu0 0.0
          %2568 = vmatpush1.msra.mxu0 %v2547
          %2569 = vmatprep.subr.mxu0 0.0
          %2570 = vmatpush1.msra.mxu0 %v2548
          %2571 = vmatprep.subr.mxu0 0.0
          %2572 = vmatpush1.msra.mxu0 %v2549
          %2573 = vmatprep.subr.mxu0 0.0
          %2574 = vmatpush1.msra.mxu0 %v2550
          %2575 = vmatprep.subr.mxu0 0.0
          %2576 = vmatpush1.msra.mxu0 %v2551
          %2577 = vmatprep.subr.mxu0 0.0
          %2578 = vmatpush1.msra.mxu0 %v2552
          %2579 = vmatprep.subr.mxu0 0.0
          %2580 = vmatpush1.msra.mxu0 %v2553
          %2581 = vmatprep.subr.mxu0 0.0
          %2582 = vmatpush1.msra.mxu0 %v2554
          %2583 = vmatprep.subr.mxu0 0.0
          %2584 = vmatpush1.msra.mxu0 %v2555
          %2585 = vmatprep.subr.mxu0 0.0
          %2586 = vmatpush1.msra.mxu0 %v2556
          %2587 = vmatprep.subr.mxu0 0.0
          %2588 = vmatpush1.msra.mxu0 %v2557
          %2589 = vmatprep.subr.mxu0 0.0
          %2590 = vmatpush1.msra.mxu0 %v2558
          %2591 = vmatprep.subr.mxu0 0.0
          %2592 = vmatpush1.msra.mxu0 0.0
          %2593 = vmatprep.subr.mxu0 0.0
          %2594 = vmatpush1.msra.mxu0 0.0
          %2595 = vmatprep.subr.mxu0 0.0
          %2596 = vmatpush1.msra.mxu0 0.0
          %2597 = vmatprep.subr.mxu0 0.0
          %2598 = vmatpush1.msra.mxu0 0.0
          %2599 = vmatprep.subr.mxu0 0.0
          %2600 = vmatpush1.msra.mxu0 0.0
          %2601 = vmatprep.subr.mxu0 0.0
          %2602 = vmatpush1.msra.mxu0 0.0
          %2603 = vmatprep.subr.mxu0 0.0
          %2604 = vmatpush1.msra.mxu0 0.0
          %2605 = vmatprep.subr.mxu0 0.0
          %2606 = vmatpush1.msra.mxu0 0.0
          %2607 = vmatprep.subr.mxu0 0.0
          %2608 = vmatpush1.msra.mxu0 0.0
          %2609 = vmatprep.subr.mxu0 0.0
          %2610 = vmatpush1.msra.mxu0 0.0
          %2611 = vmatprep.subr.mxu0 0.0
          %2612 = vmatpush1.msra.mxu0 0.0
          %2613 = vmatprep.subr.mxu0 0.0
          %2614 = vmatpush1.msra.mxu0 0.0
          %2615 = vmatprep.subr.mxu0 0.0
          %2616 = vmatpush1.msra.mxu0 0.0
          %2617 = vmatprep.subr.mxu0 0.0
          %2618 = vmatpush1.msra.mxu0 0.0
          %2619 = vmatprep.subr.mxu0 0.0
          %2620 = vmatpush1.msra.mxu0 0.0
          %2621 = vmatprep.subr.mxu0 0.0
          %2622 = vmatpush1.msra.mxu0 0.0
          %2623 = vmatprep.mubr.f32.mxu0 0.0
          %2624 = vmatmul.mubr.f32.gmra.mrb[0].mxu0 %v2540
          %v2625 = vpop.f32.mrb[0].mxu0
          %v2626 = vadd.f32 0.0, %v2625
          %v2627 = vpop.f32.mrb[0].mxu0
          %2628 = vmatprep.mubr.f32.mxu0 0.0
          %2629 = vmatmul.mubr.f32.gmra.mrb[0].mxu0 %v2541
          %v2630 = vpop.f32.mrb[0].mxu0
          %v2631 = vadd.f32 0.0, %v2630
          %v2632 = vpop.f32.mrb[0].mxu0
          %2633 = vdwg.mxu0
          %2634 = vmatprep.subr.mxu0 0.0
          %2635 = vmatpush1.msra.mxu0 %v2523
          %2636 = vmatprep.subr.mxu0 0.0
          %2637 = vmatpush1.msra.mxu0 %v2524
          %2638 = vmatprep.subr.mxu0 0.0
          %2639 = vmatpush1.msra.mxu0 %v2525
          %2640 = vmatprep.subr.mxu0 0.0
          %2641 = vmatpush1.msra.mxu0 %v2526
          %2642 = vmatprep.subr.mxu0 0.0
          %2643 = vmatpush1.msra.mxu0 %v2527
          %2644 = vmatprep.subr.mxu0 0.0
          %2645 = vmatpush1.msra.mxu0 %v2528
          %2646 = vmatprep.subr.mxu0 0.0
          %2647 = vmatpush1.msra.mxu0 %v2529
          %2648 = vmatprep.subr.mxu0 0.0
          %2649 = vmatpush1.msra.mxu0 %v2530
          %2650 = vmatprep.subr.mxu0 0.0
          %2651 = vmatpush1.msra.mxu0 %v2531
          %2652 = vmatprep.subr.mxu0 0.0
          %2653 = vmatpush1.msra.mxu0 %v2532
          %2654 = vmatprep.subr.mxu0 0.0
          %2655 = vmatpush1.msra.mxu0 %v2533
          %2656 = vmatprep.subr.mxu0 0.0
          %2657 = vmatpush1.msra.mxu0 %v2534
          %2658 = vmatprep.subr.mxu0 0.0
          %2659 = vmatpush1.msra.mxu0 %v2535
          %2660 = vmatprep.subr.mxu0 0.0
          %2661 = vmatpush1.msra.mxu0 %v2536
          %2662 = vmatprep.subr.mxu0 0.0
          %2663 = vmatpush1.msra.mxu0 %v2537
          %2664 = vmatprep.subr.mxu0 0.0
          %2665 = vmatpush1.msra.mxu0 %v2538
          %2666 = vmatprep.subr.mxu0 0.0
          %2667 = vmatpush1.msra.mxu0 0.0
          %2668 = vmatprep.subr.mxu0 0.0
          %2669 = vmatpush1.msra.mxu0 0.0
          %2670 = vmatprep.subr.mxu0 0.0
          %2671 = vmatpush1.msra.mxu0 0.0
          %2672 = vmatprep.subr.mxu0 0.0
          %2673 = vmatpush1.msra.mxu0 0.0
          %2674 = vmatprep.subr.mxu0 0.0
          %2675 = vmatpush1.msra.mxu0 0.0
          %2676 = vmatprep.subr.mxu0 0.0
          %2677 = vmatpush1.msra.mxu0 0.0
          %2678 = vmatprep.subr.mxu0 0.0
          %2679 = vmatpush1.msra.mxu0 0.0
          %2680 = vmatprep.subr.mxu0 0.0
          %2681 = vmatpush1.msra.mxu0 0.0
          %2682 = vmatprep.subr.mxu0 0.0
          %2683 = vmatpush1.msra.mxu0 0.0
          %2684 = vmatprep.subr.mxu0 0.0
          %2685 = vmatpush1.msra.mxu0 0.0
          %2686 = vmatprep.subr.mxu0 0.0
          %2687 = vmatpush1.msra.mxu0 0.0
          %2688 = vmatprep.subr.mxu0 0.0
          %2689 = vmatpush1.msra.mxu0 0.0
          %2690 = vmatprep.subr.mxu0 0.0
          %2691 = vmatpush1.msra.mxu0 0.0
          %2692 = vmatprep.subr.mxu0 0.0
          %2693 = vmatpush1.msra.mxu0 0.0
          %2694 = vmatprep.subr.mxu0 0.0
          %2695 = vmatpush1.msra.mxu0 0.0
          %2696 = vmatprep.subr.mxu0 0.0
          %2697 = vmatpush1.msra.mxu0 0.0
          %2698 = vmatprep.mubr.f32.mxu0 0.0
          %2699 = vmatmul.mubr.f32.gmra.mrb[0].mxu0 %v2520
          %v2700 = vpop.f32.mrb[0].mxu0
          %v2701 = vadd.f32 %v2626, %v2700
          %v2702 = vpop.f32.mrb[0].mxu0
          %2703 = vmatprep.mubr.f32.mxu0 0.0
          %2704 = vmatmul.mubr.f32.gmra.mrb[0].mxu0 %v2521
          %v2705 = vpop.f32.mrb[0].mxu0
          %v2706 = vadd.f32 %v2631, %v2705
          %v2707 = vpop.f32.mrb[0].mxu0
          %2708 = vdwg.mxu0
          %v2709 = vmax.f32 %v2701, 0.0
          %v2710 = vmax.f32 %v2706, 0.0
          %v2711 = vadd.f32 %v2709, %v2710
          %v2712 = vrot.slane %v2711, 4
          %v2713 = vadd.f32 %v2711, %v2712
          %v2714 = vrot.slane %v2713, 2
          %v2715 = vadd.f32 %v2713, %v2714
          %v2716 = vrot.slane %v2715, 1
          %v2717 = vadd.f32 %v2715, %v2716
          %v2718 = vmul.f32 %v2709, %v845
          %v2719 = vmul.f32 %v2710, %v846
          %v2720 = vadd.f32 %v2718, %v2719
          %v2721 = vrot.slane %v2720, 4
          %v2722 = vadd.f32 %v2720, %v2721
          %v2723 = vrot.slane %v2722, 2
          %v2724 = vadd.f32 %v2722, %v2723
          %v2725 = vrot.slane %v2724, 1
          %v2726 = vadd.f32 %v2724, %v2725
          %v2727 = vld [vmem:[%s742] sm:$0x1]
          %v2728 = vmul.f32 %v2717, %v2727
          %v2729 = vsel %vm1043, %v2728, 0.0
          %2730 = vadd.xlane.f32.xlu0 %v2729
          %v2731 = vpop.xlane.xlu0 %2730
          %v2732 = vmul.f32 %v2731, 0.00390625
          %v2733 = vmax.f32 %v2732, 0.0
          %v2734 = vld [vmem:[%s742 + $0x2] sm:$0x1]
          %v2735 = vmul.f32 %v2726, %v2734
          %v2736 = vsel %vm1043, %v2735, 0.0
          %2737 = vadd.xlane.f32.xlu0 %v2736
          %v2738 = vpop.xlane.xlu0 %2737
          %v2739 = vmul.f32 %v2738, 0.00390625
          %v2740 = vmax.f32 %v2739, 0.0
          %v2741 = vld [vmem:[%s742 + $0x1] sm:$0x1]
          %v2742 = vmul.f32 %v2733, %v2741
          %v2743 = vadd.f32 %v2742, 0.0
          %v2744 = vld [vmem:[%s742 + $0x3] sm:$0x1]
          %v2745 = vmul.f32 %v2740, %v2744
          %v2746 = vadd.f32 %v2745, 0.0
          %v2747 = vsub.f32 0.0, %v2743
          %v2748 = vmul.f32 %v2747, 1.442695
          %v2749 = vpow.pop %v2748
          %v2750 = vadd.f32 %v2749, 1.0
          %v2751 = vrcp.pop %v2750
          %v2752 = vsub.f32 0.0, %v2746
          %v2753 = vmul.f32 %v2752, 1.442695
          %v2754 = vpow.pop %v2753
          %v2755 = vadd.f32 %v2754, 1.0
          %v2756 = vrcp.pop %v2755
          %v2757 = vadd.f32 %v2751, %v2756
          %v2758 = vmul.f32 %v2757, 0.5
          %v2759 = vlaneseq
          %v2760 = vshrl.u32 %v2759, 7
          %v2761 = vsub.s32 0, %v2760
          %v2762 = vrot.slane %v2758, %v2761
          %v2763 = vmul.f32 %v2709, %v2762
          %v2764 = vmul.f32 %v2710, %v2762
          %v2765 = vld [vmem:[%s733] sm:$0xff]
          %v2766 = vld [vmem:[%s733 + $0x8] sm:$0xff]
          %v2767 = vld [vmem:[%s733 + $0x10] sm:$0xff]
          %v2768 = vld [vmem:[%s733 + $0x18] sm:$0xff]
          %v2769 = vld [vmem:[%s733 + $0x20] sm:$0xff]
          %v2770 = vld [vmem:[%s733 + $0x28] sm:$0xff]
          %v2771 = vld [vmem:[%s733 + $0x30] sm:$0xff]
          %v2772 = vld [vmem:[%s733 + $0x38] sm:$0xff]
          %v2773 = vld [vmem:[%s733 + $0x40] sm:$0xff]
          %v2774 = vld [vmem:[%s733 + $0x48] sm:$0xff]
          %v2775 = vld [vmem:[%s733 + $0x50] sm:$0xff]
          %v2776 = vld [vmem:[%s733 + $0x58] sm:$0xff]
          %v2777 = vld [vmem:[%s733 + $0x60] sm:$0xff]
          %v2778 = vld [vmem:[%s733 + $0x68] sm:$0xff]
          %v2779 = vld [vmem:[%s733 + $0x70] sm:$0xff]
          %v2780 = vld [vmem:[%s733 + $0x78] sm:$0xff]
          %s2781 = scalar_lea.vmem %s733, 128 [#allocation21]
          %v2782 = vld [vmem:[%s2781] sm:$0xff]
          %v2783 = vld [vmem:[%s2781 + $0x8] sm:$0xff]
          %v2784 = vld [vmem:[%s2781 + $0x10] sm:$0xff]
          %v2785 = vld [vmem:[%s2781 + $0x18] sm:$0xff]
          %v2786 = vld [vmem:[%s2781 + $0x20] sm:$0xff]
          %v2787 = vld [vmem:[%s2781 + $0x28] sm:$0xff]
          %v2788 = vld [vmem:[%s2781 + $0x30] sm:$0xff]
          %v2789 = vld [vmem:[%s2781 + $0x38] sm:$0xff]
          %v2790 = vld [vmem:[%s2781 + $0x40] sm:$0xff]
          %v2791 = vld [vmem:[%s2781 + $0x48] sm:$0xff]
          %v2792 = vld [vmem:[%s2781 + $0x50] sm:$0xff]
          %v2793 = vld [vmem:[%s2781 + $0x58] sm:$0xff]
          %v2794 = vld [vmem:[%s2781 + $0x60] sm:$0xff]
          %v2795 = vld [vmem:[%s2781 + $0x68] sm:$0xff]
          %v2796 = vld [vmem:[%s2781 + $0x70] sm:$0xff]
          %v2797 = vld [vmem:[%s2781 + $0x78] sm:$0xff]
          %s2798 = scalar_lea.vmem %s733, 256 [#allocation21]
          %v2799 = vld [vmem:[%s2798] sm:$0xff]
          %v2800 = vld [vmem:[%s2798 + $0x8] sm:$0xff]
          %v2801 = vld [vmem:[%s2798 + $0x10] sm:$0xff]
          %v2802 = vld [vmem:[%s2798 + $0x18] sm:$0xff]
          %v2803 = vld [vmem:[%s2798 + $0x20] sm:$0xff]
          %v2804 = vld [vmem:[%s2798 + $0x28] sm:$0xff]
          %v2805 = vld [vmem:[%s2798 + $0x30] sm:$0xff]
          %v2806 = vld [vmem:[%s2798 + $0x38] sm:$0xff]
          %v2807 = vld [vmem:[%s2798 + $0x40] sm:$0xff]
          %v2808 = vld [vmem:[%s2798 + $0x48] sm:$0xff]
          %v2809 = vld [vmem:[%s2798 + $0x50] sm:$0xff]
          %v2810 = vld [vmem:[%s2798 + $0x58] sm:$0xff]
          %v2811 = vld [vmem:[%s2798 + $0x60] sm:$0xff]
          %v2812 = vld [vmem:[%s2798 + $0x68] sm:$0xff]
          %v2813 = vld [vmem:[%s2798 + $0x70] sm:$0xff]
          %v2814 = vld [vmem:[%s2798 + $0x78] sm:$0xff]
          %v2816 = vrot.slane %v2764, 5
          %vm2819 = vcmask 1042432
          %v2820 = vrot.slane %v2763, 5
          %v2821 = vsel %vm2819, %v2820, %v2816
          %v2824 = vsel %vm2819, %v2816, %v2820
          %v2825 = vmul.f32 %v2824, %v853
          %v2826 = vmul.f32 %v2821, %v854
          %2827 = vmatprep.subr.mxu0 0.0
          %2828 = vmatpush1.msra.mxu0 %v2765
          %2829 = vmatprep.subr.mxu0 0.0
          %2830 = vmatpush1.msra.mxu0 %v2766
          %2831 = vmatprep.subr.mxu0 0.0
          %2832 = vmatpush1.msra.mxu0 %v2767
          %2833 = vmatprep.subr.mxu0 0.0
          %2834 = vmatpush1.msra.mxu0 %v2768
          %2835 = vmatprep.subr.mxu0 0.0
          %2836 = vmatpush1.msra.mxu0 %v2769
          %2837 = vmatprep.subr.mxu0 0.0
          %2838 = vmatpush1.msra.mxu0 %v2770
          %2839 = vmatprep.subr.mxu0 0.0
          %2840 = vmatpush1.msra.mxu0 %v2771
          %2841 = vmatprep.subr.mxu0 0.0
          %2842 = vmatpush1.msra.mxu0 %v2772
          %2843 = vmatprep.subr.mxu0 0.0
          %2844 = vmatpush1.msra.mxu0 %v2773
          %2845 = vmatprep.subr.mxu0 0.0
          %2846 = vmatpush1.msra.mxu0 %v2774
          %2847 = vmatprep.subr.mxu0 0.0
          %2848 = vmatpush1.msra.mxu0 %v2775
          %2849 = vmatprep.subr.mxu0 0.0
          %2850 = vmatpush1.msra.mxu0 %v2776
          %2851 = vmatprep.subr.mxu0 0.0
          %2852 = vmatpush1.msra.mxu0 %v2777
          %2853 = vmatprep.subr.mxu0 0.0
          %2854 = vmatpush1.msra.mxu0 %v2778
          %2855 = vmatprep.subr.mxu0 0.0
          %2856 = vmatpush1.msra.mxu0 %v2779
          %2857 = vmatprep.subr.mxu0 0.0
          %2858 = vmatpush1.msra.mxu0 %v2780
          %2859 = vmatprep.subr.mxu0 0.0
          %2860 = vmatpush1.msra.mxu0 0.0
          %2861 = vmatprep.subr.mxu0 0.0
          %2862 = vmatpush1.msra.mxu0 0.0
          %2863 = vmatprep.subr.mxu0 0.0
          %2864 = vmatpush1.msra.mxu0 0.0
          %2865 = vmatprep.subr.mxu0 0.0
          %2866 = vmatpush1.msra.mxu0 0.0
          %2867 = vmatprep.subr.mxu0 0.0
          %2868 = vmatpush1.msra.mxu0 0.0
          %2869 = vmatprep.subr.mxu0 0.0
          %2870 = vmatpush1.msra.mxu0 0.0
          %2871 = vmatprep.subr.mxu0 0.0
          %2872 = vmatpush1.msra.mxu0 0.0
          %2873 = vmatprep.subr.mxu0 0.0
          %2874 = vmatpush1.msra.mxu0 0.0
          %2875 = vmatprep.subr.mxu0 0.0
          %2876 = vmatpush1.msra.mxu0 0.0
          %2877 = vmatprep.subr.mxu0 0.0
          %2878 = vmatpush1.msra.mxu0 0.0
          %2879 = vmatprep.subr.mxu0 0.0
          %2880 = vmatpush1.msra.mxu0 0.0
          %2881 = vmatprep.subr.mxu0 0.0
          %2882 = vmatpush1.msra.mxu0 0.0
          %2883 = vmatprep.subr.mxu0 0.0
          %2884 = vmatpush1.msra.mxu0 0.0
          %2885 = vmatprep.subr.mxu0 0.0
          %2886 = vmatpush1.msra.mxu0 0.0
          %2887 = vmatprep.subr.mxu0 0.0
          %2888 = vmatpush1.msra.mxu0 0.0
          %2889 = vmatprep.subr.mxu0 0.0
          %2890 = vmatpush1.msra.mxu0 0.0
          %2891 = vmatprep.mubr.f32.mxu0 0.0
          %2892 = vmatmul.mubr.f32.gmra.mrb[0].mxu0 %v2825
          %v2893 = vpop.f32.mrb[0].mxu0
          %v2894 = vadd.f32 0.0, %v2893
          %v2895 = vpop.f32.mrb[0].mxu0
          %2896 = vmatprep.mubr.f32.mxu0 0.0
          %2897 = vmatmul.mubr.f32.gmra.mrb[0].mxu0 %v2826
          %v2898 = vpop.f32.mrb[0].mxu0
          %v2899 = vadd.f32 0.0, %v2898
          %v2900 = vpop.f32.mrb[0].mxu0
          %2901 = vdwg.mxu0
          %2902 = vmatprep.subr.mxu0 0.0
          %2903 = vmatpush1.msra.mxu0 %v2782
          %2904 = vmatprep.subr.mxu0 0.0
          %2905 = vmatpush1.msra.mxu0 %v2783
          %2906 = vmatprep.subr.mxu0 0.0
          %2907 = vmatpush1.msra.mxu0 %v2784
          %2908 = vmatprep.subr.mxu0 0.0
          %2909 = vmatpush1.msra.mxu0 %v2785
          %2910 = vmatprep.subr.mxu0 0.0
          %2911 = vmatpush1.msra.mxu0 %v2786
          %2912 = vmatprep.subr.mxu0 0.0
          %2913 = vmatpush1.msra.mxu0 %v2787
          %2914 = vmatprep.subr.mxu0 0.0
          %2915 = vmatpush1.msra.mxu0 %v2788
          %2916 = vmatprep.subr.mxu0 0.0
          %2917 = vmatpush1.msra.mxu0 %v2789
          %2918 = vmatprep.subr.mxu0 0.0
          %2919 = vmatpush1.msra.mxu0 %v2790
          %2920 = vmatprep.subr.mxu0 0.0
          %2921 = vmatpush1.msra.mxu0 %v2791
          %2922 = vmatprep.subr.mxu0 0.0
          %2923 = vmatpush1.msra.mxu0 %v2792
          %2924 = vmatprep.subr.mxu0 0.0
          %2925 = vmatpush1.msra.mxu0 %v2793
          %2926 = vmatprep.subr.mxu0 0.0
          %2927 = vmatpush1.msra.mxu0 %v2794
          %2928 = vmatprep.subr.mxu0 0.0
          %2929 = vmatpush1.msra.mxu0 %v2795
          %2930 = vmatprep.subr.mxu0 0.0
          %2931 = vmatpush1.msra.mxu0 %v2796
          %2932 = vmatprep.subr.mxu0 0.0
          %2933 = vmatpush1.msra.mxu0 %v2797
          %2934 = vmatprep.subr.mxu0 0.0
          %2935 = vmatpush1.msra.mxu0 0.0
          %2936 = vmatprep.subr.mxu0 0.0
          %2937 = vmatpush1.msra.mxu0 0.0
          %2938 = vmatprep.subr.mxu0 0.0
          %2939 = vmatpush1.msra.mxu0 0.0
          %2940 = vmatprep.subr.mxu0 0.0
          %2941 = vmatpush1.msra.mxu0 0.0
          %2942 = vmatprep.subr.mxu0 0.0
          %2943 = vmatpush1.msra.mxu0 0.0
          %2944 = vmatprep.subr.mxu0 0.0
          %2945 = vmatpush1.msra.mxu0 0.0
          %2946 = vmatprep.subr.mxu0 0.0
          %2947 = vmatpush1.msra.mxu0 0.0
          %2948 = vmatprep.subr.mxu0 0.0
          %2949 = vmatpush1.msra.mxu0 0.0
          %2950 = vmatprep.subr.mxu0 0.0
          %2951 = vmatpush1.msra.mxu0 0.0
          %2952 = vmatprep.subr.mxu0 0.0
          %2953 = vmatpush1.msra.mxu0 0.0
          %2954 = vmatprep.subr.mxu0 0.0
          %2955 = vmatpush1.msra.mxu0 0.0
          %2956 = vmatprep.subr.mxu0 0.0
          %2957 = vmatpush1.msra.mxu0 0.0
          %2958 = vmatprep.subr.mxu0 0.0
          %2959 = vmatpush1.msra.mxu0 0.0
          %2960 = vmatprep.subr.mxu0 0.0
          %2961 = vmatpush1.msra.mxu0 0.0
          %2962 = vmatprep.subr.mxu0 0.0
          %2963 = vmatpush1.msra.mxu0 0.0
          %2964 = vmatprep.subr.mxu0 0.0
          %2965 = vmatpush1.msra.mxu0 0.0
          %2966 = vmatprep.mubr.f32.mxu0 0.0
          %2967 = vmatmul.mubr.f32.gmra.mrb[0].mxu0 %v2763
          %v2968 = vpop.f32.mrb[0].mxu0
          %v2969 = vadd.f32 %v2894, %v2968
          %v2970 = vpop.f32.mrb[0].mxu0
          %2971 = vmatprep.mubr.f32.mxu0 0.0
          %2972 = vmatmul.mubr.f32.gmra.mrb[0].mxu0 %v2764
          %v2973 = vpop.f32.mrb[0].mxu0
          %v2974 = vadd.f32 %v2899, %v2973
          %v2975 = vpop.f32.mrb[0].mxu0
          %2976 = vdwg.mxu0
          %vm2977 = vcmask 1044480
          %v2978 = vrot.slane %v2763, 3
          %v2979 = vrot.slane %v2764, 3
          %v2980 = vsel %vm2977, %v2978, %v2979
          %v2984 = vsel %vm2977, %v2979, %v2978
          %v2985 = vmul.f32 %v2980, %v856
          %v2986 = vmul.f32 %v2984, %v857
          %2987 = vmatprep.subr.mxu0 0.0
          %2988 = vmatpush1.msra.mxu0 %v2799
          %2989 = vmatprep.subr.mxu0 0.0
          %2990 = vmatpush1.msra.mxu0 %v2800
          %2991 = vmatprep.subr.mxu0 0.0
          %2992 = vmatpush1.msra.mxu0 %v2801
          %2993 = vmatprep.subr.mxu0 0.0
          %2994 = vmatpush1.msra.mxu0 %v2802
          %2995 = vmatprep.subr.mxu0 0.0
          %2996 = vmatpush1.msra.mxu0 %v2803
          %2997 = vmatprep.subr.mxu0 0.0
          %2998 = vmatpush1.msra.mxu0 %v2804
          %2999 = vmatprep.subr.mxu0 0.0
          %3000 = vmatpush1.msra.mxu0 %v2805
          %3001 = vmatprep.subr.mxu0 0.0
          %3002 = vmatpush1.msra.mxu0 %v2806
          %3003 = vmatprep.subr.mxu0 0.0
          %3004 = vmatpush1.msra.mxu0 %v2807
          %3005 = vmatprep.subr.mxu0 0.0
          %3006 = vmatpush1.msra.mxu0 %v2808
          %3007 = vmatprep.subr.mxu0 0.0
          %3008 = vmatpush1.msra.mxu0 %v2809
          %3009 = vmatprep.subr.mxu0 0.0
          %3010 = vmatpush1.msra.mxu0 %v2810
          %3011 = vmatprep.subr.mxu0 0.0
          %3012 = vmatpush1.msra.mxu0 %v2811
          %3013 = vmatprep.subr.mxu0 0.0
          %3014 = vmatpush1.msra.mxu0 %v2812
          %3015 = vmatprep.subr.mxu0 0.0
          %3016 = vmatpush1.msra.mxu0 %v2813
          %3017 = vmatprep.subr.mxu0 0.0
          %3018 = vmatpush1.msra.mxu0 %v2814
          %3019 = vmatprep.subr.mxu0 0.0
          %3020 = vmatpush1.msra.mxu0 0.0
          %3021 = vmatprep.subr.mxu0 0.0
          %3022 = vmatpush1.msra.mxu0 0.0
          %3023 = vmatprep.subr.mxu0 0.0
          %3024 = vmatpush1.msra.mxu0 0.0
          %3025 = vmatprep.subr.mxu0 0.0
          %3026 = vmatpush1.msra.mxu0 0.0
          %3027 = vmatprep.subr.mxu0 0.0
          %3028 = vmatpush1.msra.mxu0 0.0
          %3029 = vmatprep.subr.mxu0 0.0
          %3030 = vmatpush1.msra.mxu0 0.0
          %3031 = vmatprep.subr.mxu0 0.0
          %3032 = vmatpush1.msra.mxu0 0.0
          %3033 = vmatprep.subr.mxu0 0.0
          %3034 = vmatpush1.msra.mxu0 0.0
          %3035 = vmatprep.subr.mxu0 0.0
          %3036 = vmatpush1.msra.mxu0 0.0
          %3037 = vmatprep.subr.mxu0 0.0
          %3038 = vmatpush1.msra.mxu0 0.0
          %3039 = vmatprep.subr.mxu0 0.0
          %3040 = vmatpush1.msra.mxu0 0.0
          %3041 = vmatprep.subr.mxu0 0.0
          %3042 = vmatpush1.msra.mxu0 0.0
          %3043 = vmatprep.subr.mxu0 0.0
          %3044 = vmatpush1.msra.mxu0 0.0
          %3045 = vmatprep.subr.mxu0 0.0
          %3046 = vmatpush1.msra.mxu0 0.0
          %3047 = vmatprep.subr.mxu0 0.0
          %3048 = vmatpush1.msra.mxu0 0.0
          %3049 = vmatprep.subr.mxu0 0.0
          %3050 = vmatpush1.msra.mxu0 0.0
          %3051 = vmatprep.mubr.f32.mxu0 0.0
          %3052 = vmatmul.mubr.f32.gmra.mrb[0].mxu0 %v2985
          %v3053 = vpop.f32.mrb[0].mxu0
          %v3054 = vadd.f32 0.0, %v3053
          %v3055 = vpop.f32.mrb[0].mxu0
          %3056 = vmatprep.mubr.f32.mxu0 0.0
          %3057 = vmatmul.mubr.f32.gmra.mrb[0].mxu0 %v2986
          %v3058 = vpop.f32.mrb[0].mxu0
          %v3059 = vadd.f32 0.0, %v3058
          %v3060 = vpop.f32.mrb[0].mxu0
          %3061 = vdwg.mxu0
          %v3062 = vadd.f32 %v2969, %v3054
          %v3063 = vadd.f32 %v2974, %v3059
          %v3064 = vmax.f32 %v3062, 0.0
          %v3065 = vmax.f32 %v3063, 0.0
          %s3066 = scalar_lea.vmem %s733, 384 [#allocation21]
          %v3067 = vld [vmem:[%s3066] sm:$0xff]
          %v3068 = vld [vmem:[%s3066 + $0x8] sm:$0xff]
          %v3069 = vld [vmem:[%s3066 + $0x10] sm:$0xff]
          %v3070 = vld [vmem:[%s3066 + $0x18] sm:$0xff]
          %v3071 = vld [vmem:[%s3066 + $0x20] sm:$0xff]
          %v3072 = vld [vmem:[%s3066 + $0x28] sm:$0xff]
          %v3073 = vld [vmem:[%s3066 + $0x30] sm:$0xff]
          %v3074 = vld [vmem:[%s3066 + $0x38] sm:$0xff]
          %v3075 = vld [vmem:[%s3066 + $0x40] sm:$0xff]
          %v3076 = vld [vmem:[%s3066 + $0x48] sm:$0xff]
          %v3077 = vld [vmem:[%s3066 + $0x50] sm:$0xff]
          %v3078 = vld [vmem:[%s3066 + $0x58] sm:$0xff]
          %v3079 = vld [vmem:[%s3066 + $0x60] sm:$0xff]
          %v3080 = vld [vmem:[%s3066 + $0x68] sm:$0xff]
          %v3081 = vld [vmem:[%s3066 + $0x70] sm:$0xff]
          %v3082 = vld [vmem:[%s3066 + $0x78] sm:$0xff]
          %s3083 = scalar_lea.vmem %s733, 512 [#allocation21]
          %v3084 = vld [vmem:[%s3083] sm:$0xff]
          %v3085 = vld [vmem:[%s3083 + $0x8] sm:$0xff]
          %v3086 = vld [vmem:[%s3083 + $0x10] sm:$0xff]
          %v3087 = vld [vmem:[%s3083 + $0x18] sm:$0xff]
          %v3088 = vld [vmem:[%s3083 + $0x20] sm:$0xff]
          %v3089 = vld [vmem:[%s3083 + $0x28] sm:$0xff]
          %v3090 = vld [vmem:[%s3083 + $0x30] sm:$0xff]
          %v3091 = vld [vmem:[%s3083 + $0x38] sm:$0xff]
          %v3092 = vld [vmem:[%s3083 + $0x40] sm:$0xff]
          %v3093 = vld [vmem:[%s3083 + $0x48] sm:$0xff]
          %v3094 = vld [vmem:[%s3083 + $0x50] sm:$0xff]
          %v3095 = vld [vmem:[%s3083 + $0x58] sm:$0xff]
          %v3096 = vld [vmem:[%s3083 + $0x60] sm:$0xff]
          %v3097 = vld [vmem:[%s3083 + $0x68] sm:$0xff]
          %v3098 = vld [vmem:[%s3083 + $0x70] sm:$0xff]
          %v3099 = vld [vmem:[%s3083 + $0x78] sm:$0xff]
          %s3100 = scalar_lea.vmem %s733, 640 [#allocation21]
          %v3101 = vld [vmem:[%s3100] sm:$0xff]
          %v3102 = vld [vmem:[%s3100 + $0x8] sm:$0xff]
          %v3103 = vld [vmem:[%s3100 + $0x10] sm:$0xff]
          %v3104 = vld [vmem:[%s3100 + $0x18] sm:$0xff]
          %v3105 = vld [vmem:[%s3100 + $0x20] sm:$0xff]
          %v3106 = vld [vmem:[%s3100 + $0x28] sm:$0xff]
          %v3107 = vld [vmem:[%s3100 + $0x30] sm:$0xff]
          %v3108 = vld [vmem:[%s3100 + $0x38] sm:$0xff]
          %v3109 = vld [vmem:[%s3100 + $0x40] sm:$0xff]
          %v3110 = vld [vmem:[%s3100 + $0x48] sm:$0xff]
          %v3111 = vld [vmem:[%s3100 + $0x50] sm:$0xff]
          %v3112 = vld [vmem:[%s3100 + $0x58] sm:$0xff]
          %v3113 = vld [vmem:[%s3100 + $0x60] sm:$0xff]
          %v3114 = vld [vmem:[%s3100 + $0x68] sm:$0xff]
          %v3115 = vld [vmem:[%s3100 + $0x70] sm:$0xff]
          %v3116 = vld [vmem:[%s3100 + $0x78] sm:$0xff]
          %v3118 = vrot.slane %v3065, 7
          %v3121 = vrot.slane %v3064, 7
          %v3122 = vsel %vm1043, %v3121, %v3118
          %v3125 = vsel %vm1043, %v3118, %v3121
          %v3126 = vmul.f32 %v3125, %v847
          %v3127 = vmul.f32 %v3122, %v848
          %3128 = vmatprep.subr.mxu0 0.0
          %3129 = vmatpush1.msra.mxu0 %v3067
          %3130 = vmatprep.subr.mxu0 0.0
          %3131 = vmatpush1.msra.mxu0 %v3068
          %3132 = vmatprep.subr.mxu0 0.0
          %3133 = vmatpush1.msra.mxu0 %v3069
          %3134 = vmatprep.subr.mxu0 0.0
          %3135 = vmatpush1.msra.mxu0 %v3070
          %3136 = vmatprep.subr.mxu0 0.0
          %3137 = vmatpush1.msra.mxu0 %v3071
          %3138 = vmatprep.subr.mxu0 0.0
          %3139 = vmatpush1.msra.mxu0 %v3072
          %3140 = vmatprep.subr.mxu0 0.0
          %3141 = vmatpush1.msra.mxu0 %v3073
          %3142 = vmatprep.subr.mxu0 0.0
          %3143 = vmatpush1.msra.mxu0 %v3074
          %3144 = vmatprep.subr.mxu0 0.0
          %3145 = vmatpush1.msra.mxu0 %v3075
          %3146 = vmatprep.subr.mxu0 0.0
          %3147 = vmatpush1.msra.mxu0 %v3076
          %3148 = vmatprep.subr.mxu0 0.0
          %3149 = vmatpush1.msra.mxu0 %v3077
          %3150 = vmatprep.subr.mxu0 0.0
          %3151 = vmatpush1.msra.mxu0 %v3078
          %3152 = vmatprep.subr.mxu0 0.0
          %3153 = vmatpush1.msra.mxu0 %v3079
          %3154 = vmatprep.subr.mxu0 0.0
          %3155 = vmatpush1.msra.mxu0 %v3080
          %3156 = vmatprep.subr.mxu0 0.0
          %3157 = vmatpush1.msra.mxu0 %v3081
          %3158 = vmatprep.subr.mxu0 0.0
          %3159 = vmatpush1.msra.mxu0 %v3082
          %3160 = vmatprep.subr.mxu0 0.0
          %3161 = vmatpush1.msra.mxu0 0.0
          %3162 = vmatprep.subr.mxu0 0.0
          %3163 = vmatpush1.msra.mxu0 0.0
          %3164 = vmatprep.subr.mxu0 0.0
          %3165 = vmatpush1.msra.mxu0 0.0
          %3166 = vmatprep.subr.mxu0 0.0
          %3167 = vmatpush1.msra.mxu0 0.0
          %3168 = vmatprep.subr.mxu0 0.0
          %3169 = vmatpush1.msra.mxu0 0.0
          %3170 = vmatprep.subr.mxu0 0.0
          %3171 = vmatpush1.msra.mxu0 0.0
          %3172 = vmatprep.subr.mxu0 0.0
          %3173 = vmatpush1.msra.mxu0 0.0
          %3174 = vmatprep.subr.mxu0 0.0
          %3175 = vmatpush1.msra.mxu0 0.0
          %3176 = vmatprep.subr.mxu0 0.0
          %3177 = vmatpush1.msra.mxu0 0.0
          %3178 = vmatprep.subr.mxu0 0.0
          %3179 = vmatpush1.msra.mxu0 0.0
          %3180 = vmatprep.subr.mxu0 0.0
          %3181 = vmatpush1.msra.mxu0 0.0
          %3182 = vmatprep.subr.mxu0 0.0
          %3183 = vmatpush1.msra.mxu0 0.0
          %3184 = vmatprep.subr.mxu0 0.0
          %3185 = vmatpush1.msra.mxu0 0.0
          %3186 = vmatprep.subr.mxu0 0.0
          %3187 = vmatpush1.msra.mxu0 0.0
          %3188 = vmatprep.subr.mxu0 0.0
          %3189 = vmatpush1.msra.mxu0 0.0
          %3190 = vmatprep.subr.mxu0 0.0
          %3191 = vmatpush1.msra.mxu0 0.0
          %3192 = vmatprep.mubr.f32.mxu0 0.0
          %3193 = vmatmul.mubr.f32.gmra.mrb[0].mxu0 %v3126
          %v3194 = vpop.f32.mrb[0].mxu0
          %v3195 = vadd.f32 0.0, %v3194
          %v3196 = vpop.f32.mrb[0].mxu0
          %3197 = vmatprep.mubr.f32.mxu0 0.0
          %3198 = vmatmul.mubr.f32.gmra.mrb[0].mxu0 %v3127
          %v3199 = vpop.f32.mrb[0].mxu0
          %v3200 = vadd.f32 0.0, %v3199
          %v3201 = vpop.f32.mrb[0].mxu0
          %3202 = vdwg.mxu0
          %3203 = vmatprep.subr.mxu0 0.0
          %3204 = vmatpush1.msra.mxu0 %v3084
          %3205 = vmatprep.subr.mxu0 0.0
          %3206 = vmatpush1.msra.mxu0 %v3085
          %3207 = vmatprep.subr.mxu0 0.0
          %3208 = vmatpush1.msra.mxu0 %v3086
          %3209 = vmatprep.subr.mxu0 0.0
          %3210 = vmatpush1.msra.mxu0 %v3087
          %3211 = vmatprep.subr.mxu0 0.0
          %3212 = vmatpush1.msra.mxu0 %v3088
          %3213 = vmatprep.subr.mxu0 0.0
          %3214 = vmatpush1.msra.mxu0 %v3089
          %3215 = vmatprep.subr.mxu0 0.0
          %3216 = vmatpush1.msra.mxu0 %v3090
          %3217 = vmatprep.subr.mxu0 0.0
          %3218 = vmatpush1.msra.mxu0 %v3091
          %3219 = vmatprep.subr.mxu0 0.0
          %3220 = vmatpush1.msra.mxu0 %v3092
          %3221 = vmatprep.subr.mxu0 0.0
          %3222 = vmatpush1.msra.mxu0 %v3093
          %3223 = vmatprep.subr.mxu0 0.0
          %3224 = vmatpush1.msra.mxu0 %v3094
          %3225 = vmatprep.subr.mxu0 0.0
          %3226 = vmatpush1.msra.mxu0 %v3095
          %3227 = vmatprep.subr.mxu0 0.0
          %3228 = vmatpush1.msra.mxu0 %v3096
          %3229 = vmatprep.subr.mxu0 0.0
          %3230 = vmatpush1.msra.mxu0 %v3097
          %3231 = vmatprep.subr.mxu0 0.0
          %3232 = vmatpush1.msra.mxu0 %v3098
          %3233 = vmatprep.subr.mxu0 0.0
          %3234 = vmatpush1.msra.mxu0 %v3099
          %3235 = vmatprep.subr.mxu0 0.0
          %3236 = vmatpush1.msra.mxu0 0.0
          %3237 = vmatprep.subr.mxu0 0.0
          %3238 = vmatpush1.msra.mxu0 0.0
          %3239 = vmatprep.subr.mxu0 0.0
          %3240 = vmatpush1.msra.mxu0 0.0
          %3241 = vmatprep.subr.mxu0 0.0
          %3242 = vmatpush1.msra.mxu0 0.0
          %3243 = vmatprep.subr.mxu0 0.0
          %3244 = vmatpush1.msra.mxu0 0.0
          %3245 = vmatprep.subr.mxu0 0.0
          %3246 = vmatpush1.msra.mxu0 0.0
          %3247 = vmatprep.subr.mxu0 0.0
          %3248 = vmatpush1.msra.mxu0 0.0
          %3249 = vmatprep.subr.mxu0 0.0
          %3250 = vmatpush1.msra.mxu0 0.0
          %3251 = vmatprep.subr.mxu0 0.0
          %3252 = vmatpush1.msra.mxu0 0.0
          %3253 = vmatprep.subr.mxu0 0.0
          %3254 = vmatpush1.msra.mxu0 0.0
          %3255 = vmatprep.subr.mxu0 0.0
          %3256 = vmatpush1.msra.mxu0 0.0
          %3257 = vmatprep.subr.mxu0 0.0
          %3258 = vmatpush1.msra.mxu0 0.0
          %3259 = vmatprep.subr.mxu0 0.0
          %3260 = vmatpush1.msra.mxu0 0.0
          %3261 = vmatprep.subr.mxu0 0.0
          %3262 = vmatpush1.msra.mxu0 0.0
          %3263 = vmatprep.subr.mxu0 0.0
          %3264 = vmatpush1.msra.mxu0 0.0
          %3265 = vmatprep.subr.mxu0 0.0
          %3266 = vmatpush1.msra.mxu0 0.0
          %3267 = vmatprep.mubr.f32.mxu0 0.0
          %3268 = vmatmul.mubr.f32.gmra.mrb[0].mxu0 %v3064
          %v3269 = vpop.f32.mrb[0].mxu0
          %v3270 = vadd.f32 %v3195, %v3269
          %v3271 = vpop.f32.mrb[0].mxu0
          %3272 = vmatprep.mubr.f32.mxu0 0.0
          %3273 = vmatmul.mubr.f32.gmra.mrb[0].mxu0 %v3065
          %v3274 = vpop.f32.mrb[0].mxu0
          %v3275 = vadd.f32 %v3200, %v3274
          %v3276 = vpop.f32.mrb[0].mxu0
          %3277 = vdwg.mxu0
          %v3278 = vrot.slane %v3064, 1
          %v3279 = vrot.slane %v3065, 1
          %v3280 = vsel %vm1201, %v3278, %v3279
          %v3284 = vsel %vm1201, %v3279, %v3278
          %v3285 = vmul.f32 %v3280, %v850
          %v3286 = vmul.f32 %v3284, %v851
          %3287 = vmatprep.subr.mxu0 0.0
          %3288 = vmatpush1.msra.mxu0 %v3101
          %3289 = vmatprep.subr.mxu0 0.0
          %3290 = vmatpush1.msra.mxu0 %v3102
          %3291 = vmatprep.subr.mxu0 0.0
          %3292 = vmatpush1.msra.mxu0 %v3103
          %3293 = vmatprep.subr.mxu0 0.0
          %3294 = vmatpush1.msra.mxu0 %v3104
          %3295 = vmatprep.subr.mxu0 0.0
          %3296 = vmatpush1.msra.mxu0 %v3105
          %3297 = vmatprep.subr.mxu0 0.0
          %3298 = vmatpush1.msra.mxu0 %v3106
          %3299 = vmatprep.subr.mxu0 0.0
          %3300 = vmatpush1.msra.mxu0 %v3107
          %3301 = vmatprep.subr.mxu0 0.0
          %3302 = vmatpush1.msra.mxu0 %v3108
          %3303 = vmatprep.subr.mxu0 0.0
          %3304 = vmatpush1.msra.mxu0 %v3109
          %3305 = vmatprep.subr.mxu0 0.0
          %3306 = vmatpush1.msra.mxu0 %v3110
          %3307 = vmatprep.subr.mxu0 0.0
          %3308 = vmatpush1.msra.mxu0 %v3111
          %3309 = vmatprep.subr.mxu0 0.0
          %3310 = vmatpush1.msra.mxu0 %v3112
          %3311 = vmatprep.subr.mxu0 0.0
          %3312 = vmatpush1.msra.mxu0 %v3113
          %3313 = vmatprep.subr.mxu0 0.0
          %3314 = vmatpush1.msra.mxu0 %v3114
          %3315 = vmatprep.subr.mxu0 0.0
          %3316 = vmatpush1.msra.mxu0 %v3115
          %3317 = vmatprep.subr.mxu0 0.0
          %3318 = vmatpush1.msra.mxu0 %v3116
          %3319 = vmatprep.subr.mxu0 0.0
          %3320 = vmatpush1.msra.mxu0 0.0
          %3321 = vmatprep.subr.mxu0 0.0
          %3322 = vmatpush1.msra.mxu0 0.0
          %3323 = vmatprep.subr.mxu0 0.0
          %3324 = vmatpush1.msra.mxu0 0.0
          %3325 = vmatprep.subr.mxu0 0.0
          %3326 = vmatpush1.msra.mxu0 0.0
          %3327 = vmatprep.subr.mxu0 0.0
          %3328 = vmatpush1.msra.mxu0 0.0
          %3329 = vmatprep.subr.mxu0 0.0
          %3330 = vmatpush1.msra.mxu0 0.0
          %3331 = vmatprep.subr.mxu0 0.0
          %3332 = vmatpush1.msra.mxu0 0.0
          %3333 = vmatprep.subr.mxu0 0.0
          %3334 = vmatpush1.msra.mxu0 0.0
          %3335 = vmatprep.subr.mxu0 0.0
          %3336 = vmatpush1.msra.mxu0 0.0
          %3337 = vmatprep.subr.mxu0 0.0
          %3338 = vmatpush1.msra.mxu0 0.0
          %3339 = vmatprep.subr.mxu0 0.0
          %3340 = vmatpush1.msra.mxu0 0.0
          %3341 = vmatprep.subr.mxu0 0.0
          %3342 = vmatpush1.msra.mxu0 0.0
          %3343 = vmatprep.subr.mxu0 0.0
          %3344 = vmatpush1.msra.mxu0 0.0
          %3345 = vmatprep.subr.mxu0 0.0
          %3346 = vmatpush1.msra.mxu0 0.0
          %3347 = vmatprep.subr.mxu0 0.0
          %3348 = vmatpush1.msra.mxu0 0.0
          %3349 = vmatprep.subr.mxu0 0.0
          %3350 = vmatpush1.msra.mxu0 0.0
          %3351 = vmatprep.mubr.f32.mxu0 0.0
          %3352 = vmatmul.mubr.f32.gmra.mrb[0].mxu0 %v3285
          %v3353 = vpop.f32.mrb[0].mxu0
          %v3354 = vadd.f32 0.0, %v3353
          %v3355 = vpop.f32.mrb[0].mxu0
          %3356 = vmatprep.mubr.f32.mxu0 0.0
          %3357 = vmatmul.mubr.f32.gmra.mrb[0].mxu0 %v3286
          %v3358 = vpop.f32.mrb[0].mxu0
          %v3359 = vadd.f32 0.0, %v3358
          %v3360 = vpop.f32.mrb[0].mxu0
          %3361 = vdwg.mxu0
          %v3362 = vadd.f32 %v3270, %v3354
          %v3363 = vadd.f32 %v3275, %v3359
          %v3364 = vmax.f32 %v3362, 0.0
          %v3365 = vmax.f32 %v3363, 0.0
          %v3366 = vstv %s893
          %v3367 = vmul.f32 %v3366, %v878
          %v3368 = vmul.f32 %v3366, %v879
          %v3369 = vstv %s895
          %v3370 = vmul.f32 %v3369, %v3364
          %v3371 = vmul.f32 %v3369, %v3365
          %v3372 = vadd.f32 %v3367, %v3370
          %v3373 = vadd.f32 %v3368, %v3371
          %p3374 = scmp.le.s32.totalorder %s55, 5
          %p3375 = scmp.eq.s32.totalorder %s55, 8
          %p3376 = por %p3374, %p3375
          // Predicated region
          $region133: #{forward.1} parent=131 // pred_check
            %p3377 = pneg %p3376
          $region134: #{forward.1} parent=131 // pred_check_branch
            %3379 = sbr.rel (%p3377) target = $region136
          $region135: #{forward.1} parent=131 // pred_region
            %3380 = vst [vmem:[#allocation2] sm:$0xff] %v3372
            %3381 = vst [vmem:[#allocation2 + $0x8] sm:$0xff] %v3373
          $region136: #{forward.1} parent=131 // pred_fallthru
            _
          // Predicated region
          $region137: #{forward.1} parent=131 // pred_check
            %p3382 = pneg %p858
          $region138: #{forward.1} parent=131 // pred_check_branch
            %3384 = sbr.rel (%p3382) target = $region140
          $region139: #{forward.1} parent=131 // pred_region
            %v3385 = vmul.f32 %v3372, %v845
            %v3386 = vmul.f32 %v3373, %v846
            %3387 = vst [vmem:[#allocation3] sm:$0xff] %v3385
            %3388 = vst [vmem:[#allocation3 + $0x8] sm:$0xff] %v3386
          $region140: #{forward.1} parent=131 // pred_fallthru
            _
          // Predicated region
          $region141: #{forward.1} parent=131 // pred_check
            %p3389 = pneg %p870
          $region142: #{forward.1} parent=131 // pred_check_branch
            %3391 = sbr.rel (%p3389) target = $region144
          $region143: #{forward.1} parent=131 // pred_region
            %3392 = vst [vmem:[#allocation3] sm:$0xff] %v3372
            %3393 = vst [vmem:[#allocation3 + $0x8] sm:$0xff] %v3373
          $region144: #{forward.1} parent=131 // pred_fallthru
            _
        $region132: #{forward.1} parent=71 // pred_fallthru
          _
        %p3394 = scmp.eq.s32.totalorder %s55, 7
        // Predicated region
        $region145: #{forward.1} parent=71 // pred_check
          %p3395 = pneg %p3394
        $region146: #{forward.1} parent=71 // pred_check_branch
          %3397 = sbr.rel (%p3395) target = $region148
        $region147: #{forward.1} parent=71 // pred_region
          %v3398 = vld [vmem:[#allocation2] sm:$0xff]
          %v3399 = vld [vmem:[#allocation2 + $0x8] sm:$0xff]
          %v3400 = vld [vmem:[#allocation25] sm:$0xff]
          %v3401 = vld [vmem:[#allocation25 + $0x8] sm:$0xff]
          %v3402 = vld [vmem:[#allocation25 + $0x10] sm:$0xff]
          %v3403 = vld [vmem:[#allocation25 + $0x18] sm:$0xff]
          %v3404 = vld [vmem:[#allocation25 + $0x20] sm:$0xff]
          %v3405 = vld [vmem:[#allocation25 + $0x28] sm:$0xff]
          %v3406 = vld [vmem:[#allocation25 + $0x30] sm:$0xff]
          %v3407 = vld [vmem:[#allocation25 + $0x38] sm:$0xff]
          %v3408 = vld [vmem:[#allocation25 + $0x40] sm:$0xff]
          %v3409 = vld [vmem:[#allocation25 + $0x48] sm:$0xff]
          %v3410 = vld [vmem:[#allocation25 + $0x50] sm:$0xff]
          %v3411 = vld [vmem:[#allocation25 + $0x58] sm:$0xff]
          %v3412 = vld [vmem:[#allocation25 + $0x60] sm:$0xff]
          %v3413 = vld [vmem:[#allocation25 + $0x68] sm:$0xff]
          %v3414 = vld [vmem:[#allocation25 + $0x70] sm:$0xff]
          %v3415 = vld [vmem:[#allocation25 + $0x78] sm:$0xff]
          %v3416 = vld [vmem:[#allocation3] sm:$0xff]
          %v3417 = vld [vmem:[#allocation3 + $0x8] sm:$0xff]
          %s3418 = scalar_lea.vmem [#allocation25], 128
          %v3419 = vld [vmem:[%s3418] sm:$0xff]
          %v3420 = vld [vmem:[%s3418 + $0x8] sm:$0xff]
          %v3421 = vld [vmem:[%s3418 + $0x10] sm:$0xff]
          %v3422 = vld [vmem:[%s3418 + $0x18] sm:$0xff]
          %v3423 = vld [vmem:[%s3418 + $0x20] sm:$0xff]
          %v3424 = vld [vmem:[%s3418 + $0x28] sm:$0xff]
          %v3425 = vld [vmem:[%s3418 + $0x30] sm:$0xff]
          %v3426 = vld [vmem:[%s3418 + $0x38] sm:$0xff]
          %v3427 = vld [vmem:[%s3418 + $0x40] sm:$0xff]
          %v3428 = vld [vmem:[%s3418 + $0x48] sm:$0xff]
          %v3429 = vld [vmem:[%s3418 + $0x50] sm:$0xff]
          %v3430 = vld [vmem:[%s3418 + $0x58] sm:$0xff]
          %v3431 = vld [vmem:[%s3418 + $0x60] sm:$0xff]
          %v3432 = vld [vmem:[%s3418 + $0x68] sm:$0xff]
          %v3433 = vld [vmem:[%s3418 + $0x70] sm:$0xff]
          %v3434 = vld [vmem:[%s3418 + $0x78] sm:$0xff]
          %3435 = vmatprep.subr.mxu0 0.0
          %3436 = vmatpush1.msra.mxu0 %v3419
          %3437 = vmatprep.subr.mxu0 0.0
          %3438 = vmatpush1.msra.mxu0 %v3420
          %3439 = vmatprep.subr.mxu0 0.0
          %3440 = vmatpush1.msra.mxu0 %v3421
          %3441 = vmatprep.subr.mxu0 0.0
          %3442 = vmatpush1.msra.mxu0 %v3422
          %3443 = vmatprep.subr.mxu0 0.0
          %3444 = vmatpush1.msra.mxu0 %v3423
          %3445 = vmatprep.subr.mxu0 0.0
          %3446 = vmatpush1.msra.mxu0 %v3424
          %3447 = vmatprep.subr.mxu0 0.0
          %3448 = vmatpush1.msra.mxu0 %v3425
          %3449 = vmatprep.subr.mxu0 0.0
          %3450 = vmatpush1.msra.mxu0 %v3426
          %3451 = vmatprep.subr.mxu0 0.0
          %3452 = vmatpush1.msra.mxu0 %v3427
          %3453 = vmatprep.subr.mxu0 0.0
          %3454 = vmatpush1.msra.mxu0 %v3428
          %3455 = vmatprep.subr.mxu0 0.0
          %3456 = vmatpush1.msra.mxu0 %v3429
          %3457 = vmatprep.subr.mxu0 0.0
          %3458 = vmatpush1.msra.mxu0 %v3430
          %3459 = vmatprep.subr.mxu0 0.0
          %3460 = vmatpush1.msra.mxu0 %v3431
          %3461 = vmatprep.subr.mxu0 0.0
          %3462 = vmatpush1.msra.mxu0 %v3432
          %3463 = vmatprep.subr.mxu0 0.0
          %3464 = vmatpush1.msra.mxu0 %v3433
          %3465 = vmatprep.subr.mxu0 0.0
          %3466 = vmatpush1.msra.mxu0 %v3434
          %3467 = vmatprep.subr.mxu0 0.0
          %3468 = vmatpush1.msra.mxu0 0.0
          %3469 = vmatprep.subr.mxu0 0.0
          %3470 = vmatpush1.msra.mxu0 0.0
          %3471 = vmatprep.subr.mxu0 0.0
          %3472 = vmatpush1.msra.mxu0 0.0
          %3473 = vmatprep.subr.mxu0 0.0
          %3474 = vmatpush1.msra.mxu0 0.0
          %3475 = vmatprep.subr.mxu0 0.0
          %3476 = vmatpush1.msra.mxu0 0.0
          %3477 = vmatprep.subr.mxu0 0.0
          %3478 = vmatpush1.msra.mxu0 0.0
          %3479 = vmatprep.subr.mxu0 0.0
          %3480 = vmatpush1.msra.mxu0 0.0
          %3481 = vmatprep.subr.mxu0 0.0
          %3482 = vmatpush1.msra.mxu0 0.0
          %3483 = vmatprep.subr.mxu0 0.0
          %3484 = vmatpush1.msra.mxu0 0.0
          %3485 = vmatprep.subr.mxu0 0.0
          %3486 = vmatpush1.msra.mxu0 0.0
          %3487 = vmatprep.subr.mxu0 0.0
          %3488 = vmatpush1.msra.mxu0 0.0
          %3489 = vmatprep.subr.mxu0 0.0
          %3490 = vmatpush1.msra.mxu0 0.0
          %3491 = vmatprep.subr.mxu0 0.0
          %3492 = vmatpush1.msra.mxu0 0.0
          %3493 = vmatprep.subr.mxu0 0.0
          %3494 = vmatpush1.msra.mxu0 0.0
          %3495 = vmatprep.subr.mxu0 0.0
          %3496 = vmatpush1.msra.mxu0 0.0
          %3497 = vmatprep.subr.mxu0 0.0
          %3498 = vmatpush1.msra.mxu0 0.0
          %3499 = vmatprep.mubr.f32.mxu0 0.0
          %3500 = vmatmul.mubr.f32.gmra.mrb[0].mxu0 %v3416
          %v3501 = vpop.f32.mrb[0].mxu0
          %v3502 = vadd.f32 0.0, %v3501
          %v3503 = vpop.f32.mrb[0].mxu0
          %3504 = vmatprep.mubr.f32.mxu0 0.0
          %3505 = vmatmul.mubr.f32.gmra.mrb[0].mxu0 %v3417
          %v3506 = vpop.f32.mrb[0].mxu0
          %v3507 = vadd.f32 0.0, %v3506
          %v3508 = vpop.f32.mrb[0].mxu0
          %3509 = vdwg.mxu0
          %3510 = vmatprep.subr.mxu0 0.0
          %3511 = vmatpush1.msra.mxu0 %v3400
          %3512 = vmatprep.subr.mxu0 0.0
          %3513 = vmatpush1.msra.mxu0 %v3401
          %3514 = vmatprep.subr.mxu0 0.0
          %3515 = vmatpush1.msra.mxu0 %v3402
          %3516 = vmatprep.subr.mxu0 0.0
          %3517 = vmatpush1.msra.mxu0 %v3403
          %3518 = vmatprep.subr.mxu0 0.0
          %3519 = vmatpush1.msra.mxu0 %v3404
          %3520 = vmatprep.subr.mxu0 0.0
          %3521 = vmatpush1.msra.mxu0 %v3405
          %3522 = vmatprep.subr.mxu0 0.0
          %3523 = vmatpush1.msra.mxu0 %v3406
          %3524 = vmatprep.subr.mxu0 0.0
          %3525 = vmatpush1.msra.mxu0 %v3407
          %3526 = vmatprep.subr.mxu0 0.0
          %3527 = vmatpush1.msra.mxu0 %v3408
          %3528 = vmatprep.subr.mxu0 0.0
          %3529 = vmatpush1.msra.mxu0 %v3409
          %3530 = vmatprep.subr.mxu0 0.0
          %3531 = vmatpush1.msra.mxu0 %v3410
          %3532 = vmatprep.subr.mxu0 0.0
          %3533 = vmatpush1.msra.mxu0 %v3411
          %3534 = vmatprep.subr.mxu0 0.0
          %3535 = vmatpush1.msra.mxu0 %v3412
          %3536 = vmatprep.subr.mxu0 0.0
          %3537 = vmatpush1.msra.mxu0 %v3413
          %3538 = vmatprep.subr.mxu0 0.0
          %3539 = vmatpush1.msra.mxu0 %v3414
          %3540 = vmatprep.subr.mxu0 0.0
          %3541 = vmatpush1.msra.mxu0 %v3415
          %3542 = vmatprep.subr.mxu0 0.0
          %3543 = vmatpush1.msra.mxu0 0.0
          %3544 = vmatprep.subr.mxu0 0.0
          %3545 = vmatpush1.msra.mxu0 0.0
          %3546 = vmatprep.subr.mxu0 0.0
          %3547 = vmatpush1.msra.mxu0 0.0
          %3548 = vmatprep.subr.mxu0 0.0
          %3549 = vmatpush1.msra.mxu0 0.0
          %3550 = vmatprep.subr.mxu0 0.0
          %3551 = vmatpush1.msra.mxu0 0.0
          %3552 = vmatprep.subr.mxu0 0.0
          %3553 = vmatpush1.msra.mxu0 0.0
          %3554 = vmatprep.subr.mxu0 0.0
          %3555 = vmatpush1.msra.mxu0 0.0
          %3556 = vmatprep.subr.mxu0 0.0
          %3557 = vmatpush1.msra.mxu0 0.0
          %3558 = vmatprep.subr.mxu0 0.0
          %3559 = vmatpush1.msra.mxu0 0.0
          %3560 = vmatprep.subr.mxu0 0.0
          %3561 = vmatpush1.msra.mxu0 0.0
          %3562 = vmatprep.subr.mxu0 0.0
          %3563 = vmatpush1.msra.mxu0 0.0
          %3564 = vmatprep.subr.mxu0 0.0
          %3565 = vmatpush1.msra.mxu0 0.0
          %3566 = vmatprep.subr.mxu0 0.0
          %3567 = vmatpush1.msra.mxu0 0.0
          %3568 = vmatprep.subr.mxu0 0.0
          %3569 = vmatpush1.msra.mxu0 0.0
          %3570 = vmatprep.subr.mxu0 0.0
          %3571 = vmatpush1.msra.mxu0 0.0
          %3572 = vmatprep.subr.mxu0 0.0
          %3573 = vmatpush1.msra.mxu0 0.0
          %3574 = vmatprep.mubr.f32.mxu0 0.0
          %3575 = vmatmul.mubr.f32.gmra.mrb[0].mxu0 %v3398
          %v3576 = vpop.f32.mrb[0].mxu0
          %v3577 = vadd.f32 %v3502, %v3576
          %v3578 = vpop.f32.mrb[0].mxu0
          %3579 = vmatprep.mubr.f32.mxu0 0.0
          %3580 = vmatmul.mubr.f32.gmra.mrb[0].mxu0 %v3399
          %v3581 = vpop.f32.mrb[0].mxu0
          %v3582 = vadd.f32 %v3507, %v3581
          %v3583 = vpop.f32.mrb[0].mxu0
          %3584 = vdwg.mxu0
          %v3585 = vmax.f32 %v3577, 0.0
          %v3586 = vmax.f32 %v3582, 0.0
          %v3587 = vadd.f32 %v3585, %v3586
          %v3588 = vrot.slane %v3587, 4
          %v3589 = vadd.f32 %v3587, %v3588
          %v3590 = vrot.slane %v3589, 2
          %v3591 = vadd.f32 %v3589, %v3590
          %v3592 = vrot.slane %v3591, 1
          %v3593 = vadd.f32 %v3591, %v3592
          %v3594 = vmul.f32 %v3585, %v845
          %v3595 = vmul.f32 %v3586, %v846
          %v3596 = vadd.f32 %v3594, %v3595
          %v3597 = vrot.slane %v3596, 4
          %v3598 = vadd.f32 %v3596, %v3597
          %v3599 = vrot.slane %v3598, 2
          %v3600 = vadd.f32 %v3598, %v3599
          %v3601 = vrot.slane %v3600, 1
          %v3602 = vadd.f32 %v3600, %v3601
          %v3603 = vld [vmem:[#allocation26] sm:$0x1]
          %v3604 = vmul.f32 %v3593, %v3603
          %vm3605 = vcmask 1040384
          %v3606 = vsel %vm3605, %v3604, 0.0
          %3607 = vadd.xlane.f32.xlu0 %v3606
          %v3608 = vpop.xlane.xlu0 %3607
          %v3609 = vmul.f32 %v3608, 0.00390625
          %v3610 = vmax.f32 %v3609, 0.0
          %v3611 = vld [vmem:[#allocation26 + $0x2] sm:$0x1]
          %v3612 = vmul.f32 %v3602, %v3611
          %v3613 = vsel %vm3605, %v3612, 0.0
          %3614 = vadd.xlane.f32.xlu0 %v3613
          %v3615 = vpop.xlane.xlu0 %3614
          %v3616 = vmul.f32 %v3615, 0.00390625
          %v3617 = vmax.f32 %v3616, 0.0
          %v3618 = vld [vmem:[#allocation26 + $0x1] sm:$0x1]
          %v3619 = vmul.f32 %v3610, %v3618
          %v3620 = vadd.f32 %v3619, 0.0
          %v3621 = vld [vmem:[#allocation26 + $0x3] sm:$0x1]
          %v3622 = vmul.f32 %v3617, %v3621
          %v3623 = vadd.f32 %v3622, 0.0
          %v3624 = vsub.f32 0.0, %v3620
          %v3625 = vmul.f32 %v3624, 1.442695
          %v3626 = vpow.pop %v3625
          %v3627 = vadd.f32 %v3626, 1.0
          %v3628 = vrcp.pop %v3627
          %v3629 = vsub.f32 0.0, %v3623
          %v3630 = vmul.f32 %v3629, 1.442695
          %v3631 = vpow.pop %v3630
          %v3632 = vadd.f32 %v3631, 1.0
          %v3633 = vrcp.pop %v3632
          %v3634 = vadd.f32 %v3628, %v3633
          %v3635 = vmul.f32 %v3634, 0.5
          %v3636 = vlaneseq
          %v3637 = vshrl.u32 %v3636, 7
          %v3638 = vsub.s32 0, %v3637
          %v3639 = vrot.slane %v3635, %v3638
          %v3640 = vmul.f32 %v3585, %v3639
          %v3641 = vmul.f32 %v3586, %v3639
          %3642 = vst [vmem:[#allocation2] sm:$0xff] %v3640
          %3643 = vst [vmem:[#allocation2 + $0x8] sm:$0xff] %v3641
        $region148: #{forward.1} parent=71 // pred_fallthru
          _
        %p3644 = scmp.eq.s32.totalorder %s55, 8
        // Predicated region
        $region149: #{forward.1} parent=71 // pred_check
          %p3645 = pneg %p3644
        $region150: #{forward.1} parent=71 // pred_check_branch
          %3647 = sbr.rel (%p3645) target = $region152
        $region151: #{forward.1} parent=71 // pred_region
          %v3648 = vld [vmem:[#allocation2] sm:$0xff]
          %v3649 = vld [vmem:[#allocation2 + $0x8] sm:$0xff]
          %v3650 = vadd.f32 %v3648, %v843
          %v3651 = vadd.f32 %v3649, %v844
          %3652 = vst [vmem:[%s832] sm:$0xff] %v3650
          %3653 = vst [vmem:[%s832 + $0x8] sm:$0xff] %v3651
        $region152: #{forward.1} parent=71 // pred_fallthru
          _
        %s3654 = sand.u32 %s397, 1
        %s3655 = scalar_lea.sflag [#allocation8], %s3654
        %s3656 = sand.u32 %s397, 1
        %s3657 = smul.addr %s3656, 16
        %s3658 = scalar_lea.vmem [#allocation28], %s3657
        // Predicated region
        $region153: #{forward.1} parent=71 // pred_check
          %p3659 = pneg %p407
        $region154: #{forward.1} parent=71 // pred_check_branch
          %3661 = sbr.rel (%p3659) target = $region156
        $region155: #{forward.1} parent=71 // pred_region
          %s3662 = smul.u32 2, %s54
          %s3664 = ssub.s32 256, 256
          %3665 = vsyncadd %s3655, %s3664
          %s3666 = smul.addr %s3662, 128
          %s3667 = scalar_lea.hbm %s14, %s3666
          %s3668 = sshll.u32 %s3658, 4
          %s3669 = int_to_ptr.vmem [resolvable:$true] %s3668
          %3674 = dma.vmem_to_hbm [thread:$0]  %s3669, 256, %s3667, %s3655, 128, 128, 8
        $region156: #{forward.1} parent=71 // pred_fallthru
          _
      $region72: #{forward.1} parent=5 // pred_fallthru
        _
      %p3675 = scmp.le.s32.totalorder 2, %s45
      // Predicated region
      $region157: #{forward.1} parent=5 // pred_check
        %p3676 = pneg %p3675
      $region158: #{forward.1} parent=5 // pred_check_branch
        %3678 = sbr.rel (%p3676) target = $region160
      $region159: #{forward.1} parent=5 // pred_region
        %s3679 = ssub.s32 %s45, 2
        // Predicated region
        $region161: #{forward.1} parent=159 // pred_check
          %p3680 = pneg %p413
        $region162: #{forward.1} parent=159 // pred_check_branch
          %3682 = sbr.rel (%p3680) target = $region164
        $region163: #{forward.1} parent=159 // pred_region
          %s3683 = sand.u32 %s398, 1
          %s3684 = scalar_lea.sflag [#allocation8], %s3683
          %s3685 = sand.u32 %s398, 1
          %s3686 = smul.addr %s3685, 16
          %s3687 = scalar_lea.vmem [#allocation28], %s3686
          %3688 = dma.done %s3684, 256
        $region164: #{forward.1} parent=159 // pred_fallthru
          _
      $region160: #{forward.1} parent=5 // pred_fallthru
        _
    $region6: #{forward.1} parent=1 // loop_footer
      %s49 = sadd.s32 1, %s45
    $region7: #{forward.1} parent=1 // loop_footer_branch
      %44 = sbr.rel target = $region3
    $region8: #{forward.1} parent=1 // loop_exit
      _
    %3689 = vsyncpa [#allocation7], 1
    %s3690 = scalar_lea.sflag [#allocation7], 1
    %3691 = vsyncpa %s3690, 1
    %3692 = vsyncpa [#allocation11], 1
    %3693 = vsyncpa [#allocation14], 1
    %s3694 = scalar_lea.sflag [#allocation14], 1
    %3695 = vsyncpa %s3694, 1
    %3696 = vsyncpa [#allocation17], 1
    %s3697 = scalar_lea.sflag [#allocation17], 1
    %3698 = vsyncpa %s3697, 1
    %3699 = vsyncpa [#allocation20], 1
    %s3700 = scalar_lea.sflag [#allocation20], 1
    %3701 = vsyncpa %s3700, 1
    %3702 = vsyncpa [#allocation23], 1
    %s3703 = scalar_lea.sflag [#allocation23], 1
    %3704 = vsyncpa %s3703, 1
    %3705 = vsyncpa [#allocation27], 1
    %3706 = vsyncpa [#allocation8], 1
    %s3707 = scalar_lea.sflag [#allocation8], 1
    %3708 = vsyncpa %s3707, 1
    %3709 = vsyncpa [#allocation9], 1
    %s3710 = scalar_lea.sflag [#allocation9], 1
    %3711 = vsyncpa %s3710, 1

</llo_original>
